<compile_context>
chip_gen: v7x
topology: tpu7x:2x2x1
jax: 0.10.0
libtpu: 0.0.40
codegen_flags: <defaults>
</compile_context>

<pallas_src>
import functools

import jax
import jax.numpy as jnp
from jax import lax
from jax.experimental import pallas as pl
from jax.experimental.pallas import tpu as pltpu


def _round_up(x, m):
    return ((x + m - 1) // m) * m


# Per-gate input pre-scale folded into the weights/bias:
#   sigmoid(z) = 0.5 * tanh(0.5 * z) + 0.5  (i, f, o gates)
#   tanh(z)    = tanh(z)                    (g gate)
_GATE_PRESCALE = (0.5, 0.5, 1.0, 0.5)  # [i, f, g, o]


def _lstm_recurrent_kernel(pre_ref, whh_t_ref, h_out_ref, h_sc, c_sc, *,
                           time_chunk, seq_len, hidden_p, unroll,
                           compute_dtype):
    """One grid step == `time_chunk` timesteps of the LSTM recurrence.

    pre_ref   : (Tc, Bt, 4Hp)  precomputed scale*(x@W_ih.T + b), this chunk
    whh_t_ref : (Hp, 4Hp)      resident, pre-scaled, pre-transposed W_hh
    h_out_ref : (Bt, Hp)       final hidden state (written at last time chunk)
    h_sc      : (Bt, Hp)       h carry in compute dtype
    c_sc      : (Bt, Hp) f32   c carry
    """
    tc = pl.program_id(1)
    n_tc = pl.num_programs(1)

    @pl.when(tc == 0)
    def _():
        h_sc[...] = jnp.zeros_like(h_sc)
        c_sc[...] = jnp.zeros_like(c_sc)

    Hp = hidden_p
    w = whh_t_ref[...]                      # loaded once per chunk
    base = tc * time_chunk

    def run_chunk(masked):
        def step(s, carry):
            h, c = carry
            # Single small MXU matmul per step; x-projection was hoisted out.
            gates = pre_ref[s] + jnp.dot(h, w,
                                         preferred_element_type=jnp.float32)
            # One EUP stream over the whole (Bt, 4Hp) tensor; the 0.5 input
            # pre-scale for i/f/o is already folded into the weights/bias.
            th = jnp.tanh(gates)
            sig = th * 0.5 + 0.5
            # Lane-aligned static slices (Hp is a multiple of 128).
            i_g = sig[:, 0 * Hp:1 * Hp]
            f_g = sig[:, 1 * Hp:2 * Hp]
            g_g = th[:, 2 * Hp:3 * Hp]
            o_g = sig[:, 3 * Hp:4 * Hp]
            c_new = f_g * c + i_g * g_g
            h_new = o_g * jnp.tanh(c_new)
            if masked:  # only emitted for the (single) tail chunk
                valid = (base + s) < seq_len
                h_new = jnp.where(valid, h_new, h.astype(jnp.float32))
                c_new = jnp.where(valid, c_new, c)
            return h_new.astype(compute_dtype), c_new

        h, c = lax.fori_loop(0, time_chunk, step,
                             (h_sc[...], c_sc[...]), unroll=unroll)
        h_sc[...] = h
        c_sc[...] = c

    has_tail = (seq_len % time_chunk) != 0  # static (trace-time) decision
    if has_tail:
        @pl.when(tc < n_tc - 1)
        def _():
            run_chunk(False)

        @pl.when(tc == n_tc - 1)
        def _():
            run_chunk(True)
    else:
        run_chunk(False)

    @pl.when(tc == n_tc - 1)
    def _():
        h_out_ref[...] = h_sc[...].astype(h_out_ref.dtype)


def last_lstm_pallas(x, w_ih, w_hh, b_ih, b_hh, *, compute_dtype=None,
                     time_chunk=None, batch_tile=None,
                     vmem_budget_bytes=40 * (1 << 20)):
    """Run the LSTM over the full sequence; return final hidden state (B, H)."""
    T, B, I = x.shape
    H = w_hh.shape[1]
    out_dtype = x.dtype
    if compute_dtype is None:
        compute_dtype = w_hh.dtype
    compute_dtype = jnp.dtype(compute_dtype)

    # ---- Lane / sublane padding -------------------------------------------
    Hp = _round_up(H, 128)                              # lane-align gate blocks
    sublane = 16 if compute_dtype.itemsize == 2 else 8
    Bp = _round_up(max(B, 1), sublane)

    # ---- Rearrange / pad weights into [i|f|g|o] blocks of width Hp and fold
    #      the sigmoid 0.5 pre-scale into them (done once; tiny arrays). ------
    scale = jnp.asarray(_GATE_PRESCALE, jnp.float32).reshape(4, 1, 1)

    w_ih4 = w_ih.astype(jnp.float32).reshape(4, H, I) * scale
    w_ih_p = jnp.zeros((4, Hp, I), jnp.float32).at[:, :H, :].set(w_ih4)

    w_hh4 = w_hh.astype(jnp.float32).reshape(4, H, H) * scale
    w_hh_p = jnp.zeros((4, Hp, Hp), jnp.float32).at[:, :H, :H].set(w_hh4)
    whh_t = w_hh_p.reshape(4 * Hp, Hp).T.astype(compute_dtype)   # (Hp, 4Hp)

    b4 = (b_ih + b_hh).astype(jnp.float32).reshape(4, H) * scale[:, :, 0]
    b_p = jnp.zeros((4, Hp), jnp.float32).at[:, :H].set(b4).reshape(1, 4 * Hp)

    # ---- Tile sizes ---------------------------------------------------------
    if batch_tile is None:
        batch_tile = Bp if Bp <= 128 else 128
    Bp = _round_up(Bp, batch_tile)
    n_btiles = Bp // batch_tile

    pre_isz = compute_dtype.itemsize
    w_bytes = Hp * 4 * Hp * pre_isz
    fixed = (2 * w_bytes                                   # weight (worst case)
             + batch_tile * Hp * (pre_isz + 4)             # h/c scratch
             + 2 * batch_tile * Hp * jnp.dtype(out_dtype).itemsize)
    if time_chunk is None:
        per_step = 2 * batch_tile * 4 * Hp * pre_isz       # double-buffered pre
        avail = max(vmem_budget_bytes - fixed, 1 << 20)
        time_chunk = int(max(1, min(T, 64, avail // per_step)))
    n_chunks = -(-T // time_chunk)
    t_pad = n_chunks * time_chunk

    # ---- Hoisted input projection: one large XLA GEMM outside the recurrence.
    #      Pad x (small) rather than the 4Hp-wide pre array. -------------------
    xp = x
    if t_pad != T or Bp != B:
        xp = jnp.zeros((t_pad, Bp, I), x.dtype).at[:T, :B, :].set(x)
    pre = jnp.dot(xp.reshape(t_pad * Bp, I).astype(jnp.float32),
                  w_ih_p.reshape(4 * Hp, I).T,
                  preferred_element_type=jnp.float32) + b_p
    pre = pre.reshape(t_pad, Bp, 4 * Hp).astype(compute_dtype)

    # ---- Unroll heuristic: full unroll only when a step's gates fit in a few
    #      vregs; otherwise partial unroll to avoid spill traffic. -------------
    step_bytes = batch_tile * 4 * Hp * 4
    if step_bytes <= 64 * 1024:
        unroll = time_chunk
    elif step_bytes <= 256 * 1024:
        unroll = min(8, time_chunk)
    else:
        unroll = min(4, time_chunk)

    kernel = functools.partial(_lstm_recurrent_kernel,
                               time_chunk=time_chunk, seq_len=T,
                               hidden_p=Hp, unroll=unroll,
                               compute_dtype=compute_dtype)

    needed = 2 * time_chunk * batch_tile * 4 * Hp * pre_isz + fixed
    vmem_limit = int(min(max(2 * needed, 16 << 20), 64 << 20))

    def _call(single_buffer_weights):
        if single_buffer_weights:
            # Constant index_map -> never re-fetched; single buffer halves its
            # VMEM footprint (important on v7x's 64 MiB).
            w_spec = pl.BlockSpec((Hp, 4 * Hp), lambda b, t: (0, 0),
                                  pipeline_mode=pl.Buffered(1))
        else:
            w_spec = pl.BlockSpec((Hp, 4 * Hp), lambda b, t: (0, 0))
        return pl.pallas_call(
            kernel,
            out_shape=jax.ShapeDtypeStruct((Bp, Hp), out_dtype),
            grid_spec=pltpu.PrefetchScalarGridSpec(
                num_scalar_prefetch=0,
                grid=(n_btiles, n_chunks),
                in_specs=[
                    # pre-gates chunk: (Tc, Bt, 4Hp)
                    pl.BlockSpec((time_chunk, batch_tile, 4 * Hp),
                                 lambda b, t: (t, b, 0)),
                    # W_hh^T resident for the whole recurrence
                    w_spec,
                ],
                out_specs=pl.BlockSpec((batch_tile, Hp), lambda b, t: (b, 0)),
                scratch_shapes=[
                    pltpu.VMEM((batch_tile, Hp), compute_dtype),  # h carry
                    pltpu.VMEM((batch_tile, Hp), jnp.float32),    # c carry
                ],
            ),
            compiler_params=pltpu.CompilerParams(
                # batch tiles parallel (v7x megacore); time is serial
                dimension_semantics=("parallel", "arbitrary"),
                vmem_limit_bytes=vmem_limit,
            ),
        )(pre, whh_t)

    try:
        out = jax.block_until_ready(_call(True))
    except Exception:
        # Fallback if this JAX/Mosaic version rejects single-buffered specs.
        out = jax.block_until_ready(_call(False))

    return out[:B, :H].astype(out_dtype)


def last_lstm_ref(x, w_ih, w_hh, b_ih, b_hh):
    """Pure-JAX reference (lax.scan) replicating nn.LSTM final hidden state."""
    T, B, I = x.shape
    H = w_hh.shape[1]
    b = (b_ih + b_hh).astype(jnp.float32)

    def step(carry, x_t):
        h, c = carry
        gates = (x_t.astype(jnp.float32) @ w_ih.astype(jnp.float32).T
                 + h @ w_hh.astype(jnp.float32).T + b)
        i_g = jax.nn.sigmoid(gates[:, 0 * H:1 * H])
        f_g = jax.nn.sigmoid(gates[:, 1 * H:2 * H])
        g_g = jnp.tanh(gates[:, 2 * H:3 * H])
        o_g = jax.nn.sigmoid(gates[:, 3 * H:4 * H])
        c_new = f_g * c + i_g * g_g
        h_new = o_g * jnp.tanh(c_new)
        return (h_new, c_new), None

    h0 = jnp.zeros((B, H), jnp.float32)
    c0 = jnp.zeros((B, H), jnp.float32)
    (h_T, _), _ = lax.scan(step, (h0, c0), x)
    return h_T.astype(x.dtype)


if __name__ == "__main__":
    # Small shapes consistent with the module: seq=8, batch=2, input=16, hidden=32.
    T, B, I, H = 8, 2, 16, 32
    key = jax.random.PRNGKey(0)
    kx, k1, k2, k3, k4 = jax.random.split(key, 5)

    bound = 1.0 / jnp.sqrt(H)   # PyTorch nn.LSTM default init range
    x = jax.random.normal(kx, (T, B, I), dtype=jnp.float32)
    w_ih = jax.random.uniform(k1, (4 * H, I), minval=-bound, maxval=bound,
                              dtype=jnp.float32)
    w_hh = jax.random.uniform(k2, (4 * H, H), minval=-bound, maxval=bound,
                              dtype=jnp.float32)
    b_ih = jax.random.uniform(k3, (4 * H,), minval=-bound, maxval=bound,
                              dtype=jnp.float32)
    b_hh = jax.random.uniform(k4, (4 * H,), minval=-bound, maxval=bound,
                              dtype=jnp.float32)

    h_ref = last_lstm_ref(x, w_ih, w_hh, b_ih, b_hh)

    # f32 path (validation-grade).
    h_f32 = jax.block_until_ready(last_lstm_pallas(x, w_ih, w_hh, b_ih, b_hh))
    assert h_f32.shape == (B, H)
    assert jnp.allclose(h_f32, h_ref, atol=5e-3, rtol=5e-3), "f32 mismatch"

    # bf16-streamed path (halves HBM traffic / resident weight VMEM).
    h_bf16 = jax.block_until_ready(
        last_lstm_pallas(x, w_ih, w_hh, b_ih, b_hh,
                         compute_dtype=jnp.bfloat16))
    assert h_bf16.shape == (B, H)
    assert jnp.allclose(h_bf16.astype(jnp.float32), h_ref,
                        atol=1e-1, rtol=1e-1), "bf16 mismatch"

    print("KERNEL_OK")
</pallas_src>

<mosaic_0001>
module attributes {stable_mosaic.version = 11 : i64} {
  func.func @_lstm_recurrent_kernel(%arg0: i32, %arg1: i32, %arg2: memref<8x8x512xf32, #tpu.memory_space<vmem>>, %arg3: memref<128x512xf32, #tpu.memory_space<vmem>>, %arg4: memref<8x128xf32, #tpu.memory_space<vmem>>, %arg5: memref<8x128xf32, #tpu.memory_space<vmem>>, %arg6: memref<8x128xf32, #tpu.memory_space<vmem>>) attributes {dimension_semantics = [#tpu.dimension_semantics<parallel>, #tpu.dimension_semantics<arbitrary>], iteration_bounds = array<i64: 1, 1>, scalar_prefetch = 0 : i64, scratch_operands = 2 : i64, tpu.core_type = #tpu.core_type<tc>, window_params = [{transform_indices = @transform_0, window_bounds = array<i64: 8, 8, 512>}, {pipeline_mode = #tpu.pipeline_mode<synchronous>, transform_indices = @transform_1, window_bounds = array<i64: 128, 512>}, {transform_indices = @transform_2, window_bounds = array<i64: 8, 128>}]} {
    %c0_i32 = arith.constant 0 : i32
    %0 = arith.cmpi eq, %arg1, %c0_i32 : i32
    %1 = arith.extui %0 : i1 to i32
    %c0_i32_0 = arith.constant 0 : i32
    %2 = arith.cmpi ne, %1, %c0_i32_0 : i32
    scf.if %2 {
      %cst_52 = arith.constant 0.000000e+00 : f32
      %163 = vector.broadcast %cst_52 : f32 to vector<8x128xf32>
      %c0_53 = arith.constant 0 : index
      %c0_54 = arith.constant 0 : index
      %164 = vector.load %arg5[%c0_53, %c0_54] : memref<8x128xf32, #tpu.memory_space<vmem>>, vector<8x128xf32>
      tpu.vector_store %arg5[%c0_53, %c0_54], %163 {strides = array<i32>} : memref<8x128xf32, #tpu.memory_space<vmem>>, vector<8x128xf32>,
      %cst_55 = arith.constant 0.000000e+00 : f32
      %165 = vector.broadcast %cst_55 : f32 to vector<8x128xf32>
      %c0_56 = arith.constant 0 : index
      %c0_57 = arith.constant 0 : index
      %166 = vector.load %arg6[%c0_56, %c0_57] : memref<8x128xf32, #tpu.memory_space<vmem>>, vector<8x128xf32>
      tpu.vector_store %arg6[%c0_56, %c0_57], %165 {strides = array<i32>} : memref<8x128xf32, #tpu.memory_space<vmem>>, vector<8x128xf32>,
    } else {
    }
    %c0 = arith.constant 0 : index
    %c0_1 = arith.constant 0 : index
    %3 = vector.load %arg3[%c0, %c0_1] : memref<128x512xf32, #tpu.memory_space<vmem>>, vector<128x512xf32>
    %c0_2 = arith.constant 0 : index
    %c0_3 = arith.constant 0 : index
    %4 = vector.load %arg5[%c0_2, %c0_3] : memref<8x128xf32, #tpu.memory_space<vmem>>, vector<8x128xf32>
    %c0_4 = arith.constant 0 : index
    %c0_5 = arith.constant 0 : index
    %5 = vector.load %arg6[%c0_4, %c0_5] : memref<8x128xf32, #tpu.memory_space<vmem>>, vector<8x128xf32>
    %c0_i32_6 = arith.constant 0 : i32
    %6 = arith.index_cast %c0_i32_6 : i32 to index
    %c0_7 = arith.constant 0 : index
    %c0_8 = arith.constant 0 : index
    %7 = vector.load %arg2[%6, %c0_7, %c0_8] : memref<8x8x512xf32, #tpu.memory_space<vmem>>, vector<1x8x512xf32>
    %8 = vector.shape_cast %7 : vector<1x8x512xf32> to vector<8x512xf32>
    %cst = arith.constant dense<0.000000e+00> : vector<8x512xf32>
    %9 = tpu.matmul %4, %3, %cst {dimension_numbers = #tpu.dot_dimension_numbers<[1], [0], [0], [1], [0, 0, 1, 1], [], []>} : vector<8x128xf32>, vector<128x512xf32>, vector<8x512xf32> -> vector<8x512xf32>
    %10 = arith.addf %8, %9 : vector<8x512xf32>
    %11 = math.tanh %10 : vector<8x512xf32>
    %cst_9 = arith.constant 5.000000e-01 : f32
    %12 = vector.broadcast %cst_9 : f32 to vector<8x512xf32>
    %13 = arith.mulf %11, %12 : vector<8x512xf32>
    %cst_10 = arith.constant 5.000000e-01 : f32
    %14 = vector.broadcast %cst_10 : f32 to vector<8x512xf32>
    %15 = arith.addf %13, %14 : vector<8x512xf32>
    %16 = vector.extract_strided_slice %15 {offsets = [0, 0], sizes = [8, 128], strides = [1, 1]} : vector<8x512xf32> to vector<8x128xf32>
    %17 = vector.extract_strided_slice %15 {offsets = [0, 128], sizes = [8, 128], strides = [1, 1]} : vector<8x512xf32> to vector<8x128xf32>
    %18 = vector.extract_strided_slice %11 {offsets = [0, 256], sizes = [8, 128], strides = [1, 1]} : vector<8x512xf32> to vector<8x128xf32>
    %19 = vector.extract_strided_slice %15 {offsets = [0, 384], sizes = [8, 128], strides = [1, 1]} : vector<8x512xf32> to vector<8x128xf32>
    %20 = arith.mulf %17, %5 : vector<8x128xf32>
    %21 = arith.mulf %16, %18 : vector<8x128xf32>
    %22 = arith.addf %20, %21 : vector<8x128xf32>
    %23 = math.tanh %22 : vector<8x128xf32>
    %24 = arith.mulf %19, %23 : vector<8x128xf32>
    %c1_i32 = arith.constant 1 : i32
    %25 = arith.index_cast %c1_i32 : i32 to index
    %c0_11 = arith.constant 0 : index
    %c0_12 = arith.constant 0 : index
    %26 = vector.load %arg2[%25, %c0_11, %c0_12] : memref<8x8x512xf32, #tpu.memory_space<vmem>>, vector<1x8x512xf32>
    %27 = vector.shape_cast %26 : vector<1x8x512xf32> to vector<8x512xf32>
    %cst_13 = arith.constant dense<0.000000e+00> : vector<8x512xf32>
    %28 = tpu.matmul %24, %3, %cst_13 {dimension_numbers = #tpu.dot_dimension_numbers<[1], [0], [0], [1], [0, 0, 1, 1], [], []>} : vector<8x128xf32>, vector<128x512xf32>, vector<8x512xf32> -> vector<8x512xf32>
    %29 = arith.addf %27, %28 : vector<8x512xf32>
    %30 = math.tanh %29 : vector<8x512xf32>
    %cst_14 = arith.constant 5.000000e-01 : f32
    %31 = vector.broadcast %cst_14 : f32 to vector<8x512xf32>
    %32 = arith.mulf %30, %31 : vector<8x512xf32>
    %cst_15 = arith.constant 5.000000e-01 : f32
    %33 = vector.broadcast %cst_15 : f32 to vector<8x512xf32>
    %34 = arith.addf %32, %33 : vector<8x512xf32>
    %35 = vector.extract_strided_slice %34 {offsets = [0, 0], sizes = [8, 128], strides = [1, 1]} : vector<8x512xf32> to vector<8x128xf32>
    %36 = vector.extract_strided_slice %34 {offsets = [0, 128], sizes = [8, 128], strides = [1, 1]} : vector<8x512xf32> to vector<8x128xf32>
    %37 = vector.extract_strided_slice %30 {offsets = [0, 256], sizes = [8, 128], strides = [1, 1]} : vector<8x512xf32> to vector<8x128xf32>
    %38 = vector.extract_strided_slice %34 {offsets = [0, 384], sizes = [8, 128], strides = [1, 1]} : vector<8x512xf32> to vector<8x128xf32>
    %39 = arith.mulf %36, %22 : vector<8x128xf32>
    %40 = arith.mulf %35, %37 : vector<8x128xf32>
    %41 = arith.addf %39, %40 : vector<8x128xf32>
    %42 = math.tanh %41 : vector<8x128xf32>
    %43 = arith.mulf %38, %42 : vector<8x128xf32>
    %c2_i32 = arith.constant 2 : i32
    %44 = arith.index_cast %c2_i32 : i32 to index
    %c0_16 = arith.constant 0 : index
    %c0_17 = arith.constant 0 : index
    %45 = vector.load %arg2[%44, %c0_16, %c0_17] : memref<8x8x512xf32, #tpu.memory_space<vmem>>, vector<1x8x512xf32>
    %46 = vector.shape_cast %45 : vector<1x8x512xf32> to vector<8x512xf32>
    %cst_18 = arith.constant dense<0.000000e+00> : vector<8x512xf32>
    %47 = tpu.matmul %43, %3, %cst_18 {dimension_numbers = #tpu.dot_dimension_numbers<[1], [0], [0], [1], [0, 0, 1, 1], [], []>} : vector<8x128xf32>, vector<128x512xf32>, vector<8x512xf32> -> vector<8x512xf32>
    %48 = arith.addf %46, %47 : vector<8x512xf32>
    %49 = math.tanh %48 : vector<8x512xf32>
    %cst_19 = arith.constant 5.000000e-01 : f32
    %50 = vector.broadcast %cst_19 : f32 to vector<8x512xf32>
    %51 = arith.mulf %49, %50 : vector<8x512xf32>
    %cst_20 = arith.constant 5.000000e-01 : f32
    %52 = vector.broadcast %cst_20 : f32 to vector<8x512xf32>
    %53 = arith.addf %51, %52 : vector<8x512xf32>
    %54 = vector.extract_strided_slice %53 {offsets = [0, 0], sizes = [8, 128], strides = [1, 1]} : vector<8x512xf32> to vector<8x128xf32>
    %55 = vector.extract_strided_slice %53 {offsets = [0, 128], sizes = [8, 128], strides = [1, 1]} : vector<8x512xf32> to vector<8x128xf32>
    %56 = vector.extract_strided_slice %49 {offsets = [0, 256], sizes = [8, 128], strides = [1, 1]} : vector<8x512xf32> to vector<8x128xf32>
    %57 = vector.extract_strided_slice %53 {offsets = [0, 384], sizes = [8, 128], strides = [1, 1]} : vector<8x512xf32> to vector<8x128xf32>
    %58 = arith.mulf %55, %41 : vector<8x128xf32>
    %59 = arith.mulf %54, %56 : vector<8x128xf32>
    %60 = arith.addf %58, %59 : vector<8x128xf32>
    %61 = math.tanh %60 : vector<8x128xf32>
    %62 = arith.mulf %57, %61 : vector<8x128xf32>
    %c3_i32 = arith.constant 3 : i32
    %63 = arith.index_cast %c3_i32 : i32 to index
    %c0_21 = arith.constant 0 : index
    %c0_22 = arith.constant 0 : index
    %64 = vector.load %arg2[%63, %c0_21, %c0_22] : memref<8x8x512xf32, #tpu.memory_space<vmem>>, vector<1x8x512xf32>
    %65 = vector.shape_cast %64 : vector<1x8x512xf32> to vector<8x512xf32>
    %cst_23 = arith.constant dense<0.000000e+00> : vector<8x512xf32>
    %66 = tpu.matmul %62, %3, %cst_23 {dimension_numbers = #tpu.dot_dimension_numbers<[1], [0], [0], [1], [0, 0, 1, 1], [], []>} : vector<8x128xf32>, vector<128x512xf32>, vector<8x512xf32> -> vector<8x512xf32>
    %67 = arith.addf %65, %66 : vector<8x512xf32>
    %68 = math.tanh %67 : vector<8x512xf32>
    %cst_24 = arith.constant 5.000000e-01 : f32
    %69 = vector.broadcast %cst_24 : f32 to vector<8x512xf32>
    %70 = arith.mulf %68, %69 : vector<8x512xf32>
    %cst_25 = arith.constant 5.000000e-01 : f32
    %71 = vector.broadcast %cst_25 : f32 to vector<8x512xf32>
    %72 = arith.addf %70, %71 : vector<8x512xf32>
    %73 = vector.extract_strided_slice %72 {offsets = [0, 0], sizes = [8, 128], strides = [1, 1]} : vector<8x512xf32> to vector<8x128xf32>
    %74 = vector.extract_strided_slice %72 {offsets = [0, 128], sizes = [8, 128], strides = [1, 1]} : vector<8x512xf32> to vector<8x128xf32>
    %75 = vector.extract_strided_slice %68 {offsets = [0, 256], sizes = [8, 128], strides = [1, 1]} : vector<8x512xf32> to vector<8x128xf32>
    %76 = vector.extract_strided_slice %72 {offsets = [0, 384], sizes = [8, 128], strides = [1, 1]} : vector<8x512xf32> to vector<8x128xf32>
    %77 = arith.mulf %74, %60 : vector<8x128xf32>
    %78 = arith.mulf %73, %75 : vector<8x128xf32>
    %79 = arith.addf %77, %78 : vector<8x128xf32>
    %80 = math.tanh %79 : vector<8x128xf32>
    %81 = arith.mulf %76, %80 : vector<8x128xf32>
    %c4_i32 = arith.constant 4 : i32
    %82 = arith.index_cast %c4_i32 : i32 to index
    %c0_26 = arith.constant 0 : index
    %c0_27 = arith.constant 0 : index
    %83 = vector.load %arg2[%82, %c0_26, %c0_27] : memref<8x8x512xf32, #tpu.memory_space<vmem>>, vector<1x8x512xf32>
    %84 = vector.shape_cast %83 : vector<1x8x512xf32> to vector<8x512xf32>
    %cst_28 = arith.constant dense<0.000000e+00> : vector<8x512xf32>
    %85 = tpu.matmul %81, %3, %cst_28 {dimension_numbers = #tpu.dot_dimension_numbers<[1], [0], [0], [1], [0, 0, 1, 1], [], []>} : vector<8x128xf32>, vector<128x512xf32>, vector<8x512xf32> -> vector<8x512xf32>
    %86 = arith.addf %84, %85 : vector<8x512xf32>
    %87 = math.tanh %86 : vector<8x512xf32>
    %cst_29 = arith.constant 5.000000e-01 : f32
    %88 = vector.broadcast %cst_29 : f32 to vector<8x512xf32>
    %89 = arith.mulf %87, %88 : vector<8x512xf32>
    %cst_30 = arith.constant 5.000000e-01 : f32
    %90 = vector.broadcast %cst_30 : f32 to vector<8x512xf32>
    %91 = arith.addf %89, %90 : vector<8x512xf32>
    %92 = vector.extract_strided_slice %91 {offsets = [0, 0], sizes = [8, 128], strides = [1, 1]} : vector<8x512xf32> to vector<8x128xf32>
    %93 = vector.extract_strided_slice %91 {offsets = [0, 128], sizes = [8, 128], strides = [1, 1]} : vector<8x512xf32> to vector<8x128xf32>
    %94 = vector.extract_strided_slice %87 {offsets = [0, 256], sizes = [8, 128], strides = [1, 1]} : vector<8x512xf32> to vector<8x128xf32>
    %95 = vector.extract_strided_slice %91 {offsets = [0, 384], sizes = [8, 128], strides = [1, 1]} : vector<8x512xf32> to vector<8x128xf32>
    %96 = arith.mulf %93, %79 : vector<8x128xf32>
    %97 = arith.mulf %92, %94 : vector<8x128xf32>
    %98 = arith.addf %96, %97 : vector<8x128xf32>
    %99 = math.tanh %98 : vector<8x128xf32>
    %100 = arith.mulf %95, %99 : vector<8x128xf32>
    %c5_i32 = arith.constant 5 : i32
    %101 = arith.index_cast %c5_i32 : i32 to index
    %c0_31 = arith.constant 0 : index
    %c0_32 = arith.constant 0 : index
    %102 = vector.load %arg2[%101, %c0_31, %c0_32] : memref<8x8x512xf32, #tpu.memory_space<vmem>>, vector<1x8x512xf32>
    %103 = vector.shape_cast %102 : vector<1x8x512xf32> to vector<8x512xf32>
    %cst_33 = arith.constant dense<0.000000e+00> : vector<8x512xf32>
    %104 = tpu.matmul %100, %3, %cst_33 {dimension_numbers = #tpu.dot_dimension_numbers<[1], [0], [0], [1], [0, 0, 1, 1], [], []>} : vector<8x128xf32>, vector<128x512xf32>, vector<8x512xf32> -> vector<8x512xf32>
    %105 = arith.addf %103, %104 : vector<8x512xf32>
    %106 = math.tanh %105 : vector<8x512xf32>
    %cst_34 = arith.constant 5.000000e-01 : f32
    %107 = vector.broadcast %cst_34 : f32 to vector<8x512xf32>
    %108 = arith.mulf %106, %107 : vector<8x512xf32>
    %cst_35 = arith.constant 5.000000e-01 : f32
    %109 = vector.broadcast %cst_35 : f32 to vector<8x512xf32>
    %110 = arith.addf %108, %109 : vector<8x512xf32>
    %111 = vector.extract_strided_slice %110 {offsets = [0, 0], sizes = [8, 128], strides = [1, 1]} : vector<8x512xf32> to vector<8x128xf32>
    %112 = vector.extract_strided_slice %110 {offsets = [0, 128], sizes = [8, 128], strides = [1, 1]} : vector<8x512xf32> to vector<8x128xf32>
    %113 = vector.extract_strided_slice %106 {offsets = [0, 256], sizes = [8, 128], strides = [1, 1]} : vector<8x512xf32> to vector<8x128xf32>
    %114 = vector.extract_strided_slice %110 {offsets = [0, 384], sizes = [8, 128], strides = [1, 1]} : vector<8x512xf32> to vector<8x128xf32>
    %115 = arith.mulf %112, %98 : vector<8x128xf32>
    %116 = arith.mulf %111, %113 : vector<8x128xf32>
    %117 = arith.addf %115, %116 : vector<8x128xf32>
    %118 = math.tanh %117 : vector<8x128xf32>
    %119 = arith.mulf %114, %118 : vector<8x128xf32>
    %c6_i32 = arith.constant 6 : i32
    %120 = arith.index_cast %c6_i32 : i32 to index
    %c0_36 = arith.constant 0 : index
    %c0_37 = arith.constant 0 : index
    %121 = vector.load %arg2[%120, %c0_36, %c0_37] : memref<8x8x512xf32, #tpu.memory_space<vmem>>, vector<1x8x512xf32>
    %122 = vector.shape_cast %121 : vector<1x8x512xf32> to vector<8x512xf32>
    %cst_38 = arith.constant dense<0.000000e+00> : vector<8x512xf32>
    %123 = tpu.matmul %119, %3, %cst_38 {dimension_numbers = #tpu.dot_dimension_numbers<[1], [0], [0], [1], [0, 0, 1, 1], [], []>} : vector<8x128xf32>, vector<128x512xf32>, vector<8x512xf32> -> vector<8x512xf32>
    %124 = arith.addf %122, %123 : vector<8x512xf32>
    %125 = math.tanh %124 : vector<8x512xf32>
    %cst_39 = arith.constant 5.000000e-01 : f32
    %126 = vector.broadcast %cst_39 : f32 to vector<8x512xf32>
    %127 = arith.mulf %125, %126 : vector<8x512xf32>
    %cst_40 = arith.constant 5.000000e-01 : f32
    %128 = vector.broadcast %cst_40 : f32 to vector<8x512xf32>
    %129 = arith.addf %127, %128 : vector<8x512xf32>
    %130 = vector.extract_strided_slice %129 {offsets = [0, 0], sizes = [8, 128], strides = [1, 1]} : vector<8x512xf32> to vector<8x128xf32>
    %131 = vector.extract_strided_slice %129 {offsets = [0, 128], sizes = [8, 128], strides = [1, 1]} : vector<8x512xf32> to vector<8x128xf32>
    %132 = vector.extract_strided_slice %125 {offsets = [0, 256], sizes = [8, 128], strides = [1, 1]} : vector<8x512xf32> to vector<8x128xf32>
    %133 = vector.extract_strided_slice %129 {offsets = [0, 384], sizes = [8, 128], strides = [1, 1]} : vector<8x512xf32> to vector<8x128xf32>
    %134 = arith.mulf %131, %117 : vector<8x128xf32>
    %135 = arith.mulf %130, %132 : vector<8x128xf32>
    %136 = arith.addf %134, %135 : vector<8x128xf32>
    %137 = math.tanh %136 : vector<8x128xf32>
    %138 = arith.mulf %133, %137 : vector<8x128xf32>
    %c7_i32 = arith.constant 7 : i32
    %139 = arith.index_cast %c7_i32 : i32 to index
    %c0_41 = arith.constant 0 : index
    %c0_42 = arith.constant 0 : index
    %140 = vector.load %arg2[%139, %c0_41, %c0_42] : memref<8x8x512xf32, #tpu.memory_space<vmem>>, vector<1x8x512xf32>
    %141 = vector.shape_cast %140 : vector<1x8x512xf32> to vector<8x512xf32>
    %cst_43 = arith.constant dense<0.000000e+00> : vector<8x512xf32>
    %142 = tpu.matmul %138, %3, %cst_43 {dimension_numbers = #tpu.dot_dimension_numbers<[1], [0], [0], [1], [0, 0, 1, 1], [], []>} : vector<8x128xf32>, vector<128x512xf32>, vector<8x512xf32> -> vector<8x512xf32>
    %143 = arith.addf %141, %142 : vector<8x512xf32>
    %144 = math.tanh %143 : vector<8x512xf32>
    %cst_44 = arith.constant 5.000000e-01 : f32
    %145 = vector.broadcast %cst_44 : f32 to vector<8x512xf32>
    %146 = arith.mulf %144, %145 : vector<8x512xf32>
    %cst_45 = arith.constant 5.000000e-01 : f32
    %147 = vector.broadcast %cst_45 : f32 to vector<8x512xf32>
    %148 = arith.addf %146, %147 : vector<8x512xf32>
    %149 = vector.extract_strided_slice %148 {offsets = [0, 0], sizes = [8, 128], strides = [1, 1]} : vector<8x512xf32> to vector<8x128xf32>
    %150 = vector.extract_strided_slice %148 {offsets = [0, 128], sizes = [8, 128], strides = [1, 1]} : vector<8x512xf32> to vector<8x128xf32>
    %151 = vector.extract_strided_slice %144 {offsets = [0, 256], sizes = [8, 128], strides = [1, 1]} : vector<8x512xf32> to vector<8x128xf32>
    %152 = vector.extract_strided_slice %148 {offsets = [0, 384], sizes = [8, 128], strides = [1, 1]} : vector<8x512xf32> to vector<8x128xf32>
    %153 = arith.mulf %150, %136 : vector<8x128xf32>
    %154 = arith.mulf %149, %151 : vector<8x128xf32>
    %155 = arith.addf %153, %154 : vector<8x128xf32>
    %156 = math.tanh %155 : vector<8x128xf32>
    %157 = arith.mulf %152, %156 : vector<8x128xf32>
    %c8_i32 = arith.constant 8 : i32
    %c0_46 = arith.constant 0 : index
    %c0_47 = arith.constant 0 : index
    %158 = vector.load %arg5[%c0_46, %c0_47] : memref<8x128xf32, #tpu.memory_space<vmem>>, vector<8x128xf32>
    tpu.vector_store %arg5[%c0_46, %c0_47], %157 {strides = array<i32>} : memref<8x128xf32, #tpu.memory_space<vmem>>, vector<8x128xf32>,
    %c0_48 = arith.constant 0 : index
    %c0_49 = arith.constant 0 : index
    %159 = vector.load %arg6[%c0_48, %c0_49] : memref<8x128xf32, #tpu.memory_space<vmem>>, vector<8x128xf32>
    tpu.vector_store %arg6[%c0_48, %c0_49], %155 {strides = array<i32>} : memref<8x128xf32, #tpu.memory_space<vmem>>, vector<8x128xf32>,
    %c0_i32_50 = arith.constant 0 : i32
    %160 = arith.cmpi eq, %arg1, %c0_i32_50 : i32
    %161 = arith.extui %160 : i1 to i32
    %c0_i32_51 = arith.constant 0 : i32
    %162 = arith.cmpi ne, %161, %c0_i32_51 : i32
    scf.if %162 {
      %c0_52 = arith.constant 0 : index
      %c0_53 = arith.constant 0 : index
      %163 = vector.load %arg5[%c0_52, %c0_53] : memref<8x128xf32, #tpu.memory_space<vmem>>, vector<8x128xf32>
      %c0_54 = arith.constant 0 : index
      %c0_55 = arith.constant 0 : index
      %164 = vector.load %arg4[%c0_54, %c0_55] : memref<8x128xf32, #tpu.memory_space<vmem>>, vector<8x128xf32>
      tpu.vector_store %arg4[%c0_54, %c0_55], %163 {strides = array<i32>} : memref<8x128xf32, #tpu.memory_space<vmem>>, vector<8x128xf32>,
    } else {
    }
    return
  }
  func.func @transform_0(%arg0: i32, %arg1: i32) -> (i32, i32, i32) {
    %c0_i32 = arith.constant 0 : i32
    %c0_i32_0 = arith.constant 0 : i32
    return %arg1, %arg0, %c0_i32 : i32, i32, i32
  }
  func.func @transform_1(%arg0: i32, %arg1: i32) -> (i32, i32) {
    %c0_i32 = arith.constant 0 : i32
    %c0_i32_0 = arith.constant 0 : i32
    %c0_i32_1 = arith.constant 0 : i32
    return %c0_i32, %c0_i32_0 : i32, i32
  }
  func.func @transform_2(%arg0: i32, %arg1: i32) -> (i32, i32) {
    %c0_i32 = arith.constant 0 : i32
    %c0_i32_0 = arith.constant 0 : i32
    return %arg0, %c0_i32 : i32, i32
  }
}

module attributes {stable_mosaic.version = 11 : i64} {
  func.func @_lstm_recurrent_kernel(%arg0: i32, %arg1: i32, %arg2: memref<8x8x512xf32, #tpu.memory_space<vmem>>, %arg3: memref<128x512xf32, #tpu.memory_space<vmem>>, %arg4: memref<8x128xf32, #tpu.memory_space<vmem>>, %arg5: memref<8x128xf32, #tpu.memory_space<vmem>>, %arg6: memref<8x128xf32, #tpu.memory_space<vmem>>) attributes {dimension_semantics = [#tpu.dimension_semantics<parallel>, #tpu.dimension_semantics<arbitrary>], iteration_bounds = array<i64: 1, 1>, scalar_prefetch = 0 : i64, scratch_operands = 2 : i64, tpu.core_type = #tpu.core_type<tc>, window_params = [{transform_indices = @transform_0, window_bounds = array<i64: 8, 8, 512>}, {pipeline_mode = #tpu.pipeline_mode<synchronous>, transform_indices = @transform_1, window_bounds = array<i64: 128, 512>}, {transform_indices = @transform_2, window_bounds = array<i64: 8, 128>}]} {
    %c0_i32 = arith.constant 0 : i32
    %0 = arith.cmpi eq, %arg1, %c0_i32 : i32
    %1 = arith.extui %0 : i1 to i32
    %c0_i32_0 = arith.constant 0 : i32
    %2 = arith.cmpi ne, %1, %c0_i32_0 : i32
    scf.if %2 {
      %cst_52 = arith.constant 0.000000e+00 : f32
      %163 = vector.broadcast %cst_52 : f32 to vector<8x128xf32>
      %c0_53 = arith.constant 0 : index
      %c0_54 = arith.constant 0 : index
      %164 = vector.load %arg5[%c0_53, %c0_54] : memref<8x128xf32, #tpu.memory_space<vmem>>, vector<8x128xf32>
      tpu.vector_store %arg5[%c0_53, %c0_54], %163 {strides = array<i32>} : memref<8x128xf32, #tpu.memory_space<vmem>>, vector<8x128xf32>,
      %cst_55 = arith.constant 0.000000e+00 : f32
      %165 = vector.broadcast %cst_55 : f32 to vector<8x128xf32>
      %c0_56 = arith.constant 0 : index
      %c0_57 = arith.constant 0 : index
      %166 = vector.load %arg6[%c0_56, %c0_57] : memref<8x128xf32, #tpu.memory_space<vmem>>, vector<8x128xf32>
      tpu.vector_store %arg6[%c0_56, %c0_57], %165 {strides = array<i32>} : memref<8x128xf32, #tpu.memory_space<vmem>>, vector<8x128xf32>,
    } else {
    }
    %c0 = arith.constant 0 : index
    %c0_1 = arith.constant 0 : index
    %3 = vector.load %arg3[%c0, %c0_1] : memref<128x512xf32, #tpu.memory_space<vmem>>, vector<128x512xf32>
    %c0_2 = arith.constant 0 : index
    %c0_3 = arith.constant 0 : index
    %4 = vector.load %arg5[%c0_2, %c0_3] : memref<8x128xf32, #tpu.memory_space<vmem>>, vector<8x128xf32>
    %c0_4 = arith.constant 0 : index
    %c0_5 = arith.constant 0 : index
    %5 = vector.load %arg6[%c0_4, %c0_5] : memref<8x128xf32, #tpu.memory_space<vmem>>, vector<8x128xf32>
    %c0_i32_6 = arith.constant 0 : i32
    %6 = arith.index_cast %c0_i32_6 : i32 to index
    %c0_7 = arith.constant 0 : index
    %c0_8 = arith.constant 0 : index
    %7 = vector.load %arg2[%6, %c0_7, %c0_8] : memref<8x8x512xf32, #tpu.memory_space<vmem>>, vector<1x8x512xf32>
    %8 = vector.shape_cast %7 : vector<1x8x512xf32> to vector<8x512xf32>
    %cst = arith.constant dense<0.000000e+00> : vector<8x512xf32>
    %9 = tpu.matmul %4, %3, %cst {dimension_numbers = #tpu.dot_dimension_numbers<[1], [0], [0], [1], [0, 0, 1, 1], [], []>} : vector<8x128xf32>, vector<128x512xf32>, vector<8x512xf32> -> vector<8x512xf32>
    %10 = arith.addf %8, %9 : vector<8x512xf32>
    %11 = math.tanh %10 : vector<8x512xf32>
    %cst_9 = arith.constant 5.000000e-01 : f32
    %12 = vector.broadcast %cst_9 : f32 to vector<8x512xf32>
    %13 = arith.mulf %11, %12 : vector<8x512xf32>
    %cst_10 = arith.constant 5.000000e-01 : f32
    %14 = vector.broadcast %cst_10 : f32 to vector<8x512xf32>
    %15 = arith.addf %13, %14 : vector<8x512xf32>
    %16 = vector.extract_strided_slice %15 {offsets = [0, 0], sizes = [8, 128], strides = [1, 1]} : vector<8x512xf32> to vector<8x128xf32>
    %17 = vector.extract_strided_slice %15 {offsets = [0, 128], sizes = [8, 128], strides = [1, 1]} : vector<8x512xf32> to vector<8x128xf32>
    %18 = vector.extract_strided_slice %11 {offsets = [0, 256], sizes = [8, 128], strides = [1, 1]} : vector<8x512xf32> to vector<8x128xf32>
    %19 = vector.extract_strided_slice %15 {offsets = [0, 384], sizes = [8, 128], strides = [1, 1]} : vector<8x512xf32> to vector<8x128xf32>
    %20 = arith.mulf %17, %5 : vector<8x128xf32>
    %21 = arith.mulf %16, %18 : vector<8x128xf32>
    %22 = arith.addf %20, %21 : vector<8x128xf32>
    %23 = math.tanh %22 : vector<8x128xf32>
    %24 = arith.mulf %19, %23 : vector<8x128xf32>
    %c1_i32 = arith.constant 1 : i32
    %25 = arith.index_cast %c1_i32 : i32 to index
    %c0_11 = arith.constant 0 : index
    %c0_12 = arith.constant 0 : index
    %26 = vector.load %arg2[%25, %c0_11, %c0_12] : memref<8x8x512xf32, #tpu.memory_space<vmem>>, vector<1x8x512xf32>
    %27 = vector.shape_cast %26 : vector<1x8x512xf32> to vector<8x512xf32>
    %cst_13 = arith.constant dense<0.000000e+00> : vector<8x512xf32>
    %28 = tpu.matmul %24, %3, %cst_13 {dimension_numbers = #tpu.dot_dimension_numbers<[1], [0], [0], [1], [0, 0, 1, 1], [], []>} : vector<8x128xf32>, vector<128x512xf32>, vector<8x512xf32> -> vector<8x512xf32>
    %29 = arith.addf %27, %28 : vector<8x512xf32>
    %30 = math.tanh %29 : vector<8x512xf32>
    %cst_14 = arith.constant 5.000000e-01 : f32
    %31 = vector.broadcast %cst_14 : f32 to vector<8x512xf32>
    %32 = arith.mulf %30, %31 : vector<8x512xf32>
    %cst_15 = arith.constant 5.000000e-01 : f32
    %33 = vector.broadcast %cst_15 : f32 to vector<8x512xf32>
    %34 = arith.addf %32, %33 : vector<8x512xf32>
    %35 = vector.extract_strided_slice %34 {offsets = [0, 0], sizes = [8, 128], strides = [1, 1]} : vector<8x512xf32> to vector<8x128xf32>
    %36 = vector.extract_strided_slice %34 {offsets = [0, 128], sizes = [8, 128], strides = [1, 1]} : vector<8x512xf32> to vector<8x128xf32>
    %37 = vector.extract_strided_slice %30 {offsets = [0, 256], sizes = [8, 128], strides = [1, 1]} : vector<8x512xf32> to vector<8x128xf32>
    %38 = vector.extract_strided_slice %34 {offsets = [0, 384], sizes = [8, 128], strides = [1, 1]} : vector<8x512xf32> to vector<8x128xf32>
    %39 = arith.mulf %36, %22 : vector<8x128xf32>
    %40 = arith.mulf %35, %37 : vector<8x128xf32>
    %41 = arith.addf %39, %40 : vector<8x128xf32>
    %42 = math.tanh %41 : vector<8x128xf32>
    %43 = arith.mulf %38, %42 : vector<8x128xf32>
    %c2_i32 = arith.constant 2 : i32
    %44 = arith.index_cast %c2_i32 : i32 to index
    %c0_16 = arith.constant 0 : index
    %c0_17 = arith.constant 0 : index
    %45 = vector.load %arg2[%44, %c0_16, %c0_17] : memref<8x8x512xf32, #tpu.memory_space<vmem>>, vector<1x8x512xf32>
    %46 = vector.shape_cast %45 : vector<1x8x512xf32> to vector<8x512xf32>
    %cst_18 = arith.constant dense<0.000000e+00> : vector<8x512xf32>
    %47 = tpu.matmul %43, %3, %cst_18 {dimension_numbers = #tpu.dot_dimension_numbers<[1], [0], [0], [1], [0, 0, 1, 1], [], []>} : vector<8x128xf32>, vector<128x512xf32>, vector<8x512xf32> -> vector<8x512xf32>
    %48 = arith.addf %46, %47 : vector<8x512xf32>
    %49 = math.tanh %48 : vector<8x512xf32>
    %cst_19 = arith.constant 5.000000e-01 : f32
    %50 = vector.broadcast %cst_19 : f32 to vector<8x512xf32>
    %51 = arith.mulf %49, %50 : vector<8x512xf32>
    %cst_20 = arith.constant 5.000000e-01 : f32
    %52 = vector.broadcast %cst_20 : f32 to vector<8x512xf32>
    %53 = arith.addf %51, %52 : vector<8x512xf32>
    %54 = vector.extract_strided_slice %53 {offsets = [0, 0], sizes = [8, 128], strides = [1, 1]} : vector<8x512xf32> to vector<8x128xf32>
    %55 = vector.extract_strided_slice %53 {offsets = [0, 128], sizes = [8, 128], strides = [1, 1]} : vector<8x512xf32> to vector<8x128xf32>
    %56 = vector.extract_strided_slice %49 {offsets = [0, 256], sizes = [8, 128], strides = [1, 1]} : vector<8x512xf32> to vector<8x128xf32>
    %57 = vector.extract_strided_slice %53 {offsets = [0, 384], sizes = [8, 128], strides = [1, 1]} : vector<8x512xf32> to vector<8x128xf32>
    %58 = arith.mulf %55, %41 : vector<8x128xf32>
    %59 = arith.mulf %54, %56 : vector<8x128xf32>
    %60 = arith.addf %58, %59 : vector<8x128xf32>
    %61 = math.tanh %60 : vector<8x128xf32>
    %62 = arith.mulf %57, %61 : vector<8x128xf32>
    %c3_i32 = arith.constant 3 : i32
    %63 = arith.index_cast %c3_i32 : i32 to index
    %c0_21 = arith.constant 0 : index
    %c0_22 = arith.constant 0 : index
    %64 = vector.load %arg2[%63, %c0_21, %c0_22] : memref<8x8x512xf32, #tpu.memory_space<vmem>>, vector<1x8x512xf32>
    %65 = vector.shape_cast %64 : vector<1x8x512xf32> to vector<8x512xf32>
    %cst_23 = arith.constant dense<0.000000e+00> : vector<8x512xf32>
    %66 = tpu.matmul %62, %3, %cst_23 {dimension_numbers = #tpu.dot_dimension_numbers<[1], [0], [0], [1], [0, 0, 1, 1], [], []>} : vector<8x128xf32>, vector<128x512xf32>, vector<8x512xf32> -> vector<8x512xf32>
    %67 = arith.addf %65, %66 : vector<8x512xf32>
    %68 = math.tanh %67 : vector<8x512xf32>
    %cst_24 = arith.constant 5.000000e-01 : f32
    %69 = vector.broadcast %cst_24 : f32 to vector<8x512xf32>
    %70 = arith.mulf %68, %69 : vector<8x512xf32>
    %cst_25 = arith.constant 5.000000e-01 : f32
    %71 = vector.broadcast %cst_25 : f32 to vector<8x512xf32>
    %72 = arith.addf %70, %71 : vector<8x512xf32>
    %73 = vector.extract_strided_slice %72 {offsets = [0, 0], sizes = [8, 128], strides = [1, 1]} : vector<8x512xf32> to vector<8x128xf32>
    %74 = vector.extract_strided_slice %72 {offsets = [0, 128], sizes = [8, 128], strides = [1, 1]} : vector<8x512xf32> to vector<8x128xf32>
    %75 = vector.extract_strided_slice %68 {offsets = [0, 256], sizes = [8, 128], strides = [1, 1]} : vector<8x512xf32> to vector<8x128xf32>
    %76 = vector.extract_strided_slice %72 {offsets = [0, 384], sizes = [8, 128], strides = [1, 1]} : vector<8x512xf32> to vector<8x128xf32>
    %77 = arith.mulf %74, %60 : vector<8x128xf32>
    %78 = arith.mulf %73, %75 : vector<8x128xf32>
    %79 = arith.addf %77, %78 : vector<8x128xf32>
    %80 = math.tanh %79 : vector<8x128xf32>
    %81 = arith.mulf %76, %80 : vector<8x128xf32>
    %c4_i32 = arith.constant 4 : i32
    %82 = arith.index_cast %c4_i32 : i32 to index
    %c0_26 = arith.constant 0 : index
    %c0_27 = arith.constant 0 : index
    %83 = vector.load %arg2[%82, %c0_26, %c0_27] : memref<8x8x512xf32, #tpu.memory_space<vmem>>, vector<1x8x512xf32>
    %84 = vector.shape_cast %83 : vector<1x8x512xf32> to vector<8x512xf32>
    %cst_28 = arith.constant dense<0.000000e+00> : vector<8x512xf32>
    %85 = tpu.matmul %81, %3, %cst_28 {dimension_numbers = #tpu.dot_dimension_numbers<[1], [0], [0], [1], [0, 0, 1, 1], [], []>} : vector<8x128xf32>, vector<128x512xf32>, vector<8x512xf32> -> vector<8x512xf32>
    %86 = arith.addf %84, %85 : vector<8x512xf32>
    %87 = math.tanh %86 : vector<8x512xf32>
    %cst_29 = arith.constant 5.000000e-01 : f32
    %88 = vector.broadcast %cst_29 : f32 to vector<8x512xf32>
    %89 = arith.mulf %87, %88 : vector<8x512xf32>
    %cst_30 = arith.constant 5.000000e-01 : f32
    %90 = vector.broadcast %cst_30 : f32 to vector<8x512xf32>
    %91 = arith.addf %89, %90 : vector<8x512xf32>
    %92 = vector.extract_strided_slice %91 {offsets = [0, 0], sizes = [8, 128], strides = [1, 1]} : vector<8x512xf32> to vector<8x128xf32>
    %93 = vector.extract_strided_slice %91 {offsets = [0, 128], sizes = [8, 128], strides = [1, 1]} : vector<8x512xf32> to vector<8x128xf32>
    %94 = vector.extract_strided_slice %87 {offsets = [0, 256], sizes = [8, 128], strides = [1, 1]} : vector<8x512xf32> to vector<8x128xf32>
    %95 = vector.extract_strided_slice %91 {offsets = [0, 384], sizes = [8, 128], strides = [1, 1]} : vector<8x512xf32> to vector<8x128xf32>
    %96 = arith.mulf %93, %79 : vector<8x128xf32>
    %97 = arith.mulf %92, %94 : vector<8x128xf32>
    %98 = arith.addf %96, %97 : vector<8x128xf32>
    %99 = math.tanh %98 : vector<8x128xf32>
    %100 = arith.mulf %95, %99 : vector<8x128xf32>
    %c5_i32 = arith.constant 5 : i32
    %101 = arith.index_cast %c5_i32 : i32 to index
    %c0_31 = arith.constant 0 : index
    %c0_32 = arith.constant 0 : index
    %102 = vector.load %arg2[%101, %c0_31, %c0_32] : memref<8x8x512xf32, #tpu.memory_space<vmem>>, vector<1x8x512xf32>
    %103 = vector.shape_cast %102 : vector<1x8x512xf32> to vector<8x512xf32>
    %cst_33 = arith.constant dense<0.000000e+00> : vector<8x512xf32>
    %104 = tpu.matmul %100, %3, %cst_33 {dimension_numbers = #tpu.dot_dimension_numbers<[1], [0], [0], [1], [0, 0, 1, 1], [], []>} : vector<8x128xf32>, vector<128x512xf32>, vector<8x512xf32> -> vector<8x512xf32>
    %105 = arith.addf %103, %104 : vector<8x512xf32>
    %106 = math.tanh %105 : vector<8x512xf32>
    %cst_34 = arith.constant 5.000000e-01 : f32
    %107 = vector.broadcast %cst_34 : f32 to vector<8x512xf32>
    %108 = arith.mulf %106, %107 : vector<8x512xf32>
    %cst_35 = arith.constant 5.000000e-01 : f32
    %109 = vector.broadcast %cst_35 : f32 to vector<8x512xf32>
    %110 = arith.addf %108, %109 : vector<8x512xf32>
    %111 = vector.extract_strided_slice %110 {offsets = [0, 0], sizes = [8, 128], strides = [1, 1]} : vector<8x512xf32> to vector<8x128xf32>
    %112 = vector.extract_strided_slice %110 {offsets = [0, 128], sizes = [8, 128], strides = [1, 1]} : vector<8x512xf32> to vector<8x128xf32>
    %113 = vector.extract_strided_slice %106 {offsets = [0, 256], sizes = [8, 128], strides = [1, 1]} : vector<8x512xf32> to vector<8x128xf32>
    %114 = vector.extract_strided_slice %110 {offsets = [0, 384], sizes = [8, 128], strides = [1, 1]} : vector<8x512xf32> to vector<8x128xf32>
    %115 = arith.mulf %112, %98 : vector<8x128xf32>
    %116 = arith.mulf %111, %113 : vector<8x128xf32>
    %117 = arith.addf %115, %116 : vector<8x128xf32>
    %118 = math.tanh %117 : vector<8x128xf32>
    %119 = arith.mulf %114, %118 : vector<8x128xf32>
    %c6_i32 = arith.constant 6 : i32
    %120 = arith.index_cast %c6_i32 : i32 to index
    %c0_36 = arith.constant 0 : index
    %c0_37 = arith.constant 0 : index
    %121 = vector.load %arg2[%120, %c0_36, %c0_37] : memref<8x8x512xf32, #tpu.memory_space<vmem>>, vector<1x8x512xf32>
    %122 = vector.shape_cast %121 : vector<1x8x512xf32> to vector<8x512xf32>
    %cst_38 = arith.constant dense<0.000000e+00> : vector<8x512xf32>
    %123 = tpu.matmul %119, %3, %cst_38 {dimension_numbers = #tpu.dot_dimension_numbers<[1], [0], [0], [1], [0, 0, 1, 1], [], []>} : vector<8x128xf32>, vector<128x512xf32>, vector<8x512xf32> -> vector<8x512xf32>
    %124 = arith.addf %122, %123 : vector<8x512xf32>
    %125 = math.tanh %124 : vector<8x512xf32>
    %cst_39 = arith.constant 5.000000e-01 : f32
    %126 = vector.broadcast %cst_39 : f32 to vector<8x512xf32>
    %127 = arith.mulf %125, %126 : vector<8x512xf32>
    %cst_40 = arith.constant 5.000000e-01 : f32
    %128 = vector.broadcast %cst_40 : f32 to vector<8x512xf32>
    %129 = arith.addf %127, %128 : vector<8x512xf32>
    %130 = vector.extract_strided_slice %129 {offsets = [0, 0], sizes = [8, 128], strides = [1, 1]} : vector<8x512xf32> to vector<8x128xf32>
    %131 = vector.extract_strided_slice %129 {offsets = [0, 128], sizes = [8, 128], strides = [1, 1]} : vector<8x512xf32> to vector<8x128xf32>
    %132 = vector.extract_strided_slice %125 {offsets = [0, 256], sizes = [8, 128], strides = [1, 1]} : vector<8x512xf32> to vector<8x128xf32>
    %133 = vector.extract_strided_slice %129 {offsets = [0, 384], sizes = [8, 128], strides = [1, 1]} : vector<8x512xf32> to vector<8x128xf32>
    %134 = arith.mulf %131, %117 : vector<8x128xf32>
    %135 = arith.mulf %130, %132 : vector<8x128xf32>
    %136 = arith.addf %134, %135 : vector<8x128xf32>
    %137 = math.tanh %136 : vector<8x128xf32>
    %138 = arith.mulf %133, %137 : vector<8x128xf32>
    %c7_i32 = arith.constant 7 : i32
    %139 = arith.index_cast %c7_i32 : i32 to index
    %c0_41 = arith.constant 0 : index
    %c0_42 = arith.constant 0 : index
    %140 = vector.load %arg2[%139, %c0_41, %c0_42] : memref<8x8x512xf32, #tpu.memory_space<vmem>>, vector<1x8x512xf32>
    %141 = vector.shape_cast %140 : vector<1x8x512xf32> to vector<8x512xf32>
    %cst_43 = arith.constant dense<0.000000e+00> : vector<8x512xf32>
    %142 = tpu.matmul %138, %3, %cst_43 {dimension_numbers = #tpu.dot_dimension_numbers<[1], [0], [0], [1], [0, 0, 1, 1], [], []>} : vector<8x128xf32>, vector<128x512xf32>, vector<8x512xf32> -> vector<8x512xf32>
    %143 = arith.addf %141, %142 : vector<8x512xf32>
    %144 = math.tanh %143 : vector<8x512xf32>
    %cst_44 = arith.constant 5.000000e-01 : f32
    %145 = vector.broadcast %cst_44 : f32 to vector<8x512xf32>
    %146 = arith.mulf %144, %145 : vector<8x512xf32>
    %cst_45 = arith.constant 5.000000e-01 : f32
    %147 = vector.broadcast %cst_45 : f32 to vector<8x512xf32>
    %148 = arith.addf %146, %147 : vector<8x512xf32>
    %149 = vector.extract_strided_slice %148 {offsets = [0, 0], sizes = [8, 128], strides = [1, 1]} : vector<8x512xf32> to vector<8x128xf32>
    %150 = vector.extract_strided_slice %148 {offsets = [0, 128], sizes = [8, 128], strides = [1, 1]} : vector<8x512xf32> to vector<8x128xf32>
    %151 = vector.extract_strided_slice %144 {offsets = [0, 256], sizes = [8, 128], strides = [1, 1]} : vector<8x512xf32> to vector<8x128xf32>
    %152 = vector.extract_strided_slice %148 {offsets = [0, 384], sizes = [8, 128], strides = [1, 1]} : vector<8x512xf32> to vector<8x128xf32>
    %153 = arith.mulf %150, %136 : vector<8x128xf32>
    %154 = arith.mulf %149, %151 : vector<8x128xf32>
    %155 = arith.addf %153, %154 : vector<8x128xf32>
    %156 = math.tanh %155 : vector<8x128xf32>
    %157 = arith.mulf %152, %156 : vector<8x128xf32>
    %c8_i32 = arith.constant 8 : i32
    %c0_46 = arith.constant 0 : index
    %c0_47 = arith.constant 0 : index
    %158 = vector.load %arg5[%c0_46, %c0_47] : memref<8x128xf32, #tpu.memory_space<vmem>>, vector<8x128xf32>
    tpu.vector_store %arg5[%c0_46, %c0_47], %157 {strides = array<i32>} : memref<8x128xf32, #tpu.memory_space<vmem>>, vector<8x128xf32>,
    %c0_48 = arith.constant 0 : index
    %c0_49 = arith.constant 0 : index
    %159 = vector.load %arg6[%c0_48, %c0_49] : memref<8x128xf32, #tpu.memory_space<vmem>>, vector<8x128xf32>
    tpu.vector_store %arg6[%c0_48, %c0_49], %155 {strides = array<i32>} : memref<8x128xf32, #tpu.memory_space<vmem>>, vector<8x128xf32>,
    %c0_i32_50 = arith.constant 0 : i32
    %160 = arith.cmpi eq, %arg1, %c0_i32_50 : i32
    %161 = arith.extui %160 : i1 to i32
    %c0_i32_51 = arith.constant 0 : i32
    %162 = arith.cmpi ne, %161, %c0_i32_51 : i32
    scf.if %162 {
      %c0_52 = arith.constant 0 : index
      %c0_53 = arith.constant 0 : index
      %163 = vector.load %arg5[%c0_52, %c0_53] : memref<8x128xf32, #tpu.memory_space<vmem>>, vector<8x128xf32>
      %c0_54 = arith.constant 0 : index
      %c0_55 = arith.constant 0 : index
      %164 = vector.load %arg4[%c0_54, %c0_55] : memref<8x128xf32, #tpu.memory_space<vmem>>, vector<8x128xf32>
      tpu.vector_store %arg4[%c0_54, %c0_55], %163 {strides = array<i32>} : memref<8x128xf32, #tpu.memory_space<vmem>>, vector<8x128xf32>,
    } else {
    }
    return
  }
  func.func @transform_0(%arg0: i32, %arg1: i32) -> (i32, i32, i32) {
    %c0_i32 = arith.constant 0 : i32
    %c0_i32_0 = arith.constant 0 : i32
    return %arg1, %arg0, %c0_i32 : i32, i32, i32
  }
  func.func @transform_1(%arg0: i32, %arg1: i32) -> (i32, i32) {
    %c0_i32 = arith.constant 0 : i32
    %c0_i32_0 = arith.constant 0 : i32
    %c0_i32_1 = arith.constant 0 : i32
    return %c0_i32, %c0_i32_0 : i32, i32
  }
  func.func @transform_2(%arg0: i32, %arg1: i32) -> (i32, i32) {
    %c0_i32 = arith.constant 0 : i32
    %c0_i32_0 = arith.constant 0 : i32
    return %arg0, %c0_i32 : i32, i32
  }
}

</mosaic_0001>

<llo_original>
// kernel: tpu_custom_call.1
$region0: #{tpu_custom_call.1}
  #allocation0 [shape = 'u32[]', space=smem, size = 0x4, offset = 0x4, fixed_abs, tag = 'smem constant byte address 0x4 - core index']
  #allocation1 [shape = 'u32[144,128]{1,0:T(1,128)}', space=vmem, size = 0x12000, scoped, tag = 'internal scratch']
  #allocation2 [shape = 'f32[8,128]{1,0:T(8,128)}', space=vmem, size = 0x1000, scoped, tag = 'scratch operand']
  #allocation3 [shape = 'f32[8,128]{1,0:T(8,128)}', space=vmem, size = 0x1000, scoped, tag = 'scratch operand']
  %s0 = inlined_call_operand.hbm [shape: f32[8,8,512], index: 0, kind: input, shape index: {}]
  %s1 = inlined_call_operand.hbm [shape: f32[128,512], index: 1, kind: input, shape index: {}]
  %s2 = inlined_call_operand.hbm [shape: f32[8,128], index: 2, kind: output, shape index: {}]
  %s3 = sld [smem:[#allocation0]]
  $region34: #{tpu_custom_call.1} parent=0
    _
  %s5 = ssub.s32 1, %s3
  %s6 = scalar_select 0, %s5, %s3
  $region1: #{tpu_custom_call.1} parent=0
    #allocation4 [shape = 'u8[131072]{0}', space=vmem, size = 0x20000, scoped, tag = 'input window, operand 0, single buffered']
    #allocation5 [shape = 's32[1]{0}', space=sflag, size = 0x4, scoped, tag = 'scoped memory for tpu_custom_call.1']
    #allocation6 [shape = 's32[1]{0}', space=sflag, size = 0x4, scoped, tag = 'scoped memory for tpu_custom_call.1']
    #allocation7 [shape = 'u8[262144]{0}', space=vmem, size = 0x40000, scoped, tag = 'input window, operand 1, single buffered']
    #allocation8 [shape = 's32[1]{0}', space=sflag, size = 0x4, scoped, tag = 'scoped memory for tpu_custom_call.1']
    #allocation9 [shape = 'u8[4096]{0}', space=vmem, size = 0x1000, scoped, tag = 'output window, operand 0, single buffered']
    %7 = vsyncpa [#allocation5], 0
    %8 = vsyncpa [#allocation8], 0
    %9 = vsyncpa [#allocation6], 0
    // Predicated region
    $region2: #{tpu_custom_call.1} parent=1 // pred_check
      _
    $region3: #{tpu_custom_call.1} parent=1 // pred_check_branch
      %11 = sbr.rel (0) target = $region5
    $region4: #{tpu_custom_call.1} parent=1 // pred_region
      %s13 = ssub.s32 4096, 4096
      %14 = vsyncadd [#allocation5], %s13
      %s15 = sshll.u32 [#allocation4], 4
      %s16 = int_to_ptr.vmem [resolvable:$true] %s15
      %21 = dma.hbm_to_vmem [thread:$0]  %s0, 4096, %s16, [#allocation5], 512, 512, 32
    $region5: #{tpu_custom_call.1} parent=1 // pred_fallthru
      _
    // Predicated region
    $region6: #{tpu_custom_call.1} parent=1 // pred_check
      _
    $region7: #{tpu_custom_call.1} parent=1 // pred_check_branch
      %23 = sbr.rel (0) target = $region9
    $region8: #{tpu_custom_call.1} parent=1 // pred_region
      %s25 = ssub.s32 8192, 8192
      %26 = vsyncadd [#allocation8], %s25
      %s27 = sshll.u32 [#allocation7], 4
      %s28 = int_to_ptr.vmem [resolvable:$true] %s27
      %33 = dma.hbm_to_vmem [thread:$0]  %s1, 8192, %s28, [#allocation8], 512, 512, 32
    $region9: #{tpu_custom_call.1} parent=1 // pred_fallthru
      _
    // Predicated region
    $region10: #{tpu_custom_call.1} parent=1 // pred_check
      _
    $region11: #{tpu_custom_call.1} parent=1 // pred_check_branch
      %35 = sbr.rel (0) target = $region13
    $region12: #{tpu_custom_call.1} parent=1 // pred_region
      %36 = dma.done [#allocation5], 4096
    $region13: #{tpu_custom_call.1} parent=1 // pred_fallthru
      _
    // Predicated region
    $region14: #{tpu_custom_call.1} parent=1 // pred_check
      _
    $region15: #{tpu_custom_call.1} parent=1 // pred_check_branch
      %38 = sbr.rel (0) target = $region17
    $region16: #{tpu_custom_call.1} parent=1 // pred_region
      %39 = dma.done [#allocation8], 8192
    $region17: #{tpu_custom_call.1} parent=1 // pred_fallthru
      _
    %p40 = scmp.eq.s32.totalorder 0, 0
    // Predicated region
    $region18: #{tpu_custom_call.1} parent=1 // pred_check
      %p41 = pneg %p40
    $region19: #{tpu_custom_call.1} parent=1 // pred_check_branch
      %43 = sbr.rel (%p41) target = $region21
    $region20: #{tpu_custom_call.1} parent=1 // pred_region
      %44 = vst [vmem:[#allocation2] sm:$0xff] 0.0
      %45 = vst [vmem:[#allocation3] sm:$0xff] 0.0
    $region21: #{tpu_custom_call.1} parent=1 // pred_fallthru
      _
    %v46 = vld [vmem:[#allocation7] sm:$0xff]
    %v47 = vld [vmem:[#allocation7 + $0x8] sm:$0xff]
    %v48 = vld [vmem:[#allocation7 + $0x10] sm:$0xff]
    %v49 = vld [vmem:[#allocation7 + $0x18] sm:$0xff]
    %v50 = vld [vmem:[#allocation7 + $0x20] sm:$0xff]
    %v51 = vld [vmem:[#allocation7 + $0x28] sm:$0xff]
    %v52 = vld [vmem:[#allocation7 + $0x30] sm:$0xff]
    %v53 = vld [vmem:[#allocation7 + $0x38] sm:$0xff]
    %v54 = vld [vmem:[#allocation7 + $0x40] sm:$0xff]
    %v55 = vld [vmem:[#allocation7 + $0x48] sm:$0xff]
    %v56 = vld [vmem:[#allocation7 + $0x50] sm:$0xff]
    %v57 = vld [vmem:[#allocation7 + $0x58] sm:$0xff]
    %v58 = vld [vmem:[#allocation7 + $0x60] sm:$0xff]
    %v59 = vld [vmem:[#allocation7 + $0x68] sm:$0xff]
    %v60 = vld [vmem:[#allocation7 + $0x70] sm:$0xff]
    %v61 = vld [vmem:[#allocation7 + $0x78] sm:$0xff]
    %v62 = vld [vmem:[#allocation7 + $0x80] sm:$0xff]
    %v63 = vld [vmem:[#allocation7 + $0x88] sm:$0xff]
    %v64 = vld [vmem:[#allocation7 + $0x90] sm:$0xff]
    %v65 = vld [vmem:[#allocation7 + $0x98] sm:$0xff]
    %v66 = vld [vmem:[#allocation7 + $0xa0] sm:$0xff]
    %v67 = vld [vmem:[#allocation7 + $0xa8] sm:$0xff]
    %v68 = vld [vmem:[#allocation7 + $0xb0] sm:$0xff]
    %v69 = vld [vmem:[#allocation7 + $0xb8] sm:$0xff]
    %v70 = vld [vmem:[#allocation7 + $0xc0] sm:$0xff]
    %v71 = vld [vmem:[#allocation7 + $0xc8] sm:$0xff]
    %v72 = vld [vmem:[#allocation7 + $0xd0] sm:$0xff]
    %v73 = vld [vmem:[#allocation7 + $0xd8] sm:$0xff]
    %v74 = vld [vmem:[#allocation7 + $0xe0] sm:$0xff]
    %v75 = vld [vmem:[#allocation7 + $0xe8] sm:$0xff]
    %v76 = vld [vmem:[#allocation7 + $0xf0] sm:$0xff]
    %v77 = vld [vmem:[#allocation7 + $0xf8] sm:$0xff]
    %v78 = vld [vmem:[#allocation7 + $0x100] sm:$0xff]
    %v79 = vld [vmem:[#allocation7 + $0x108] sm:$0xff]
    %v80 = vld [vmem:[#allocation7 + $0x110] sm:$0xff]
    %v81 = vld [vmem:[#allocation7 + $0x118] sm:$0xff]
    %v82 = vld [vmem:[#allocation7 + $0x120] sm:$0xff]
    %v83 = vld [vmem:[#allocation7 + $0x128] sm:$0xff]
    %v84 = vld [vmem:[#allocation7 + $0x130] sm:$0xff]
    %v85 = vld [vmem:[#allocation7 + $0x138] sm:$0xff]
    %v86 = vld [vmem:[#allocation7 + $0x140] sm:$0xff]
    %v87 = vld [vmem:[#allocation7 + $0x148] sm:$0xff]
    %v88 = vld [vmem:[#allocation7 + $0x150] sm:$0xff]
    %v89 = vld [vmem:[#allocation7 + $0x158] sm:$0xff]
    %v90 = vld [vmem:[#allocation7 + $0x160] sm:$0xff]
    %v91 = vld [vmem:[#allocation7 + $0x168] sm:$0xff]
    %v92 = vld [vmem:[#allocation7 + $0x170] sm:$0xff]
    %v93 = vld [vmem:[#allocation7 + $0x178] sm:$0xff]
    %v94 = vld [vmem:[#allocation7 + $0x180] sm:$0xff]
    %v95 = vld [vmem:[#allocation7 + $0x188] sm:$0xff]
    %v96 = vld [vmem:[#allocation7 + $0x190] sm:$0xff]
    %v97 = vld [vmem:[#allocation7 + $0x198] sm:$0xff]
    %v98 = vld [vmem:[#allocation7 + $0x1a0] sm:$0xff]
    %v99 = vld [vmem:[#allocation7 + $0x1a8] sm:$0xff]
    %v100 = vld [vmem:[#allocation7 + $0x1b0] sm:$0xff]
    %v101 = vld [vmem:[#allocation7 + $0x1b8] sm:$0xff]
    %v102 = vld [vmem:[#allocation7 + $0x1c0] sm:$0xff]
    %v103 = vld [vmem:[#allocation7 + $0x1c8] sm:$0xff]
    %v104 = vld [vmem:[#allocation7 + $0x1d0] sm:$0xff]
    %v105 = vld [vmem:[#allocation7 + $0x1d8] sm:$0xff]
    %v106 = vld [vmem:[#allocation7 + $0x1e0] sm:$0xff]
    %v107 = vld [vmem:[#allocation7 + $0x1e8] sm:$0xff]
    %v108 = vld [vmem:[#allocation7 + $0x1f0] sm:$0xff]
    %v109 = vld [vmem:[#allocation7 + $0x1f8] sm:$0xff]
    %v110 = vld [vmem:[#allocation2] sm:$0xff]
    %v111 = vld [vmem:[#allocation3] sm:$0xff]
    %v112 = vld [vmem:[#allocation4] sm:$0xff]
    %v113 = vld [vmem:[#allocation4 + $0x8] sm:$0xff]
    %v114 = vld [vmem:[#allocation4 + $0x10] sm:$0xff]
    %v115 = vld [vmem:[#allocation4 + $0x18] sm:$0xff]
    %116 = vmatprep.subr.mxu0 %v47
    %117 = vmatpush1.msra.mxu0 %v46
    %118 = vmatprep.subr.mxu0 %v51
    %119 = vmatpush1.msra.mxu0 %v50
    %120 = vmatprep.subr.mxu0 %v55
    %121 = vmatpush1.msra.mxu0 %v54
    %122 = vmatprep.subr.mxu0 %v59
    %123 = vmatpush1.msra.mxu0 %v58
    %124 = vmatprep.subr.mxu0 %v63
    %125 = vmatpush1.msra.mxu0 %v62
    %126 = vmatprep.subr.mxu0 %v67
    %127 = vmatpush1.msra.mxu0 %v66
    %128 = vmatprep.subr.mxu0 %v71
    %129 = vmatpush1.msra.mxu0 %v70
    %130 = vmatprep.subr.mxu0 %v75
    %131 = vmatpush1.msra.mxu0 %v74
    %132 = vmatprep.subr.mxu0 %v79
    %133 = vmatpush1.msra.mxu0 %v78
    %134 = vmatprep.subr.mxu0 %v83
    %135 = vmatpush1.msra.mxu0 %v82
    %136 = vmatprep.subr.mxu0 %v87
    %137 = vmatpush1.msra.mxu0 %v86
    %138 = vmatprep.subr.mxu0 %v91
    %139 = vmatpush1.msra.mxu0 %v90
    %140 = vmatprep.subr.mxu0 %v95
    %141 = vmatpush1.msra.mxu0 %v94
    %142 = vmatprep.subr.mxu0 %v99
    %143 = vmatpush1.msra.mxu0 %v98
    %144 = vmatprep.subr.mxu0 %v103
    %145 = vmatpush1.msra.mxu0 %v102
    %146 = vmatprep.subr.mxu0 %v107
    %147 = vmatpush1.msra.mxu0 %v106
    %148 = vmatprep.subr.mxu0 0.0
    %149 = vmatpush1.msra.mxu0 0.0
    %150 = vmatprep.subr.mxu0 0.0
    %151 = vmatpush1.msra.mxu0 0.0
    %152 = vmatprep.subr.mxu0 0.0
    %153 = vmatpush1.msra.mxu0 0.0
    %154 = vmatprep.subr.mxu0 0.0
    %155 = vmatpush1.msra.mxu0 0.0
    %156 = vmatprep.subr.mxu0 0.0
    %157 = vmatpush1.msra.mxu0 0.0
    %158 = vmatprep.subr.mxu0 0.0
    %159 = vmatpush1.msra.mxu0 0.0
    %160 = vmatprep.subr.mxu0 0.0
    %161 = vmatpush1.msra.mxu0 0.0
    %162 = vmatprep.subr.mxu0 0.0
    %163 = vmatpush1.msra.mxu0 0.0
    %164 = vmatprep.subr.mxu0 0.0
    %165 = vmatpush1.msra.mxu0 0.0
    %166 = vmatprep.subr.mxu0 0.0
    %167 = vmatpush1.msra.mxu0 0.0
    %168 = vmatprep.subr.mxu0 0.0
    %169 = vmatpush1.msra.mxu0 0.0
    %170 = vmatprep.subr.mxu0 0.0
    %171 = vmatpush1.msra.mxu0 0.0
    %172 = vmatprep.subr.mxu0 0.0
    %173 = vmatpush1.msra.mxu0 0.0
    %174 = vmatprep.subr.mxu0 0.0
    %175 = vmatpush1.msra.mxu0 0.0
    %176 = vmatprep.subr.mxu0 0.0
    %177 = vmatpush1.msra.mxu0 0.0
    %178 = vmatprep.subr.mxu0 0.0
    %179 = vmatpush1.msra.mxu0 0.0
    %180 = vmatprep.mubr.f32.mxu0 0.0
    %181 = vmatmul.mubr.f32.gmra.mrb[0].mxu0 %v110
    %v182 = vpop.f32.mrb[0].mxu0
    %v183 = vadd.f32 0.0, %v182
    %v184 = vpop.f32.mrb[0].mxu0
    %v185 = vadd.f32 0.0, %v184
    %186 = vdwg.mxu0
    %187 = vmatprep.subr.mxu0 %v49
    %188 = vmatpush1.msra.mxu0 %v48
    %189 = vmatprep.subr.mxu0 %v53
    %190 = vmatpush1.msra.mxu0 %v52
    %191 = vmatprep.subr.mxu0 %v57
    %192 = vmatpush1.msra.mxu0 %v56
    %193 = vmatprep.subr.mxu0 %v61
    %194 = vmatpush1.msra.mxu0 %v60
    %195 = vmatprep.subr.mxu0 %v65
    %196 = vmatpush1.msra.mxu0 %v64
    %197 = vmatprep.subr.mxu0 %v69
    %198 = vmatpush1.msra.mxu0 %v68
    %199 = vmatprep.subr.mxu0 %v73
    %200 = vmatpush1.msra.mxu0 %v72
    %201 = vmatprep.subr.mxu0 %v77
    %202 = vmatpush1.msra.mxu0 %v76
    %203 = vmatprep.subr.mxu0 %v81
    %204 = vmatpush1.msra.mxu0 %v80
    %205 = vmatprep.subr.mxu0 %v85
    %206 = vmatpush1.msra.mxu0 %v84
    %207 = vmatprep.subr.mxu0 %v89
    %208 = vmatpush1.msra.mxu0 %v88
    %209 = vmatprep.subr.mxu0 %v93
    %210 = vmatpush1.msra.mxu0 %v92
    %211 = vmatprep.subr.mxu0 %v97
    %212 = vmatpush1.msra.mxu0 %v96
    %213 = vmatprep.subr.mxu0 %v101
    %214 = vmatpush1.msra.mxu0 %v100
    %215 = vmatprep.subr.mxu0 %v105
    %216 = vmatpush1.msra.mxu0 %v104
    %217 = vmatprep.subr.mxu0 %v109
    %218 = vmatpush1.msra.mxu0 %v108
    %219 = vmatprep.subr.mxu0 0.0
    %220 = vmatpush1.msra.mxu0 0.0
    %221 = vmatprep.subr.mxu0 0.0
    %222 = vmatpush1.msra.mxu0 0.0
    %223 = vmatprep.subr.mxu0 0.0
    %224 = vmatpush1.msra.mxu0 0.0
    %225 = vmatprep.subr.mxu0 0.0
    %226 = vmatpush1.msra.mxu0 0.0
    %227 = vmatprep.subr.mxu0 0.0
    %228 = vmatpush1.msra.mxu0 0.0
    %229 = vmatprep.subr.mxu0 0.0
    %230 = vmatpush1.msra.mxu0 0.0
    %231 = vmatprep.subr.mxu0 0.0
    %232 = vmatpush1.msra.mxu0 0.0
    %233 = vmatprep.subr.mxu0 0.0
    %234 = vmatpush1.msra.mxu0 0.0
    %235 = vmatprep.subr.mxu0 0.0
    %236 = vmatpush1.msra.mxu0 0.0
    %237 = vmatprep.subr.mxu0 0.0
    %238 = vmatpush1.msra.mxu0 0.0
    %239 = vmatprep.subr.mxu0 0.0
    %240 = vmatpush1.msra.mxu0 0.0
    %241 = vmatprep.subr.mxu0 0.0
    %242 = vmatpush1.msra.mxu0 0.0
    %243 = vmatprep.subr.mxu0 0.0
    %244 = vmatpush1.msra.mxu0 0.0
    %245 = vmatprep.subr.mxu0 0.0
    %246 = vmatpush1.msra.mxu0 0.0
    %247 = vmatprep.subr.mxu0 0.0
    %248 = vmatpush1.msra.mxu0 0.0
    %249 = vmatprep.subr.mxu0 0.0
    %250 = vmatpush1.msra.mxu0 0.0
    %251 = vmatprep.mubr.f32.mxu0 0.0
    %252 = vmatmul.mubr.f32.gmra.mrb[0].mxu0 %v110
    %v253 = vpop.f32.mrb[0].mxu0
    %v254 = vadd.f32 0.0, %v253
    %v255 = vpop.f32.mrb[0].mxu0
    %v256 = vadd.f32 0.0, %v255
    %257 = vdwg.mxu0
    %v258 = vadd.f32 %v112, %v183
    %v259 = vadd.f32 %v113, %v185
    %v260 = vadd.f32 %v114, %v254
    %v261 = vadd.f32 %v115, %v256
    %v262 = vtanh.pop %v258
    %v263 = vtanh.pop %v259
    %v264 = vtanh.pop %v260
    %v265 = vtanh.pop %v261
    %v266 = vmul.f32 %v262, 0.5
    %v267 = vmul.f32 %v263, 0.5
    %v268 = vmul.f32 %v265, 0.5
    %v269 = vadd.f32 %v266, 0.5
    %v270 = vadd.f32 %v267, 0.5
    %v271 = vadd.f32 %v268, 0.5
    %v272 = vmul.f32 %v270, %v111
    %v273 = vmul.f32 %v269, %v264
    %v274 = vadd.f32 %v272, %v273
    %v275 = vtanh.pop %v274
    %v276 = vmul.f32 %v271, %v275
    %s277 = scalar_lea.vmem [#allocation4], 32
    %v278 = vld [vmem:[%s277] sm:$0xff]
    %v279 = vld [vmem:[%s277 + $0x8] sm:$0xff]
    %v280 = vld [vmem:[%s277 + $0x10] sm:$0xff]
    %v281 = vld [vmem:[%s277 + $0x18] sm:$0xff]
    %282 = vmatprep.subr.mxu0 %v47
    %283 = vmatpush1.msra.mxu0 %v46
    %284 = vmatprep.subr.mxu0 %v51
    %285 = vmatpush1.msra.mxu0 %v50
    %286 = vmatprep.subr.mxu0 %v55
    %287 = vmatpush1.msra.mxu0 %v54
    %288 = vmatprep.subr.mxu0 %v59
    %289 = vmatpush1.msra.mxu0 %v58
    %290 = vmatprep.subr.mxu0 %v63
    %291 = vmatpush1.msra.mxu0 %v62
    %292 = vmatprep.subr.mxu0 %v67
    %293 = vmatpush1.msra.mxu0 %v66
    %294 = vmatprep.subr.mxu0 %v71
    %295 = vmatpush1.msra.mxu0 %v70
    %296 = vmatprep.subr.mxu0 %v75
    %297 = vmatpush1.msra.mxu0 %v74
    %298 = vmatprep.subr.mxu0 %v79
    %299 = vmatpush1.msra.mxu0 %v78
    %300 = vmatprep.subr.mxu0 %v83
    %301 = vmatpush1.msra.mxu0 %v82
    %302 = vmatprep.subr.mxu0 %v87
    %303 = vmatpush1.msra.mxu0 %v86
    %304 = vmatprep.subr.mxu0 %v91
    %305 = vmatpush1.msra.mxu0 %v90
    %306 = vmatprep.subr.mxu0 %v95
    %307 = vmatpush1.msra.mxu0 %v94
    %308 = vmatprep.subr.mxu0 %v99
    %309 = vmatpush1.msra.mxu0 %v98
    %310 = vmatprep.subr.mxu0 %v103
    %311 = vmatpush1.msra.mxu0 %v102
    %312 = vmatprep.subr.mxu0 %v107
    %313 = vmatpush1.msra.mxu0 %v106
    %314 = vmatprep.subr.mxu0 0.0
    %315 = vmatpush1.msra.mxu0 0.0
    %316 = vmatprep.subr.mxu0 0.0
    %317 = vmatpush1.msra.mxu0 0.0
    %318 = vmatprep.subr.mxu0 0.0
    %319 = vmatpush1.msra.mxu0 0.0
    %320 = vmatprep.subr.mxu0 0.0
    %321 = vmatpush1.msra.mxu0 0.0
    %322 = vmatprep.subr.mxu0 0.0
    %323 = vmatpush1.msra.mxu0 0.0
    %324 = vmatprep.subr.mxu0 0.0
    %325 = vmatpush1.msra.mxu0 0.0
    %326 = vmatprep.subr.mxu0 0.0
    %327 = vmatpush1.msra.mxu0 0.0
    %328 = vmatprep.subr.mxu0 0.0
    %329 = vmatpush1.msra.mxu0 0.0
    %330 = vmatprep.subr.mxu0 0.0
    %331 = vmatpush1.msra.mxu0 0.0
    %332 = vmatprep.subr.mxu0 0.0
    %333 = vmatpush1.msra.mxu0 0.0
    %334 = vmatprep.subr.mxu0 0.0
    %335 = vmatpush1.msra.mxu0 0.0
    %336 = vmatprep.subr.mxu0 0.0
    %337 = vmatpush1.msra.mxu0 0.0
    %338 = vmatprep.subr.mxu0 0.0
    %339 = vmatpush1.msra.mxu0 0.0
    %340 = vmatprep.subr.mxu0 0.0
    %341 = vmatpush1.msra.mxu0 0.0
    %342 = vmatprep.subr.mxu0 0.0
    %343 = vmatpush1.msra.mxu0 0.0
    %344 = vmatprep.subr.mxu0 0.0
    %345 = vmatpush1.msra.mxu0 0.0
    %346 = vmatprep.mubr.f32.mxu0 0.0
    %347 = vmatmul.mubr.f32.gmra.mrb[0].mxu0 %v276
    %v348 = vpop.f32.mrb[0].mxu0
    %v349 = vadd.f32 0.0, %v348
    %v350 = vpop.f32.mrb[0].mxu0
    %v351 = vadd.f32 0.0, %v350
    %352 = vdwg.mxu0
    %353 = vmatprep.subr.mxu0 %v49
    %354 = vmatpush1.msra.mxu0 %v48
    %355 = vmatprep.subr.mxu0 %v53
    %356 = vmatpush1.msra.mxu0 %v52
    %357 = vmatprep.subr.mxu0 %v57
    %358 = vmatpush1.msra.mxu0 %v56
    %359 = vmatprep.subr.mxu0 %v61
    %360 = vmatpush1.msra.mxu0 %v60
    %361 = vmatprep.subr.mxu0 %v65
    %362 = vmatpush1.msra.mxu0 %v64
    %363 = vmatprep.subr.mxu0 %v69
    %364 = vmatpush1.msra.mxu0 %v68
    %365 = vmatprep.subr.mxu0 %v73
    %366 = vmatpush1.msra.mxu0 %v72
    %367 = vmatprep.subr.mxu0 %v77
    %368 = vmatpush1.msra.mxu0 %v76
    %369 = vmatprep.subr.mxu0 %v81
    %370 = vmatpush1.msra.mxu0 %v80
    %371 = vmatprep.subr.mxu0 %v85
    %372 = vmatpush1.msra.mxu0 %v84
    %373 = vmatprep.subr.mxu0 %v89
    %374 = vmatpush1.msra.mxu0 %v88
    %375 = vmatprep.subr.mxu0 %v93
    %376 = vmatpush1.msra.mxu0 %v92
    %377 = vmatprep.subr.mxu0 %v97
    %378 = vmatpush1.msra.mxu0 %v96
    %379 = vmatprep.subr.mxu0 %v101
    %380 = vmatpush1.msra.mxu0 %v100
    %381 = vmatprep.subr.mxu0 %v105
    %382 = vmatpush1.msra.mxu0 %v104
    %383 = vmatprep.subr.mxu0 %v109
    %384 = vmatpush1.msra.mxu0 %v108
    %385 = vmatprep.subr.mxu0 0.0
    %386 = vmatpush1.msra.mxu0 0.0
    %387 = vmatprep.subr.mxu0 0.0
    %388 = vmatpush1.msra.mxu0 0.0
    %389 = vmatprep.subr.mxu0 0.0
    %390 = vmatpush1.msra.mxu0 0.0
    %391 = vmatprep.subr.mxu0 0.0
    %392 = vmatpush1.msra.mxu0 0.0
    %393 = vmatprep.subr.mxu0 0.0
    %394 = vmatpush1.msra.mxu0 0.0
    %395 = vmatprep.subr.mxu0 0.0
    %396 = vmatpush1.msra.mxu0 0.0
    %397 = vmatprep.subr.mxu0 0.0
    %398 = vmatpush1.msra.mxu0 0.0
    %399 = vmatprep.subr.mxu0 0.0
    %400 = vmatpush1.msra.mxu0 0.0
    %401 = vmatprep.subr.mxu0 0.0
    %402 = vmatpush1.msra.mxu0 0.0
    %403 = vmatprep.subr.mxu0 0.0
    %404 = vmatpush1.msra.mxu0 0.0
    %405 = vmatprep.subr.mxu0 0.0
    %406 = vmatpush1.msra.mxu0 0.0
    %407 = vmatprep.subr.mxu0 0.0
    %408 = vmatpush1.msra.mxu0 0.0
    %409 = vmatprep.subr.mxu0 0.0
    %410 = vmatpush1.msra.mxu0 0.0
    %411 = vmatprep.subr.mxu0 0.0
    %412 = vmatpush1.msra.mxu0 0.0
    %413 = vmatprep.subr.mxu0 0.0
    %414 = vmatpush1.msra.mxu0 0.0
    %415 = vmatprep.subr.mxu0 0.0
    %416 = vmatpush1.msra.mxu0 0.0
    %417 = vmatprep.mubr.f32.mxu0 0.0
    %418 = vmatmul.mubr.f32.gmra.mrb[0].mxu0 %v276
    %v419 = vpop.f32.mrb[0].mxu0
    %v420 = vadd.f32 0.0, %v419
    %v421 = vpop.f32.mrb[0].mxu0
    %v422 = vadd.f32 0.0, %v421
    %423 = vdwg.mxu0
    %v424 = vadd.f32 %v278, %v349
    %v425 = vadd.f32 %v279, %v351
    %v426 = vadd.f32 %v280, %v420
    %v427 = vadd.f32 %v281, %v422
    %v428 = vtanh.pop %v424
    %v429 = vtanh.pop %v425
    %v430 = vtanh.pop %v426
    %v431 = vtanh.pop %v427
    %v432 = vmul.f32 %v428, 0.5
    %v433 = vmul.f32 %v429, 0.5
    %v434 = vmul.f32 %v431, 0.5
    %v435 = vadd.f32 %v432, 0.5
    %v436 = vadd.f32 %v433, 0.5
    %v437 = vadd.f32 %v434, 0.5
    %v438 = vmul.f32 %v436, %v274
    %v439 = vmul.f32 %v435, %v430
    %v440 = vadd.f32 %v438, %v439
    %v441 = vtanh.pop %v440
    %v442 = vmul.f32 %v437, %v441
    %s443 = scalar_lea.vmem [#allocation4], 64
    %v444 = vld [vmem:[%s443] sm:$0xff]
    %v445 = vld [vmem:[%s443 + $0x8] sm:$0xff]
    %v446 = vld [vmem:[%s443 + $0x10] sm:$0xff]
    %v447 = vld [vmem:[%s443 + $0x18] sm:$0xff]
    %448 = vmatprep.subr.mxu0 %v47
    %449 = vmatpush1.msra.mxu0 %v46
    %450 = vmatprep.subr.mxu0 %v51
    %451 = vmatpush1.msra.mxu0 %v50
    %452 = vmatprep.subr.mxu0 %v55
    %453 = vmatpush1.msra.mxu0 %v54
    %454 = vmatprep.subr.mxu0 %v59
    %455 = vmatpush1.msra.mxu0 %v58
    %456 = vmatprep.subr.mxu0 %v63
    %457 = vmatpush1.msra.mxu0 %v62
    %458 = vmatprep.subr.mxu0 %v67
    %459 = vmatpush1.msra.mxu0 %v66
    %460 = vmatprep.subr.mxu0 %v71
    %461 = vmatpush1.msra.mxu0 %v70
    %462 = vmatprep.subr.mxu0 %v75
    %463 = vmatpush1.msra.mxu0 %v74
    %464 = vmatprep.subr.mxu0 %v79
    %465 = vmatpush1.msra.mxu0 %v78
    %466 = vmatprep.subr.mxu0 %v83
    %467 = vmatpush1.msra.mxu0 %v82
    %468 = vmatprep.subr.mxu0 %v87
    %469 = vmatpush1.msra.mxu0 %v86
    %470 = vmatprep.subr.mxu0 %v91
    %471 = vmatpush1.msra.mxu0 %v90
    %472 = vmatprep.subr.mxu0 %v95
    %473 = vmatpush1.msra.mxu0 %v94
    %474 = vmatprep.subr.mxu0 %v99
    %475 = vmatpush1.msra.mxu0 %v98
    %476 = vmatprep.subr.mxu0 %v103
    %477 = vmatpush1.msra.mxu0 %v102
    %478 = vmatprep.subr.mxu0 %v107
    %479 = vmatpush1.msra.mxu0 %v106
    %480 = vmatprep.subr.mxu0 0.0
    %481 = vmatpush1.msra.mxu0 0.0
    %482 = vmatprep.subr.mxu0 0.0
    %483 = vmatpush1.msra.mxu0 0.0
    %484 = vmatprep.subr.mxu0 0.0
    %485 = vmatpush1.msra.mxu0 0.0
    %486 = vmatprep.subr.mxu0 0.0
    %487 = vmatpush1.msra.mxu0 0.0
    %488 = vmatprep.subr.mxu0 0.0
    %489 = vmatpush1.msra.mxu0 0.0
    %490 = vmatprep.subr.mxu0 0.0
    %491 = vmatpush1.msra.mxu0 0.0
    %492 = vmatprep.subr.mxu0 0.0
    %493 = vmatpush1.msra.mxu0 0.0
    %494 = vmatprep.subr.mxu0 0.0
    %495 = vmatpush1.msra.mxu0 0.0
    %496 = vmatprep.subr.mxu0 0.0
    %497 = vmatpush1.msra.mxu0 0.0
    %498 = vmatprep.subr.mxu0 0.0
    %499 = vmatpush1.msra.mxu0 0.0
    %500 = vmatprep.subr.mxu0 0.0
    %501 = vmatpush1.msra.mxu0 0.0
    %502 = vmatprep.subr.mxu0 0.0
    %503 = vmatpush1.msra.mxu0 0.0
    %504 = vmatprep.subr.mxu0 0.0
    %505 = vmatpush1.msra.mxu0 0.0
    %506 = vmatprep.subr.mxu0 0.0
    %507 = vmatpush1.msra.mxu0 0.0
    %508 = vmatprep.subr.mxu0 0.0
    %509 = vmatpush1.msra.mxu0 0.0
    %510 = vmatprep.subr.mxu0 0.0
    %511 = vmatpush1.msra.mxu0 0.0
    %512 = vmatprep.mubr.f32.mxu0 0.0
    %513 = vmatmul.mubr.f32.gmra.mrb[0].mxu0 %v442
    %v514 = vpop.f32.mrb[0].mxu0
    %v515 = vadd.f32 0.0, %v514
    %v516 = vpop.f32.mrb[0].mxu0
    %v517 = vadd.f32 0.0, %v516
    %518 = vdwg.mxu0
    %519 = vmatprep.subr.mxu0 %v49
    %520 = vmatpush1.msra.mxu0 %v48
    %521 = vmatprep.subr.mxu0 %v53
    %522 = vmatpush1.msra.mxu0 %v52
    %523 = vmatprep.subr.mxu0 %v57
    %524 = vmatpush1.msra.mxu0 %v56
    %525 = vmatprep.subr.mxu0 %v61
    %526 = vmatpush1.msra.mxu0 %v60
    %527 = vmatprep.subr.mxu0 %v65
    %528 = vmatpush1.msra.mxu0 %v64
    %529 = vmatprep.subr.mxu0 %v69
    %530 = vmatpush1.msra.mxu0 %v68
    %531 = vmatprep.subr.mxu0 %v73
    %532 = vmatpush1.msra.mxu0 %v72
    %533 = vmatprep.subr.mxu0 %v77
    %534 = vmatpush1.msra.mxu0 %v76
    %535 = vmatprep.subr.mxu0 %v81
    %536 = vmatpush1.msra.mxu0 %v80
    %537 = vmatprep.subr.mxu0 %v85
    %538 = vmatpush1.msra.mxu0 %v84
    %539 = vmatprep.subr.mxu0 %v89
    %540 = vmatpush1.msra.mxu0 %v88
    %541 = vmatprep.subr.mxu0 %v93
    %542 = vmatpush1.msra.mxu0 %v92
    %543 = vmatprep.subr.mxu0 %v97
    %544 = vmatpush1.msra.mxu0 %v96
    %545 = vmatprep.subr.mxu0 %v101
    %546 = vmatpush1.msra.mxu0 %v100
    %547 = vmatprep.subr.mxu0 %v105
    %548 = vmatpush1.msra.mxu0 %v104
    %549 = vmatprep.subr.mxu0 %v109
    %550 = vmatpush1.msra.mxu0 %v108
    %551 = vmatprep.subr.mxu0 0.0
    %552 = vmatpush1.msra.mxu0 0.0
    %553 = vmatprep.subr.mxu0 0.0
    %554 = vmatpush1.msra.mxu0 0.0
    %555 = vmatprep.subr.mxu0 0.0
    %556 = vmatpush1.msra.mxu0 0.0
    %557 = vmatprep.subr.mxu0 0.0
    %558 = vmatpush1.msra.mxu0 0.0
    %559 = vmatprep.subr.mxu0 0.0
    %560 = vmatpush1.msra.mxu0 0.0
    %561 = vmatprep.subr.mxu0 0.0
    %562 = vmatpush1.msra.mxu0 0.0
    %563 = vmatprep.subr.mxu0 0.0
    %564 = vmatpush1.msra.mxu0 0.0
    %565 = vmatprep.subr.mxu0 0.0
    %566 = vmatpush1.msra.mxu0 0.0
    %567 = vmatprep.subr.mxu0 0.0
    %568 = vmatpush1.msra.mxu0 0.0
    %569 = vmatprep.subr.mxu0 0.0
    %570 = vmatpush1.msra.mxu0 0.0
    %571 = vmatprep.subr.mxu0 0.0
    %572 = vmatpush1.msra.mxu0 0.0
    %573 = vmatprep.subr.mxu0 0.0
    %574 = vmatpush1.msra.mxu0 0.0
    %575 = vmatprep.subr.mxu0 0.0
    %576 = vmatpush1.msra.mxu0 0.0
    %577 = vmatprep.subr.mxu0 0.0
    %578 = vmatpush1.msra.mxu0 0.0
    %579 = vmatprep.subr.mxu0 0.0
    %580 = vmatpush1.msra.mxu0 0.0
    %581 = vmatprep.subr.mxu0 0.0
    %582 = vmatpush1.msra.mxu0 0.0
    %583 = vmatprep.mubr.f32.mxu0 0.0
    %584 = vmatmul.mubr.f32.gmra.mrb[0].mxu0 %v442
    %v585 = vpop.f32.mrb[0].mxu0
    %v586 = vadd.f32 0.0, %v585
    %v587 = vpop.f32.mrb[0].mxu0
    %v588 = vadd.f32 0.0, %v587
    %589 = vdwg.mxu0
    %v590 = vadd.f32 %v444, %v515
    %v591 = vadd.f32 %v445, %v517
    %v592 = vadd.f32 %v446, %v586
    %v593 = vadd.f32 %v447, %v588
    %v594 = vtanh.pop %v590
    %v595 = vtanh.pop %v591
    %v596 = vtanh.pop %v592
    %v597 = vtanh.pop %v593
    %v598 = vmul.f32 %v594, 0.5
    %v599 = vmul.f32 %v595, 0.5
    %v600 = vmul.f32 %v597, 0.5
    %v601 = vadd.f32 %v598, 0.5
    %v602 = vadd.f32 %v599, 0.5
    %v603 = vadd.f32 %v600, 0.5
    %v604 = vmul.f32 %v602, %v440
    %v605 = vmul.f32 %v601, %v596
    %v606 = vadd.f32 %v604, %v605
    %v607 = vtanh.pop %v606
    %v608 = vmul.f32 %v603, %v607
    %s609 = scalar_lea.vmem [#allocation4], 96
    %v610 = vld [vmem:[%s609] sm:$0xff]
    %v611 = vld [vmem:[%s609 + $0x8] sm:$0xff]
    %v612 = vld [vmem:[%s609 + $0x10] sm:$0xff]
    %v613 = vld [vmem:[%s609 + $0x18] sm:$0xff]
    %614 = vmatprep.subr.mxu0 %v47
    %615 = vmatpush1.msra.mxu0 %v46
    %616 = vmatprep.subr.mxu0 %v51
    %617 = vmatpush1.msra.mxu0 %v50
    %618 = vmatprep.subr.mxu0 %v55
    %619 = vmatpush1.msra.mxu0 %v54
    %620 = vmatprep.subr.mxu0 %v59
    %621 = vmatpush1.msra.mxu0 %v58
    %622 = vmatprep.subr.mxu0 %v63
    %623 = vmatpush1.msra.mxu0 %v62
    %624 = vmatprep.subr.mxu0 %v67
    %625 = vmatpush1.msra.mxu0 %v66
    %626 = vmatprep.subr.mxu0 %v71
    %627 = vmatpush1.msra.mxu0 %v70
    %628 = vmatprep.subr.mxu0 %v75
    %629 = vmatpush1.msra.mxu0 %v74
    %630 = vmatprep.subr.mxu0 %v79
    %631 = vmatpush1.msra.mxu0 %v78
    %632 = vmatprep.subr.mxu0 %v83
    %633 = vmatpush1.msra.mxu0 %v82
    %634 = vmatprep.subr.mxu0 %v87
    %635 = vmatpush1.msra.mxu0 %v86
    %636 = vmatprep.subr.mxu0 %v91
    %637 = vmatpush1.msra.mxu0 %v90
    %638 = vmatprep.subr.mxu0 %v95
    %639 = vmatpush1.msra.mxu0 %v94
    %640 = vmatprep.subr.mxu0 %v99
    %641 = vmatpush1.msra.mxu0 %v98
    %642 = vmatprep.subr.mxu0 %v103
    %643 = vmatpush1.msra.mxu0 %v102
    %644 = vmatprep.subr.mxu0 %v107
    %645 = vmatpush1.msra.mxu0 %v106
    %646 = vmatprep.subr.mxu0 0.0
    %647 = vmatpush1.msra.mxu0 0.0
    %648 = vmatprep.subr.mxu0 0.0
    %649 = vmatpush1.msra.mxu0 0.0
    %650 = vmatprep.subr.mxu0 0.0
    %651 = vmatpush1.msra.mxu0 0.0
    %652 = vmatprep.subr.mxu0 0.0
    %653 = vmatpush1.msra.mxu0 0.0
    %654 = vmatprep.subr.mxu0 0.0
    %655 = vmatpush1.msra.mxu0 0.0
    %656 = vmatprep.subr.mxu0 0.0
    %657 = vmatpush1.msra.mxu0 0.0
    %658 = vmatprep.subr.mxu0 0.0
    %659 = vmatpush1.msra.mxu0 0.0
    %660 = vmatprep.subr.mxu0 0.0
    %661 = vmatpush1.msra.mxu0 0.0
    %662 = vmatprep.subr.mxu0 0.0
    %663 = vmatpush1.msra.mxu0 0.0
    %664 = vmatprep.subr.mxu0 0.0
    %665 = vmatpush1.msra.mxu0 0.0
    %666 = vmatprep.subr.mxu0 0.0
    %667 = vmatpush1.msra.mxu0 0.0
    %668 = vmatprep.subr.mxu0 0.0
    %669 = vmatpush1.msra.mxu0 0.0
    %670 = vmatprep.subr.mxu0 0.0
    %671 = vmatpush1.msra.mxu0 0.0
    %672 = vmatprep.subr.mxu0 0.0
    %673 = vmatpush1.msra.mxu0 0.0
    %674 = vmatprep.subr.mxu0 0.0
    %675 = vmatpush1.msra.mxu0 0.0
    %676 = vmatprep.subr.mxu0 0.0
    %677 = vmatpush1.msra.mxu0 0.0
    %678 = vmatprep.mubr.f32.mxu0 0.0
    %679 = vmatmul.mubr.f32.gmra.mrb[0].mxu0 %v608
    %v680 = vpop.f32.mrb[0].mxu0
    %v681 = vadd.f32 0.0, %v680
    %v682 = vpop.f32.mrb[0].mxu0
    %v683 = vadd.f32 0.0, %v682
    %684 = vdwg.mxu0
    %685 = vmatprep.subr.mxu0 %v49
    %686 = vmatpush1.msra.mxu0 %v48
    %687 = vmatprep.subr.mxu0 %v53
    %688 = vmatpush1.msra.mxu0 %v52
    %689 = vmatprep.subr.mxu0 %v57
    %690 = vmatpush1.msra.mxu0 %v56
    %691 = vmatprep.subr.mxu0 %v61
    %692 = vmatpush1.msra.mxu0 %v60
    %693 = vmatprep.subr.mxu0 %v65
    %694 = vmatpush1.msra.mxu0 %v64
    %695 = vmatprep.subr.mxu0 %v69
    %696 = vmatpush1.msra.mxu0 %v68
    %697 = vmatprep.subr.mxu0 %v73
    %698 = vmatpush1.msra.mxu0 %v72
    %699 = vmatprep.subr.mxu0 %v77
    %700 = vmatpush1.msra.mxu0 %v76
    %701 = vmatprep.subr.mxu0 %v81
    %702 = vmatpush1.msra.mxu0 %v80
    %703 = vmatprep.subr.mxu0 %v85
    %704 = vmatpush1.msra.mxu0 %v84
    %705 = vmatprep.subr.mxu0 %v89
    %706 = vmatpush1.msra.mxu0 %v88
    %707 = vmatprep.subr.mxu0 %v93
    %708 = vmatpush1.msra.mxu0 %v92
    %709 = vmatprep.subr.mxu0 %v97
    %710 = vmatpush1.msra.mxu0 %v96
    %711 = vmatprep.subr.mxu0 %v101
    %712 = vmatpush1.msra.mxu0 %v100
    %713 = vmatprep.subr.mxu0 %v105
    %714 = vmatpush1.msra.mxu0 %v104
    %715 = vmatprep.subr.mxu0 %v109
    %716 = vmatpush1.msra.mxu0 %v108
    %717 = vmatprep.subr.mxu0 0.0
    %718 = vmatpush1.msra.mxu0 0.0
    %719 = vmatprep.subr.mxu0 0.0
    %720 = vmatpush1.msra.mxu0 0.0
    %721 = vmatprep.subr.mxu0 0.0
    %722 = vmatpush1.msra.mxu0 0.0
    %723 = vmatprep.subr.mxu0 0.0
    %724 = vmatpush1.msra.mxu0 0.0
    %725 = vmatprep.subr.mxu0 0.0
    %726 = vmatpush1.msra.mxu0 0.0
    %727 = vmatprep.subr.mxu0 0.0
    %728 = vmatpush1.msra.mxu0 0.0
    %729 = vmatprep.subr.mxu0 0.0
    %730 = vmatpush1.msra.mxu0 0.0
    %731 = vmatprep.subr.mxu0 0.0
    %732 = vmatpush1.msra.mxu0 0.0
    %733 = vmatprep.subr.mxu0 0.0
    %734 = vmatpush1.msra.mxu0 0.0
    %735 = vmatprep.subr.mxu0 0.0
    %736 = vmatpush1.msra.mxu0 0.0
    %737 = vmatprep.subr.mxu0 0.0
    %738 = vmatpush1.msra.mxu0 0.0
    %739 = vmatprep.subr.mxu0 0.0
    %740 = vmatpush1.msra.mxu0 0.0
    %741 = vmatprep.subr.mxu0 0.0
    %742 = vmatpush1.msra.mxu0 0.0
    %743 = vmatprep.subr.mxu0 0.0
    %744 = vmatpush1.msra.mxu0 0.0
    %745 = vmatprep.subr.mxu0 0.0
    %746 = vmatpush1.msra.mxu0 0.0
    %747 = vmatprep.subr.mxu0 0.0
    %748 = vmatpush1.msra.mxu0 0.0
    %749 = vmatprep.mubr.f32.mxu0 0.0
    %750 = vmatmul.mubr.f32.gmra.mrb[0].mxu0 %v608
    %v751 = vpop.f32.mrb[0].mxu0
    %v752 = vadd.f32 0.0, %v751
    %v753 = vpop.f32.mrb[0].mxu0
    %v754 = vadd.f32 0.0, %v753
    %755 = vdwg.mxu0
    %v756 = vadd.f32 %v610, %v681
    %v757 = vadd.f32 %v611, %v683
    %v758 = vadd.f32 %v612, %v752
    %v759 = vadd.f32 %v613, %v754
    %v760 = vtanh.pop %v756
    %v761 = vtanh.pop %v757
    %v762 = vtanh.pop %v758
    %v763 = vtanh.pop %v759
    %v764 = vmul.f32 %v760, 0.5
    %v765 = vmul.f32 %v761, 0.5
    %v766 = vmul.f32 %v763, 0.5
    %v767 = vadd.f32 %v764, 0.5
    %v768 = vadd.f32 %v765, 0.5
    %v769 = vadd.f32 %v766, 0.5
    %v770 = vmul.f32 %v768, %v606
    %v771 = vmul.f32 %v767, %v762
    %v772 = vadd.f32 %v770, %v771
    %v773 = vtanh.pop %v772
    %v774 = vmul.f32 %v769, %v773
    %s775 = scalar_lea.vmem [#allocation4], 128
    %v776 = vld [vmem:[%s775] sm:$0xff]
    %v777 = vld [vmem:[%s775 + $0x8] sm:$0xff]
    %v778 = vld [vmem:[%s775 + $0x10] sm:$0xff]
    %v779 = vld [vmem:[%s775 + $0x18] sm:$0xff]
    %780 = vmatprep.subr.mxu0 %v47
    %781 = vmatpush1.msra.mxu0 %v46
    %782 = vmatprep.subr.mxu0 %v51
    %783 = vmatpush1.msra.mxu0 %v50
    %784 = vmatprep.subr.mxu0 %v55
    %785 = vmatpush1.msra.mxu0 %v54
    %786 = vmatprep.subr.mxu0 %v59
    %787 = vmatpush1.msra.mxu0 %v58
    %788 = vmatprep.subr.mxu0 %v63
    %789 = vmatpush1.msra.mxu0 %v62
    %790 = vmatprep.subr.mxu0 %v67
    %791 = vmatpush1.msra.mxu0 %v66
    %792 = vmatprep.subr.mxu0 %v71
    %793 = vmatpush1.msra.mxu0 %v70
    %794 = vmatprep.subr.mxu0 %v75
    %795 = vmatpush1.msra.mxu0 %v74
    %796 = vmatprep.subr.mxu0 %v79
    %797 = vmatpush1.msra.mxu0 %v78
    %798 = vmatprep.subr.mxu0 %v83
    %799 = vmatpush1.msra.mxu0 %v82
    %800 = vmatprep.subr.mxu0 %v87
    %801 = vmatpush1.msra.mxu0 %v86
    %802 = vmatprep.subr.mxu0 %v91
    %803 = vmatpush1.msra.mxu0 %v90
    %804 = vmatprep.subr.mxu0 %v95
    %805 = vmatpush1.msra.mxu0 %v94
    %806 = vmatprep.subr.mxu0 %v99
    %807 = vmatpush1.msra.mxu0 %v98
    %808 = vmatprep.subr.mxu0 %v103
    %809 = vmatpush1.msra.mxu0 %v102
    %810 = vmatprep.subr.mxu0 %v107
    %811 = vmatpush1.msra.mxu0 %v106
    %812 = vmatprep.subr.mxu0 0.0
    %813 = vmatpush1.msra.mxu0 0.0
    %814 = vmatprep.subr.mxu0 0.0
    %815 = vmatpush1.msra.mxu0 0.0
    %816 = vmatprep.subr.mxu0 0.0
    %817 = vmatpush1.msra.mxu0 0.0
    %818 = vmatprep.subr.mxu0 0.0
    %819 = vmatpush1.msra.mxu0 0.0
    %820 = vmatprep.subr.mxu0 0.0
    %821 = vmatpush1.msra.mxu0 0.0
    %822 = vmatprep.subr.mxu0 0.0
    %823 = vmatpush1.msra.mxu0 0.0
    %824 = vmatprep.subr.mxu0 0.0
    %825 = vmatpush1.msra.mxu0 0.0
    %826 = vmatprep.subr.mxu0 0.0
    %827 = vmatpush1.msra.mxu0 0.0
    %828 = vmatprep.subr.mxu0 0.0
    %829 = vmatpush1.msra.mxu0 0.0
    %830 = vmatprep.subr.mxu0 0.0
    %831 = vmatpush1.msra.mxu0 0.0
    %832 = vmatprep.subr.mxu0 0.0
    %833 = vmatpush1.msra.mxu0 0.0
    %834 = vmatprep.subr.mxu0 0.0
    %835 = vmatpush1.msra.mxu0 0.0
    %836 = vmatprep.subr.mxu0 0.0
    %837 = vmatpush1.msra.mxu0 0.0
    %838 = vmatprep.subr.mxu0 0.0
    %839 = vmatpush1.msra.mxu0 0.0
    %840 = vmatprep.subr.mxu0 0.0
    %841 = vmatpush1.msra.mxu0 0.0
    %842 = vmatprep.subr.mxu0 0.0
    %843 = vmatpush1.msra.mxu0 0.0
    %844 = vmatprep.mubr.f32.mxu0 0.0
    %845 = vmatmul.mubr.f32.gmra.mrb[0].mxu0 %v774
    %v846 = vpop.f32.mrb[0].mxu0
    %v847 = vadd.f32 0.0, %v846
    %v848 = vpop.f32.mrb[0].mxu0
    %v849 = vadd.f32 0.0, %v848
    %850 = vdwg.mxu0
    %851 = vmatprep.subr.mxu0 %v49
    %852 = vmatpush1.msra.mxu0 %v48
    %853 = vmatprep.subr.mxu0 %v53
    %854 = vmatpush1.msra.mxu0 %v52
    %855 = vmatprep.subr.mxu0 %v57
    %856 = vmatpush1.msra.mxu0 %v56
    %857 = vmatprep.subr.mxu0 %v61
    %858 = vmatpush1.msra.mxu0 %v60
    %859 = vmatprep.subr.mxu0 %v65
    %860 = vmatpush1.msra.mxu0 %v64
    %861 = vmatprep.subr.mxu0 %v69
    %862 = vmatpush1.msra.mxu0 %v68
    %863 = vmatprep.subr.mxu0 %v73
    %864 = vmatpush1.msra.mxu0 %v72
    %865 = vmatprep.subr.mxu0 %v77
    %866 = vmatpush1.msra.mxu0 %v76
    %867 = vmatprep.subr.mxu0 %v81
    %868 = vmatpush1.msra.mxu0 %v80
    %869 = vmatprep.subr.mxu0 %v85
    %870 = vmatpush1.msra.mxu0 %v84
    %871 = vmatprep.subr.mxu0 %v89
    %872 = vmatpush1.msra.mxu0 %v88
    %873 = vmatprep.subr.mxu0 %v93
    %874 = vmatpush1.msra.mxu0 %v92
    %875 = vmatprep.subr.mxu0 %v97
    %876 = vmatpush1.msra.mxu0 %v96
    %877 = vmatprep.subr.mxu0 %v101
    %878 = vmatpush1.msra.mxu0 %v100
    %879 = vmatprep.subr.mxu0 %v105
    %880 = vmatpush1.msra.mxu0 %v104
    %881 = vmatprep.subr.mxu0 %v109
    %882 = vmatpush1.msra.mxu0 %v108
    %883 = vmatprep.subr.mxu0 0.0
    %884 = vmatpush1.msra.mxu0 0.0
    %885 = vmatprep.subr.mxu0 0.0
    %886 = vmatpush1.msra.mxu0 0.0
    %887 = vmatprep.subr.mxu0 0.0
    %888 = vmatpush1.msra.mxu0 0.0
    %889 = vmatprep.subr.mxu0 0.0
    %890 = vmatpush1.msra.mxu0 0.0
    %891 = vmatprep.subr.mxu0 0.0
    %892 = vmatpush1.msra.mxu0 0.0
    %893 = vmatprep.subr.mxu0 0.0
    %894 = vmatpush1.msra.mxu0 0.0
    %895 = vmatprep.subr.mxu0 0.0
    %896 = vmatpush1.msra.mxu0 0.0
    %897 = vmatprep.subr.mxu0 0.0
    %898 = vmatpush1.msra.mxu0 0.0
    %899 = vmatprep.subr.mxu0 0.0
    %900 = vmatpush1.msra.mxu0 0.0
    %901 = vmatprep.subr.mxu0 0.0
    %902 = vmatpush1.msra.mxu0 0.0
    %903 = vmatprep.subr.mxu0 0.0
    %904 = vmatpush1.msra.mxu0 0.0
    %905 = vmatprep.subr.mxu0 0.0
    %906 = vmatpush1.msra.mxu0 0.0
    %907 = vmatprep.subr.mxu0 0.0
    %908 = vmatpush1.msra.mxu0 0.0
    %909 = vmatprep.subr.mxu0 0.0
    %910 = vmatpush1.msra.mxu0 0.0
    %911 = vmatprep.subr.mxu0 0.0
    %912 = vmatpush1.msra.mxu0 0.0
    %913 = vmatprep.subr.mxu0 0.0
    %914 = vmatpush1.msra.mxu0 0.0
    %915 = vmatprep.mubr.f32.mxu0 0.0
    %916 = vmatmul.mubr.f32.gmra.mrb[0].mxu0 %v774
    %v917 = vpop.f32.mrb[0].mxu0
    %v918 = vadd.f32 0.0, %v917
    %v919 = vpop.f32.mrb[0].mxu0
    %v920 = vadd.f32 0.0, %v919
    %921 = vdwg.mxu0
    %v922 = vadd.f32 %v776, %v847
    %v923 = vadd.f32 %v777, %v849
    %v924 = vadd.f32 %v778, %v918
    %v925 = vadd.f32 %v779, %v920
    %v926 = vtanh.pop %v922
    %v927 = vtanh.pop %v923
    %v928 = vtanh.pop %v924
    %v929 = vtanh.pop %v925
    %v930 = vmul.f32 %v926, 0.5
    %v931 = vmul.f32 %v927, 0.5
    %v932 = vmul.f32 %v929, 0.5
    %v933 = vadd.f32 %v930, 0.5
    %v934 = vadd.f32 %v931, 0.5
    %v935 = vadd.f32 %v932, 0.5
    %v936 = vmul.f32 %v934, %v772
    %v937 = vmul.f32 %v933, %v928
    %v938 = vadd.f32 %v936, %v937
    %v939 = vtanh.pop %v938
    %v940 = vmul.f32 %v935, %v939
    %s941 = scalar_lea.vmem [#allocation4], 160
    %v942 = vld [vmem:[%s941] sm:$0xff]
    %v943 = vld [vmem:[%s941 + $0x8] sm:$0xff]
    %v944 = vld [vmem:[%s941 + $0x10] sm:$0xff]
    %v945 = vld [vmem:[%s941 + $0x18] sm:$0xff]
    %946 = vmatprep.subr.mxu0 %v47
    %947 = vmatpush1.msra.mxu0 %v46
    %948 = vmatprep.subr.mxu0 %v51
    %949 = vmatpush1.msra.mxu0 %v50
    %950 = vmatprep.subr.mxu0 %v55
    %951 = vmatpush1.msra.mxu0 %v54
    %952 = vmatprep.subr.mxu0 %v59
    %953 = vmatpush1.msra.mxu0 %v58
    %954 = vmatprep.subr.mxu0 %v63
    %955 = vmatpush1.msra.mxu0 %v62
    %956 = vmatprep.subr.mxu0 %v67
    %957 = vmatpush1.msra.mxu0 %v66
    %958 = vmatprep.subr.mxu0 %v71
    %959 = vmatpush1.msra.mxu0 %v70
    %960 = vmatprep.subr.mxu0 %v75
    %961 = vmatpush1.msra.mxu0 %v74
    %962 = vmatprep.subr.mxu0 %v79
    %963 = vmatpush1.msra.mxu0 %v78
    %964 = vmatprep.subr.mxu0 %v83
    %965 = vmatpush1.msra.mxu0 %v82
    %966 = vmatprep.subr.mxu0 %v87
    %967 = vmatpush1.msra.mxu0 %v86
    %968 = vmatprep.subr.mxu0 %v91
    %969 = vmatpush1.msra.mxu0 %v90
    %970 = vmatprep.subr.mxu0 %v95
    %971 = vmatpush1.msra.mxu0 %v94
    %972 = vmatprep.subr.mxu0 %v99
    %973 = vmatpush1.msra.mxu0 %v98
    %974 = vmatprep.subr.mxu0 %v103
    %975 = vmatpush1.msra.mxu0 %v102
    %976 = vmatprep.subr.mxu0 %v107
    %977 = vmatpush1.msra.mxu0 %v106
    %978 = vmatprep.subr.mxu0 0.0
    %979 = vmatpush1.msra.mxu0 0.0
    %980 = vmatprep.subr.mxu0 0.0
    %981 = vmatpush1.msra.mxu0 0.0
    %982 = vmatprep.subr.mxu0 0.0
    %983 = vmatpush1.msra.mxu0 0.0
    %984 = vmatprep.subr.mxu0 0.0
    %985 = vmatpush1.msra.mxu0 0.0
    %986 = vmatprep.subr.mxu0 0.0
    %987 = vmatpush1.msra.mxu0 0.0
    %988 = vmatprep.subr.mxu0 0.0
    %989 = vmatpush1.msra.mxu0 0.0
    %990 = vmatprep.subr.mxu0 0.0
    %991 = vmatpush1.msra.mxu0 0.0
    %992 = vmatprep.subr.mxu0 0.0
    %993 = vmatpush1.msra.mxu0 0.0
    %994 = vmatprep.subr.mxu0 0.0
    %995 = vmatpush1.msra.mxu0 0.0
    %996 = vmatprep.subr.mxu0 0.0
    %997 = vmatpush1.msra.mxu0 0.0
    %998 = vmatprep.subr.mxu0 0.0
    %999 = vmatpush1.msra.mxu0 0.0
    %1000 = vmatprep.subr.mxu0 0.0
    %1001 = vmatpush1.msra.mxu0 0.0
    %1002 = vmatprep.subr.mxu0 0.0
    %1003 = vmatpush1.msra.mxu0 0.0
    %1004 = vmatprep.subr.mxu0 0.0
    %1005 = vmatpush1.msra.mxu0 0.0
    %1006 = vmatprep.subr.mxu0 0.0
    %1007 = vmatpush1.msra.mxu0 0.0
    %1008 = vmatprep.subr.mxu0 0.0
    %1009 = vmatpush1.msra.mxu0 0.0
    %1010 = vmatprep.mubr.f32.mxu0 0.0
    %1011 = vmatmul.mubr.f32.gmra.mrb[0].mxu0 %v940
    %v1012 = vpop.f32.mrb[0].mxu0
    %v1013 = vadd.f32 0.0, %v1012
    %v1014 = vpop.f32.mrb[0].mxu0
    %v1015 = vadd.f32 0.0, %v1014
    %1016 = vdwg.mxu0
    %1017 = vmatprep.subr.mxu0 %v49
    %1018 = vmatpush1.msra.mxu0 %v48
    %1019 = vmatprep.subr.mxu0 %v53
    %1020 = vmatpush1.msra.mxu0 %v52
    %1021 = vmatprep.subr.mxu0 %v57
    %1022 = vmatpush1.msra.mxu0 %v56
    %1023 = vmatprep.subr.mxu0 %v61
    %1024 = vmatpush1.msra.mxu0 %v60
    %1025 = vmatprep.subr.mxu0 %v65
    %1026 = vmatpush1.msra.mxu0 %v64
    %1027 = vmatprep.subr.mxu0 %v69
    %1028 = vmatpush1.msra.mxu0 %v68
    %1029 = vmatprep.subr.mxu0 %v73
    %1030 = vmatpush1.msra.mxu0 %v72
    %1031 = vmatprep.subr.mxu0 %v77
    %1032 = vmatpush1.msra.mxu0 %v76
    %1033 = vmatprep.subr.mxu0 %v81
    %1034 = vmatpush1.msra.mxu0 %v80
    %1035 = vmatprep.subr.mxu0 %v85
    %1036 = vmatpush1.msra.mxu0 %v84
    %1037 = vmatprep.subr.mxu0 %v89
    %1038 = vmatpush1.msra.mxu0 %v88
    %1039 = vmatprep.subr.mxu0 %v93
    %1040 = vmatpush1.msra.mxu0 %v92
    %1041 = vmatprep.subr.mxu0 %v97
    %1042 = vmatpush1.msra.mxu0 %v96
    %1043 = vmatprep.subr.mxu0 %v101
    %1044 = vmatpush1.msra.mxu0 %v100
    %1045 = vmatprep.subr.mxu0 %v105
    %1046 = vmatpush1.msra.mxu0 %v104
    %1047 = vmatprep.subr.mxu0 %v109
    %1048 = vmatpush1.msra.mxu0 %v108
    %1049 = vmatprep.subr.mxu0 0.0
    %1050 = vmatpush1.msra.mxu0 0.0
    %1051 = vmatprep.subr.mxu0 0.0
    %1052 = vmatpush1.msra.mxu0 0.0
    %1053 = vmatprep.subr.mxu0 0.0
    %1054 = vmatpush1.msra.mxu0 0.0
    %1055 = vmatprep.subr.mxu0 0.0
    %1056 = vmatpush1.msra.mxu0 0.0
    %1057 = vmatprep.subr.mxu0 0.0
    %1058 = vmatpush1.msra.mxu0 0.0
    %1059 = vmatprep.subr.mxu0 0.0
    %1060 = vmatpush1.msra.mxu0 0.0
    %1061 = vmatprep.subr.mxu0 0.0
    %1062 = vmatpush1.msra.mxu0 0.0
    %1063 = vmatprep.subr.mxu0 0.0
    %1064 = vmatpush1.msra.mxu0 0.0
    %1065 = vmatprep.subr.mxu0 0.0
    %1066 = vmatpush1.msra.mxu0 0.0
    %1067 = vmatprep.subr.mxu0 0.0
    %1068 = vmatpush1.msra.mxu0 0.0
    %1069 = vmatprep.subr.mxu0 0.0
    %1070 = vmatpush1.msra.mxu0 0.0
    %1071 = vmatprep.subr.mxu0 0.0
    %1072 = vmatpush1.msra.mxu0 0.0
    %1073 = vmatprep.subr.mxu0 0.0
    %1074 = vmatpush1.msra.mxu0 0.0
    %1075 = vmatprep.subr.mxu0 0.0
    %1076 = vmatpush1.msra.mxu0 0.0
    %1077 = vmatprep.subr.mxu0 0.0
    %1078 = vmatpush1.msra.mxu0 0.0
    %1079 = vmatprep.subr.mxu0 0.0
    %1080 = vmatpush1.msra.mxu0 0.0
    %1081 = vmatprep.mubr.f32.mxu0 0.0
    %1082 = vmatmul.mubr.f32.gmra.mrb[0].mxu0 %v940
    %v1083 = vpop.f32.mrb[0].mxu0
    %v1084 = vadd.f32 0.0, %v1083
    %v1085 = vpop.f32.mrb[0].mxu0
    %v1086 = vadd.f32 0.0, %v1085
    %1087 = vdwg.mxu0
    %v1088 = vadd.f32 %v942, %v1013
    %v1089 = vadd.f32 %v943, %v1015
    %v1090 = vadd.f32 %v944, %v1084
    %v1091 = vadd.f32 %v945, %v1086
    %v1092 = vtanh.pop %v1088
    %v1093 = vtanh.pop %v1089
    %v1094 = vtanh.pop %v1090
    %v1095 = vtanh.pop %v1091
    %v1096 = vmul.f32 %v1092, 0.5
    %v1097 = vmul.f32 %v1093, 0.5
    %v1098 = vmul.f32 %v1095, 0.5
    %v1099 = vadd.f32 %v1096, 0.5
    %v1100 = vadd.f32 %v1097, 0.5
    %v1101 = vadd.f32 %v1098, 0.5
    %v1102 = vmul.f32 %v1100, %v938
    %v1103 = vmul.f32 %v1099, %v1094
    %v1104 = vadd.f32 %v1102, %v1103
    %v1105 = vtanh.pop %v1104
    %v1106 = vmul.f32 %v1101, %v1105
    %s1107 = scalar_lea.vmem [#allocation4], 192
    %v1108 = vld [vmem:[%s1107] sm:$0xff]
    %v1109 = vld [vmem:[%s1107 + $0x8] sm:$0xff]
    %v1110 = vld [vmem:[%s1107 + $0x10] sm:$0xff]
    %v1111 = vld [vmem:[%s1107 + $0x18] sm:$0xff]
    %1112 = vmatprep.subr.mxu0 %v47
    %1113 = vmatpush1.msra.mxu0 %v46
    %1114 = vmatprep.subr.mxu0 %v51
    %1115 = vmatpush1.msra.mxu0 %v50
    %1116 = vmatprep.subr.mxu0 %v55
    %1117 = vmatpush1.msra.mxu0 %v54
    %1118 = vmatprep.subr.mxu0 %v59
    %1119 = vmatpush1.msra.mxu0 %v58
    %1120 = vmatprep.subr.mxu0 %v63
    %1121 = vmatpush1.msra.mxu0 %v62
    %1122 = vmatprep.subr.mxu0 %v67
    %1123 = vmatpush1.msra.mxu0 %v66
    %1124 = vmatprep.subr.mxu0 %v71
    %1125 = vmatpush1.msra.mxu0 %v70
    %1126 = vmatprep.subr.mxu0 %v75
    %1127 = vmatpush1.msra.mxu0 %v74
    %1128 = vmatprep.subr.mxu0 %v79
    %1129 = vmatpush1.msra.mxu0 %v78
    %1130 = vmatprep.subr.mxu0 %v83
    %1131 = vmatpush1.msra.mxu0 %v82
    %1132 = vmatprep.subr.mxu0 %v87
    %1133 = vmatpush1.msra.mxu0 %v86
    %1134 = vmatprep.subr.mxu0 %v91
    %1135 = vmatpush1.msra.mxu0 %v90
    %1136 = vmatprep.subr.mxu0 %v95
    %1137 = vmatpush1.msra.mxu0 %v94
    %1138 = vmatprep.subr.mxu0 %v99
    %1139 = vmatpush1.msra.mxu0 %v98
    %1140 = vmatprep.subr.mxu0 %v103
    %1141 = vmatpush1.msra.mxu0 %v102
    %1142 = vmatprep.subr.mxu0 %v107
    %1143 = vmatpush1.msra.mxu0 %v106
    %1144 = vmatprep.subr.mxu0 0.0
    %1145 = vmatpush1.msra.mxu0 0.0
    %1146 = vmatprep.subr.mxu0 0.0
    %1147 = vmatpush1.msra.mxu0 0.0
    %1148 = vmatprep.subr.mxu0 0.0
    %1149 = vmatpush1.msra.mxu0 0.0
    %1150 = vmatprep.subr.mxu0 0.0
    %1151 = vmatpush1.msra.mxu0 0.0
    %1152 = vmatprep.subr.mxu0 0.0
    %1153 = vmatpush1.msra.mxu0 0.0
    %1154 = vmatprep.subr.mxu0 0.0
    %1155 = vmatpush1.msra.mxu0 0.0
    %1156 = vmatprep.subr.mxu0 0.0
    %1157 = vmatpush1.msra.mxu0 0.0
    %1158 = vmatprep.subr.mxu0 0.0
    %1159 = vmatpush1.msra.mxu0 0.0
    %1160 = vmatprep.subr.mxu0 0.0
    %1161 = vmatpush1.msra.mxu0 0.0
    %1162 = vmatprep.subr.mxu0 0.0
    %1163 = vmatpush1.msra.mxu0 0.0
    %1164 = vmatprep.subr.mxu0 0.0
    %1165 = vmatpush1.msra.mxu0 0.0
    %1166 = vmatprep.subr.mxu0 0.0
    %1167 = vmatpush1.msra.mxu0 0.0
    %1168 = vmatprep.subr.mxu0 0.0
    %1169 = vmatpush1.msra.mxu0 0.0
    %1170 = vmatprep.subr.mxu0 0.0
    %1171 = vmatpush1.msra.mxu0 0.0
    %1172 = vmatprep.subr.mxu0 0.0
    %1173 = vmatpush1.msra.mxu0 0.0
    %1174 = vmatprep.subr.mxu0 0.0
    %1175 = vmatpush1.msra.mxu0 0.0
    %1176 = vmatprep.mubr.f32.mxu0 0.0
    %1177 = vmatmul.mubr.f32.gmra.mrb[0].mxu0 %v1106
    %v1178 = vpop.f32.mrb[0].mxu0
    %v1179 = vadd.f32 0.0, %v1178
    %v1180 = vpop.f32.mrb[0].mxu0
    %v1181 = vadd.f32 0.0, %v1180
    %1182 = vdwg.mxu0
    %1183 = vmatprep.subr.mxu0 %v49
    %1184 = vmatpush1.msra.mxu0 %v48
    %1185 = vmatprep.subr.mxu0 %v53
    %1186 = vmatpush1.msra.mxu0 %v52
    %1187 = vmatprep.subr.mxu0 %v57
    %1188 = vmatpush1.msra.mxu0 %v56
    %1189 = vmatprep.subr.mxu0 %v61
    %1190 = vmatpush1.msra.mxu0 %v60
    %1191 = vmatprep.subr.mxu0 %v65
    %1192 = vmatpush1.msra.mxu0 %v64
    %1193 = vmatprep.subr.mxu0 %v69
    %1194 = vmatpush1.msra.mxu0 %v68
    %1195 = vmatprep.subr.mxu0 %v73
    %1196 = vmatpush1.msra.mxu0 %v72
    %1197 = vmatprep.subr.mxu0 %v77
    %1198 = vmatpush1.msra.mxu0 %v76
    %1199 = vmatprep.subr.mxu0 %v81
    %1200 = vmatpush1.msra.mxu0 %v80
    %1201 = vmatprep.subr.mxu0 %v85
    %1202 = vmatpush1.msra.mxu0 %v84
    %1203 = vmatprep.subr.mxu0 %v89
    %1204 = vmatpush1.msra.mxu0 %v88
    %1205 = vmatprep.subr.mxu0 %v93
    %1206 = vmatpush1.msra.mxu0 %v92
    %1207 = vmatprep.subr.mxu0 %v97
    %1208 = vmatpush1.msra.mxu0 %v96
    %1209 = vmatprep.subr.mxu0 %v101
    %1210 = vmatpush1.msra.mxu0 %v100
    %1211 = vmatprep.subr.mxu0 %v105
    %1212 = vmatpush1.msra.mxu0 %v104
    %1213 = vmatprep.subr.mxu0 %v109
    %1214 = vmatpush1.msra.mxu0 %v108
    %1215 = vmatprep.subr.mxu0 0.0
    %1216 = vmatpush1.msra.mxu0 0.0
    %1217 = vmatprep.subr.mxu0 0.0
    %1218 = vmatpush1.msra.mxu0 0.0
    %1219 = vmatprep.subr.mxu0 0.0
    %1220 = vmatpush1.msra.mxu0 0.0
    %1221 = vmatprep.subr.mxu0 0.0
    %1222 = vmatpush1.msra.mxu0 0.0
    %1223 = vmatprep.subr.mxu0 0.0
    %1224 = vmatpush1.msra.mxu0 0.0
    %1225 = vmatprep.subr.mxu0 0.0
    %1226 = vmatpush1.msra.mxu0 0.0
    %1227 = vmatprep.subr.mxu0 0.0
    %1228 = vmatpush1.msra.mxu0 0.0
    %1229 = vmatprep.subr.mxu0 0.0
    %1230 = vmatpush1.msra.mxu0 0.0
    %1231 = vmatprep.subr.mxu0 0.0
    %1232 = vmatpush1.msra.mxu0 0.0
    %1233 = vmatprep.subr.mxu0 0.0
    %1234 = vmatpush1.msra.mxu0 0.0
    %1235 = vmatprep.subr.mxu0 0.0
    %1236 = vmatpush1.msra.mxu0 0.0
    %1237 = vmatprep.subr.mxu0 0.0
    %1238 = vmatpush1.msra.mxu0 0.0
    %1239 = vmatprep.subr.mxu0 0.0
    %1240 = vmatpush1.msra.mxu0 0.0
    %1241 = vmatprep.subr.mxu0 0.0
    %1242 = vmatpush1.msra.mxu0 0.0
    %1243 = vmatprep.subr.mxu0 0.0
    %1244 = vmatpush1.msra.mxu0 0.0
    %1245 = vmatprep.subr.mxu0 0.0
    %1246 = vmatpush1.msra.mxu0 0.0
    %1247 = vmatprep.mubr.f32.mxu0 0.0
    %1248 = vmatmul.mubr.f32.gmra.mrb[0].mxu0 %v1106
    %v1249 = vpop.f32.mrb[0].mxu0
    %v1250 = vadd.f32 0.0, %v1249
    %v1251 = vpop.f32.mrb[0].mxu0
    %v1252 = vadd.f32 0.0, %v1251
    %1253 = vdwg.mxu0
    %v1254 = vadd.f32 %v1108, %v1179
    %v1255 = vadd.f32 %v1109, %v1181
    %v1256 = vadd.f32 %v1110, %v1250
    %v1257 = vadd.f32 %v1111, %v1252
    %v1258 = vtanh.pop %v1254
    %v1259 = vtanh.pop %v1255
    %v1260 = vtanh.pop %v1256
    %v1261 = vtanh.pop %v1257
    %v1262 = vmul.f32 %v1258, 0.5
    %v1263 = vmul.f32 %v1259, 0.5
    %v1264 = vmul.f32 %v1261, 0.5
    %v1265 = vadd.f32 %v1262, 0.5
    %v1266 = vadd.f32 %v1263, 0.5
    %v1267 = vadd.f32 %v1264, 0.5
    %v1268 = vmul.f32 %v1266, %v1104
    %v1269 = vmul.f32 %v1265, %v1260
    %v1270 = vadd.f32 %v1268, %v1269
    %v1271 = vtanh.pop %v1270
    %v1272 = vmul.f32 %v1267, %v1271
    %s1273 = scalar_lea.vmem [#allocation4], 224
    %v1274 = vld [vmem:[%s1273] sm:$0xff]
    %v1275 = vld [vmem:[%s1273 + $0x8] sm:$0xff]
    %v1276 = vld [vmem:[%s1273 + $0x10] sm:$0xff]
    %v1277 = vld [vmem:[%s1273 + $0x18] sm:$0xff]
    %1278 = vmatprep.subr.mxu0 %v47
    %1279 = vmatpush1.msra.mxu0 %v46
    %1280 = vmatprep.subr.mxu0 %v51
    %1281 = vmatpush1.msra.mxu0 %v50
    %1282 = vmatprep.subr.mxu0 %v55
    %1283 = vmatpush1.msra.mxu0 %v54
    %1284 = vmatprep.subr.mxu0 %v59
    %1285 = vmatpush1.msra.mxu0 %v58
    %1286 = vmatprep.subr.mxu0 %v63
    %1287 = vmatpush1.msra.mxu0 %v62
    %1288 = vmatprep.subr.mxu0 %v67
    %1289 = vmatpush1.msra.mxu0 %v66
    %1290 = vmatprep.subr.mxu0 %v71
    %1291 = vmatpush1.msra.mxu0 %v70
    %1292 = vmatprep.subr.mxu0 %v75
    %1293 = vmatpush1.msra.mxu0 %v74
    %1294 = vmatprep.subr.mxu0 %v79
    %1295 = vmatpush1.msra.mxu0 %v78
    %1296 = vmatprep.subr.mxu0 %v83
    %1297 = vmatpush1.msra.mxu0 %v82
    %1298 = vmatprep.subr.mxu0 %v87
    %1299 = vmatpush1.msra.mxu0 %v86
    %1300 = vmatprep.subr.mxu0 %v91
    %1301 = vmatpush1.msra.mxu0 %v90
    %1302 = vmatprep.subr.mxu0 %v95
    %1303 = vmatpush1.msra.mxu0 %v94
    %1304 = vmatprep.subr.mxu0 %v99
    %1305 = vmatpush1.msra.mxu0 %v98
    %1306 = vmatprep.subr.mxu0 %v103
    %1307 = vmatpush1.msra.mxu0 %v102
    %1308 = vmatprep.subr.mxu0 %v107
    %1309 = vmatpush1.msra.mxu0 %v106
    %1310 = vmatprep.subr.mxu0 0.0
    %1311 = vmatpush1.msra.mxu0 0.0
    %1312 = vmatprep.subr.mxu0 0.0
    %1313 = vmatpush1.msra.mxu0 0.0
    %1314 = vmatprep.subr.mxu0 0.0
    %1315 = vmatpush1.msra.mxu0 0.0
    %1316 = vmatprep.subr.mxu0 0.0
    %1317 = vmatpush1.msra.mxu0 0.0
    %1318 = vmatprep.subr.mxu0 0.0
    %1319 = vmatpush1.msra.mxu0 0.0
    %1320 = vmatprep.subr.mxu0 0.0
    %1321 = vmatpush1.msra.mxu0 0.0
    %1322 = vmatprep.subr.mxu0 0.0
    %1323 = vmatpush1.msra.mxu0 0.0
    %1324 = vmatprep.subr.mxu0 0.0
    %1325 = vmatpush1.msra.mxu0 0.0
    %1326 = vmatprep.subr.mxu0 0.0
    %1327 = vmatpush1.msra.mxu0 0.0
    %1328 = vmatprep.subr.mxu0 0.0
    %1329 = vmatpush1.msra.mxu0 0.0
    %1330 = vmatprep.subr.mxu0 0.0
    %1331 = vmatpush1.msra.mxu0 0.0
    %1332 = vmatprep.subr.mxu0 0.0
    %1333 = vmatpush1.msra.mxu0 0.0
    %1334 = vmatprep.subr.mxu0 0.0
    %1335 = vmatpush1.msra.mxu0 0.0
    %1336 = vmatprep.subr.mxu0 0.0
    %1337 = vmatpush1.msra.mxu0 0.0
    %1338 = vmatprep.subr.mxu0 0.0
    %1339 = vmatpush1.msra.mxu0 0.0
    %1340 = vmatprep.subr.mxu0 0.0
    %1341 = vmatpush1.msra.mxu0 0.0
    %1342 = vmatprep.mubr.f32.mxu0 0.0
    %1343 = vmatmul.mubr.f32.gmra.mrb[0].mxu0 %v1272
    %v1344 = vpop.f32.mrb[0].mxu0
    %v1345 = vadd.f32 0.0, %v1344
    %v1346 = vpop.f32.mrb[0].mxu0
    %v1347 = vadd.f32 0.0, %v1346
    %1348 = vdwg.mxu0
    %1349 = vmatprep.subr.mxu0 %v49
    %1350 = vmatpush1.msra.mxu0 %v48
    %1351 = vmatprep.subr.mxu0 %v53
    %1352 = vmatpush1.msra.mxu0 %v52
    %1353 = vmatprep.subr.mxu0 %v57
    %1354 = vmatpush1.msra.mxu0 %v56
    %1355 = vmatprep.subr.mxu0 %v61
    %1356 = vmatpush1.msra.mxu0 %v60
    %1357 = vmatprep.subr.mxu0 %v65
    %1358 = vmatpush1.msra.mxu0 %v64
    %1359 = vmatprep.subr.mxu0 %v69
    %1360 = vmatpush1.msra.mxu0 %v68
    %1361 = vmatprep.subr.mxu0 %v73
    %1362 = vmatpush1.msra.mxu0 %v72
    %1363 = vmatprep.subr.mxu0 %v77
    %1364 = vmatpush1.msra.mxu0 %v76
    %1365 = vmatprep.subr.mxu0 %v81
    %1366 = vmatpush1.msra.mxu0 %v80
    %1367 = vmatprep.subr.mxu0 %v85
    %1368 = vmatpush1.msra.mxu0 %v84
    %1369 = vmatprep.subr.mxu0 %v89
    %1370 = vmatpush1.msra.mxu0 %v88
    %1371 = vmatprep.subr.mxu0 %v93
    %1372 = vmatpush1.msra.mxu0 %v92
    %1373 = vmatprep.subr.mxu0 %v97
    %1374 = vmatpush1.msra.mxu0 %v96
    %1375 = vmatprep.subr.mxu0 %v101
    %1376 = vmatpush1.msra.mxu0 %v100
    %1377 = vmatprep.subr.mxu0 %v105
    %1378 = vmatpush1.msra.mxu0 %v104
    %1379 = vmatprep.subr.mxu0 %v109
    %1380 = vmatpush1.msra.mxu0 %v108
    %1381 = vmatprep.subr.mxu0 0.0
    %1382 = vmatpush1.msra.mxu0 0.0
    %1383 = vmatprep.subr.mxu0 0.0
    %1384 = vmatpush1.msra.mxu0 0.0
    %1385 = vmatprep.subr.mxu0 0.0
    %1386 = vmatpush1.msra.mxu0 0.0
    %1387 = vmatprep.subr.mxu0 0.0
    %1388 = vmatpush1.msra.mxu0 0.0
    %1389 = vmatprep.subr.mxu0 0.0
    %1390 = vmatpush1.msra.mxu0 0.0
    %1391 = vmatprep.subr.mxu0 0.0
    %1392 = vmatpush1.msra.mxu0 0.0
    %1393 = vmatprep.subr.mxu0 0.0
    %1394 = vmatpush1.msra.mxu0 0.0
    %1395 = vmatprep.subr.mxu0 0.0
    %1396 = vmatpush1.msra.mxu0 0.0
    %1397 = vmatprep.subr.mxu0 0.0
    %1398 = vmatpush1.msra.mxu0 0.0
    %1399 = vmatprep.subr.mxu0 0.0
    %1400 = vmatpush1.msra.mxu0 0.0
    %1401 = vmatprep.subr.mxu0 0.0
    %1402 = vmatpush1.msra.mxu0 0.0
    %1403 = vmatprep.subr.mxu0 0.0
    %1404 = vmatpush1.msra.mxu0 0.0
    %1405 = vmatprep.subr.mxu0 0.0
    %1406 = vmatpush1.msra.mxu0 0.0
    %1407 = vmatprep.subr.mxu0 0.0
    %1408 = vmatpush1.msra.mxu0 0.0
    %1409 = vmatprep.subr.mxu0 0.0
    %1410 = vmatpush1.msra.mxu0 0.0
    %1411 = vmatprep.subr.mxu0 0.0
    %1412 = vmatpush1.msra.mxu0 0.0
    %1413 = vmatprep.mubr.f32.mxu0 0.0
    %1414 = vmatmul.mubr.f32.gmra.mrb[0].mxu0 %v1272
    %v1415 = vpop.f32.mrb[0].mxu0
    %v1416 = vadd.f32 0.0, %v1415
    %v1417 = vpop.f32.mrb[0].mxu0
    %v1418 = vadd.f32 0.0, %v1417
    %1419 = vdwg.mxu0
    %v1420 = vadd.f32 %v1274, %v1345
    %v1421 = vadd.f32 %v1275, %v1347
    %v1422 = vadd.f32 %v1276, %v1416
    %v1423 = vadd.f32 %v1277, %v1418
    %v1424 = vtanh.pop %v1420
    %v1425 = vtanh.pop %v1421
    %v1426 = vtanh.pop %v1422
    %v1427 = vtanh.pop %v1423
    %v1428 = vmul.f32 %v1424, 0.5
    %v1429 = vmul.f32 %v1425, 0.5
    %v1430 = vmul.f32 %v1427, 0.5
    %v1431 = vadd.f32 %v1428, 0.5
    %v1432 = vadd.f32 %v1429, 0.5
    %v1433 = vadd.f32 %v1430, 0.5
    %v1434 = vmul.f32 %v1432, %v1270
    %v1435 = vmul.f32 %v1431, %v1426
    %v1436 = vadd.f32 %v1434, %v1435
    %v1437 = vtanh.pop %v1436
    %v1438 = vmul.f32 %v1433, %v1437
    %1439 = vst [vmem:[#allocation2] sm:$0xff] %v1438
    %1440 = vst [vmem:[#allocation3] sm:$0xff] %v1436
    // Predicated region
    $region22: #{tpu_custom_call.1} parent=1 // pred_check
      %p1441 = pneg %p40
    $region23: #{tpu_custom_call.1} parent=1 // pred_check_branch
      %1443 = sbr.rel (%p1441) target = $region25
    $region24: #{tpu_custom_call.1} parent=1 // pred_region
      %v1444 = vld [vmem:[#allocation2] sm:$0xff]
      %1445 = vst [vmem:[#allocation9] sm:$0xff] %v1444
    $region25: #{tpu_custom_call.1} parent=1 // pred_fallthru
      _
    // Predicated region
    $region26: #{tpu_custom_call.1} parent=1 // pred_check
      _
    $region27: #{tpu_custom_call.1} parent=1 // pred_check_branch
      %1447 = sbr.rel (0) target = $region29
    $region28: #{tpu_custom_call.1} parent=1 // pred_region
      %s1449 = ssub.s32 128, 128
      %1450 = vsyncadd [#allocation6], %s1449
      %s1452 = sshll.u32 [#allocation9], 4
      %s1453 = int_to_ptr.vmem [resolvable:$true] %s1452
      %1455 = dma.vmem_to_hbm [thread:$0]  %s1453, 128, %s2, [#allocation6]
    $region29: #{tpu_custom_call.1} parent=1 // pred_fallthru
      _
    // Predicated region
    $region30: #{tpu_custom_call.1} parent=1 // pred_check
      _
    $region31: #{tpu_custom_call.1} parent=1 // pred_check_branch
      %1457 = sbr.rel (0) target = $region33
    $region32: #{tpu_custom_call.1} parent=1 // pred_region
      %1458 = dma.done [#allocation6], 128
    $region33: #{tpu_custom_call.1} parent=1 // pred_fallthru
      _
    %1459 = vsyncpa [#allocation5], 1
    %1460 = vsyncpa [#allocation8], 1
    %1461 = vsyncpa [#allocation6], 1

// kernel: tpu_custom_call.1
$region0: #{tpu_custom_call.1}
  #allocation0 [shape = 'u32[]', space=smem, size = 0x4, offset = 0x4, fixed_abs, tag = 'smem constant byte address 0x4 - core index']
  #allocation1 [shape = 'u32[144,128]{1,0:T(1,128)}', space=vmem, size = 0x12000, scoped, tag = 'internal scratch']
  #allocation2 [shape = 'f32[8,128]{1,0:T(8,128)}', space=vmem, size = 0x1000, scoped, tag = 'scratch operand']
  #allocation3 [shape = 'f32[8,128]{1,0:T(8,128)}', space=vmem, size = 0x1000, scoped, tag = 'scratch operand']
  %s0 = inlined_call_operand.hbm [shape: f32[8,8,512], index: 0, kind: input, shape index: {}]
  %s1 = inlined_call_operand.hbm [shape: f32[128,512], index: 1, kind: input, shape index: {}]
  %s2 = inlined_call_operand.hbm [shape: f32[8,128], index: 2, kind: output, shape index: {}]
  %s3 = sld [smem:[#allocation0]]
  $region34: #{tpu_custom_call.1} parent=0
    _
  %s5 = ssub.s32 1, %s3
  %s6 = scalar_select 0, %s5, %s3
  $region1: #{tpu_custom_call.1} parent=0
    #allocation4 [shape = 'u8[131072]{0}', space=vmem, size = 0x20000, scoped, tag = 'input window, operand 0, single buffered']
    #allocation5 [shape = 's32[1]{0}', space=sflag, size = 0x4, scoped, tag = 'scoped memory for tpu_custom_call.1']
    #allocation6 [shape = 's32[1]{0}', space=sflag, size = 0x4, scoped, tag = 'scoped memory for tpu_custom_call.1']
    #allocation7 [shape = 'u8[262144]{0}', space=vmem, size = 0x40000, scoped, tag = 'input window, operand 1, single buffered']
    #allocation8 [shape = 's32[1]{0}', space=sflag, size = 0x4, scoped, tag = 'scoped memory for tpu_custom_call.1']
    #allocation9 [shape = 'u8[4096]{0}', space=vmem, size = 0x1000, scoped, tag = 'output window, operand 0, single buffered']
    %7 = vsyncpa [#allocation5], 0
    %8 = vsyncpa [#allocation8], 0
    %9 = vsyncpa [#allocation6], 0
    // Predicated region
    $region2: #{tpu_custom_call.1} parent=1 // pred_check
      _
    $region3: #{tpu_custom_call.1} parent=1 // pred_check_branch
      %11 = sbr.rel (0) target = $region5
    $region4: #{tpu_custom_call.1} parent=1 // pred_region
      %s13 = ssub.s32 4096, 4096
      %14 = vsyncadd [#allocation5], %s13
      %s15 = sshll.u32 [#allocation4], 4
      %s16 = int_to_ptr.vmem [resolvable:$true] %s15
      %21 = dma.hbm_to_vmem [thread:$0]  %s0, 4096, %s16, [#allocation5], 512, 512, 32
    $region5: #{tpu_custom_call.1} parent=1 // pred_fallthru
      _
    // Predicated region
    $region6: #{tpu_custom_call.1} parent=1 // pred_check
      _
    $region7: #{tpu_custom_call.1} parent=1 // pred_check_branch
      %23 = sbr.rel (0) target = $region9
    $region8: #{tpu_custom_call.1} parent=1 // pred_region
      %s25 = ssub.s32 8192, 8192
      %26 = vsyncadd [#allocation8], %s25
      %s27 = sshll.u32 [#allocation7], 4
      %s28 = int_to_ptr.vmem [resolvable:$true] %s27
      %33 = dma.hbm_to_vmem [thread:$0]  %s1, 8192, %s28, [#allocation8], 512, 512, 32
    $region9: #{tpu_custom_call.1} parent=1 // pred_fallthru
      _
    // Predicated region
    $region10: #{tpu_custom_call.1} parent=1 // pred_check
      _
    $region11: #{tpu_custom_call.1} parent=1 // pred_check_branch
      %35 = sbr.rel (0) target = $region13
    $region12: #{tpu_custom_call.1} parent=1 // pred_region
      %36 = dma.done [#allocation5], 4096
    $region13: #{tpu_custom_call.1} parent=1 // pred_fallthru
      _
    // Predicated region
    $region14: #{tpu_custom_call.1} parent=1 // pred_check
      _
    $region15: #{tpu_custom_call.1} parent=1 // pred_check_branch
      %38 = sbr.rel (0) target = $region17
    $region16: #{tpu_custom_call.1} parent=1 // pred_region
      %39 = dma.done [#allocation8], 8192
    $region17: #{tpu_custom_call.1} parent=1 // pred_fallthru
      _
    %p40 = scmp.eq.s32.totalorder 0, 0
    // Predicated region
    $region18: #{tpu_custom_call.1} parent=1 // pred_check
      %p41 = pneg %p40
    $region19: #{tpu_custom_call.1} parent=1 // pred_check_branch
      %43 = sbr.rel (%p41) target = $region21
    $region20: #{tpu_custom_call.1} parent=1 // pred_region
      %44 = vst [vmem:[#allocation2] sm:$0xff] 0.0
      %45 = vst [vmem:[#allocation3] sm:$0xff] 0.0
    $region21: #{tpu_custom_call.1} parent=1 // pred_fallthru
      _
    %v46 = vld [vmem:[#allocation7] sm:$0xff]
    %v47 = vld [vmem:[#allocation7 + $0x8] sm:$0xff]
    %v48 = vld [vmem:[#allocation7 + $0x10] sm:$0xff]
    %v49 = vld [vmem:[#allocation7 + $0x18] sm:$0xff]
    %v50 = vld [vmem:[#allocation7 + $0x20] sm:$0xff]
    %v51 = vld [vmem:[#allocation7 + $0x28] sm:$0xff]
    %v52 = vld [vmem:[#allocation7 + $0x30] sm:$0xff]
    %v53 = vld [vmem:[#allocation7 + $0x38] sm:$0xff]
    %v54 = vld [vmem:[#allocation7 + $0x40] sm:$0xff]
    %v55 = vld [vmem:[#allocation7 + $0x48] sm:$0xff]
    %v56 = vld [vmem:[#allocation7 + $0x50] sm:$0xff]
    %v57 = vld [vmem:[#allocation7 + $0x58] sm:$0xff]
    %v58 = vld [vmem:[#allocation7 + $0x60] sm:$0xff]
    %v59 = vld [vmem:[#allocation7 + $0x68] sm:$0xff]
    %v60 = vld [vmem:[#allocation7 + $0x70] sm:$0xff]
    %v61 = vld [vmem:[#allocation7 + $0x78] sm:$0xff]
    %v62 = vld [vmem:[#allocation7 + $0x80] sm:$0xff]
    %v63 = vld [vmem:[#allocation7 + $0x88] sm:$0xff]
    %v64 = vld [vmem:[#allocation7 + $0x90] sm:$0xff]
    %v65 = vld [vmem:[#allocation7 + $0x98] sm:$0xff]
    %v66 = vld [vmem:[#allocation7 + $0xa0] sm:$0xff]
    %v67 = vld [vmem:[#allocation7 + $0xa8] sm:$0xff]
    %v68 = vld [vmem:[#allocation7 + $0xb0] sm:$0xff]
    %v69 = vld [vmem:[#allocation7 + $0xb8] sm:$0xff]
    %v70 = vld [vmem:[#allocation7 + $0xc0] sm:$0xff]
    %v71 = vld [vmem:[#allocation7 + $0xc8] sm:$0xff]
    %v72 = vld [vmem:[#allocation7 + $0xd0] sm:$0xff]
    %v73 = vld [vmem:[#allocation7 + $0xd8] sm:$0xff]
    %v74 = vld [vmem:[#allocation7 + $0xe0] sm:$0xff]
    %v75 = vld [vmem:[#allocation7 + $0xe8] sm:$0xff]
    %v76 = vld [vmem:[#allocation7 + $0xf0] sm:$0xff]
    %v77 = vld [vmem:[#allocation7 + $0xf8] sm:$0xff]
    %v78 = vld [vmem:[#allocation7 + $0x100] sm:$0xff]
    %v79 = vld [vmem:[#allocation7 + $0x108] sm:$0xff]
    %v80 = vld [vmem:[#allocation7 + $0x110] sm:$0xff]
    %v81 = vld [vmem:[#allocation7 + $0x118] sm:$0xff]
    %v82 = vld [vmem:[#allocation7 + $0x120] sm:$0xff]
    %v83 = vld [vmem:[#allocation7 + $0x128] sm:$0xff]
    %v84 = vld [vmem:[#allocation7 + $0x130] sm:$0xff]
    %v85 = vld [vmem:[#allocation7 + $0x138] sm:$0xff]
    %v86 = vld [vmem:[#allocation7 + $0x140] sm:$0xff]
    %v87 = vld [vmem:[#allocation7 + $0x148] sm:$0xff]
    %v88 = vld [vmem:[#allocation7 + $0x150] sm:$0xff]
    %v89 = vld [vmem:[#allocation7 + $0x158] sm:$0xff]
    %v90 = vld [vmem:[#allocation7 + $0x160] sm:$0xff]
    %v91 = vld [vmem:[#allocation7 + $0x168] sm:$0xff]
    %v92 = vld [vmem:[#allocation7 + $0x170] sm:$0xff]
    %v93 = vld [vmem:[#allocation7 + $0x178] sm:$0xff]
    %v94 = vld [vmem:[#allocation7 + $0x180] sm:$0xff]
    %v95 = vld [vmem:[#allocation7 + $0x188] sm:$0xff]
    %v96 = vld [vmem:[#allocation7 + $0x190] sm:$0xff]
    %v97 = vld [vmem:[#allocation7 + $0x198] sm:$0xff]
    %v98 = vld [vmem:[#allocation7 + $0x1a0] sm:$0xff]
    %v99 = vld [vmem:[#allocation7 + $0x1a8] sm:$0xff]
    %v100 = vld [vmem:[#allocation7 + $0x1b0] sm:$0xff]
    %v101 = vld [vmem:[#allocation7 + $0x1b8] sm:$0xff]
    %v102 = vld [vmem:[#allocation7 + $0x1c0] sm:$0xff]
    %v103 = vld [vmem:[#allocation7 + $0x1c8] sm:$0xff]
    %v104 = vld [vmem:[#allocation7 + $0x1d0] sm:$0xff]
    %v105 = vld [vmem:[#allocation7 + $0x1d8] sm:$0xff]
    %v106 = vld [vmem:[#allocation7 + $0x1e0] sm:$0xff]
    %v107 = vld [vmem:[#allocation7 + $0x1e8] sm:$0xff]
    %v108 = vld [vmem:[#allocation7 + $0x1f0] sm:$0xff]
    %v109 = vld [vmem:[#allocation7 + $0x1f8] sm:$0xff]
    %v110 = vld [vmem:[#allocation2] sm:$0xff]
    %v111 = vld [vmem:[#allocation3] sm:$0xff]
    %v112 = vld [vmem:[#allocation4] sm:$0xff]
    %v113 = vld [vmem:[#allocation4 + $0x8] sm:$0xff]
    %v114 = vld [vmem:[#allocation4 + $0x10] sm:$0xff]
    %v115 = vld [vmem:[#allocation4 + $0x18] sm:$0xff]
    %116 = vmatprep.subr.mxu0 %v47
    %117 = vmatpush1.msra.mxu0 %v46
    %118 = vmatprep.subr.mxu0 %v51
    %119 = vmatpush1.msra.mxu0 %v50
    %120 = vmatprep.subr.mxu0 %v55
    %121 = vmatpush1.msra.mxu0 %v54
    %122 = vmatprep.subr.mxu0 %v59
    %123 = vmatpush1.msra.mxu0 %v58
    %124 = vmatprep.subr.mxu0 %v63
    %125 = vmatpush1.msra.mxu0 %v62
    %126 = vmatprep.subr.mxu0 %v67
    %127 = vmatpush1.msra.mxu0 %v66
    %128 = vmatprep.subr.mxu0 %v71
    %129 = vmatpush1.msra.mxu0 %v70
    %130 = vmatprep.subr.mxu0 %v75
    %131 = vmatpush1.msra.mxu0 %v74
    %132 = vmatprep.subr.mxu0 %v79
    %133 = vmatpush1.msra.mxu0 %v78
    %134 = vmatprep.subr.mxu0 %v83
    %135 = vmatpush1.msra.mxu0 %v82
    %136 = vmatprep.subr.mxu0 %v87
    %137 = vmatpush1.msra.mxu0 %v86
    %138 = vmatprep.subr.mxu0 %v91
    %139 = vmatpush1.msra.mxu0 %v90
    %140 = vmatprep.subr.mxu0 %v95
    %141 = vmatpush1.msra.mxu0 %v94
    %142 = vmatprep.subr.mxu0 %v99
    %143 = vmatpush1.msra.mxu0 %v98
    %144 = vmatprep.subr.mxu0 %v103
    %145 = vmatpush1.msra.mxu0 %v102
    %146 = vmatprep.subr.mxu0 %v107
    %147 = vmatpush1.msra.mxu0 %v106
    %148 = vmatprep.subr.mxu0 0.0
    %149 = vmatpush1.msra.mxu0 0.0
    %150 = vmatprep.subr.mxu0 0.0
    %151 = vmatpush1.msra.mxu0 0.0
    %152 = vmatprep.subr.mxu0 0.0
    %153 = vmatpush1.msra.mxu0 0.0
    %154 = vmatprep.subr.mxu0 0.0
    %155 = vmatpush1.msra.mxu0 0.0
    %156 = vmatprep.subr.mxu0 0.0
    %157 = vmatpush1.msra.mxu0 0.0
    %158 = vmatprep.subr.mxu0 0.0
    %159 = vmatpush1.msra.mxu0 0.0
    %160 = vmatprep.subr.mxu0 0.0
    %161 = vmatpush1.msra.mxu0 0.0
    %162 = vmatprep.subr.mxu0 0.0
    %163 = vmatpush1.msra.mxu0 0.0
    %164 = vmatprep.subr.mxu0 0.0
    %165 = vmatpush1.msra.mxu0 0.0
    %166 = vmatprep.subr.mxu0 0.0
    %167 = vmatpush1.msra.mxu0 0.0
    %168 = vmatprep.subr.mxu0 0.0
    %169 = vmatpush1.msra.mxu0 0.0
    %170 = vmatprep.subr.mxu0 0.0
    %171 = vmatpush1.msra.mxu0 0.0
    %172 = vmatprep.subr.mxu0 0.0
    %173 = vmatpush1.msra.mxu0 0.0
    %174 = vmatprep.subr.mxu0 0.0
    %175 = vmatpush1.msra.mxu0 0.0
    %176 = vmatprep.subr.mxu0 0.0
    %177 = vmatpush1.msra.mxu0 0.0
    %178 = vmatprep.subr.mxu0 0.0
    %179 = vmatpush1.msra.mxu0 0.0
    %180 = vmatprep.mubr.f32.mxu0 0.0
    %181 = vmatmul.mubr.f32.gmra.mrb[0].mxu0 %v110
    %v182 = vpop.f32.mrb[0].mxu0
    %v183 = vadd.f32 0.0, %v182
    %v184 = vpop.f32.mrb[0].mxu0
    %v185 = vadd.f32 0.0, %v184
    %186 = vdwg.mxu0
    %187 = vmatprep.subr.mxu0 %v49
    %188 = vmatpush1.msra.mxu0 %v48
    %189 = vmatprep.subr.mxu0 %v53
    %190 = vmatpush1.msra.mxu0 %v52
    %191 = vmatprep.subr.mxu0 %v57
    %192 = vmatpush1.msra.mxu0 %v56
    %193 = vmatprep.subr.mxu0 %v61
    %194 = vmatpush1.msra.mxu0 %v60
    %195 = vmatprep.subr.mxu0 %v65
    %196 = vmatpush1.msra.mxu0 %v64
    %197 = vmatprep.subr.mxu0 %v69
    %198 = vmatpush1.msra.mxu0 %v68
    %199 = vmatprep.subr.mxu0 %v73
    %200 = vmatpush1.msra.mxu0 %v72
    %201 = vmatprep.subr.mxu0 %v77
    %202 = vmatpush1.msra.mxu0 %v76
    %203 = vmatprep.subr.mxu0 %v81
    %204 = vmatpush1.msra.mxu0 %v80
    %205 = vmatprep.subr.mxu0 %v85
    %206 = vmatpush1.msra.mxu0 %v84
    %207 = vmatprep.subr.mxu0 %v89
    %208 = vmatpush1.msra.mxu0 %v88
    %209 = vmatprep.subr.mxu0 %v93
    %210 = vmatpush1.msra.mxu0 %v92
    %211 = vmatprep.subr.mxu0 %v97
    %212 = vmatpush1.msra.mxu0 %v96
    %213 = vmatprep.subr.mxu0 %v101
    %214 = vmatpush1.msra.mxu0 %v100
    %215 = vmatprep.subr.mxu0 %v105
    %216 = vmatpush1.msra.mxu0 %v104
    %217 = vmatprep.subr.mxu0 %v109
    %218 = vmatpush1.msra.mxu0 %v108
    %219 = vmatprep.subr.mxu0 0.0
    %220 = vmatpush1.msra.mxu0 0.0
    %221 = vmatprep.subr.mxu0 0.0
    %222 = vmatpush1.msra.mxu0 0.0
    %223 = vmatprep.subr.mxu0 0.0
    %224 = vmatpush1.msra.mxu0 0.0
    %225 = vmatprep.subr.mxu0 0.0
    %226 = vmatpush1.msra.mxu0 0.0
    %227 = vmatprep.subr.mxu0 0.0
    %228 = vmatpush1.msra.mxu0 0.0
    %229 = vmatprep.subr.mxu0 0.0
    %230 = vmatpush1.msra.mxu0 0.0
    %231 = vmatprep.subr.mxu0 0.0
    %232 = vmatpush1.msra.mxu0 0.0
    %233 = vmatprep.subr.mxu0 0.0
    %234 = vmatpush1.msra.mxu0 0.0
    %235 = vmatprep.subr.mxu0 0.0
    %236 = vmatpush1.msra.mxu0 0.0
    %237 = vmatprep.subr.mxu0 0.0
    %238 = vmatpush1.msra.mxu0 0.0
    %239 = vmatprep.subr.mxu0 0.0
    %240 = vmatpush1.msra.mxu0 0.0
    %241 = vmatprep.subr.mxu0 0.0
    %242 = vmatpush1.msra.mxu0 0.0
    %243 = vmatprep.subr.mxu0 0.0
    %244 = vmatpush1.msra.mxu0 0.0
    %245 = vmatprep.subr.mxu0 0.0
    %246 = vmatpush1.msra.mxu0 0.0
    %247 = vmatprep.subr.mxu0 0.0
    %248 = vmatpush1.msra.mxu0 0.0
    %249 = vmatprep.subr.mxu0 0.0
    %250 = vmatpush1.msra.mxu0 0.0
    %251 = vmatprep.mubr.f32.mxu0 0.0
    %252 = vmatmul.mubr.f32.gmra.mrb[0].mxu0 %v110
    %v253 = vpop.f32.mrb[0].mxu0
    %v254 = vadd.f32 0.0, %v253
    %v255 = vpop.f32.mrb[0].mxu0
    %v256 = vadd.f32 0.0, %v255
    %257 = vdwg.mxu0
    %v258 = vadd.f32 %v112, %v183
    %v259 = vadd.f32 %v113, %v185
    %v260 = vadd.f32 %v114, %v254
    %v261 = vadd.f32 %v115, %v256
    %v262 = vtanh.pop %v258
    %v263 = vtanh.pop %v259
    %v264 = vtanh.pop %v260
    %v265 = vtanh.pop %v261
    %v266 = vmul.f32 %v262, 0.5
    %v267 = vmul.f32 %v263, 0.5
    %v268 = vmul.f32 %v265, 0.5
    %v269 = vadd.f32 %v266, 0.5
    %v270 = vadd.f32 %v267, 0.5
    %v271 = vadd.f32 %v268, 0.5
    %v272 = vmul.f32 %v270, %v111
    %v273 = vmul.f32 %v269, %v264
    %v274 = vadd.f32 %v272, %v273
    %v275 = vtanh.pop %v274
    %v276 = vmul.f32 %v271, %v275
    %s277 = scalar_lea.vmem [#allocation4], 32
    %v278 = vld [vmem:[%s277] sm:$0xff]
    %v279 = vld [vmem:[%s277 + $0x8] sm:$0xff]
    %v280 = vld [vmem:[%s277 + $0x10] sm:$0xff]
    %v281 = vld [vmem:[%s277 + $0x18] sm:$0xff]
    %282 = vmatprep.subr.mxu0 %v47
    %283 = vmatpush1.msra.mxu0 %v46
    %284 = vmatprep.subr.mxu0 %v51
    %285 = vmatpush1.msra.mxu0 %v50
    %286 = vmatprep.subr.mxu0 %v55
    %287 = vmatpush1.msra.mxu0 %v54
    %288 = vmatprep.subr.mxu0 %v59
    %289 = vmatpush1.msra.mxu0 %v58
    %290 = vmatprep.subr.mxu0 %v63
    %291 = vmatpush1.msra.mxu0 %v62
    %292 = vmatprep.subr.mxu0 %v67
    %293 = vmatpush1.msra.mxu0 %v66
    %294 = vmatprep.subr.mxu0 %v71
    %295 = vmatpush1.msra.mxu0 %v70
    %296 = vmatprep.subr.mxu0 %v75
    %297 = vmatpush1.msra.mxu0 %v74
    %298 = vmatprep.subr.mxu0 %v79
    %299 = vmatpush1.msra.mxu0 %v78
    %300 = vmatprep.subr.mxu0 %v83
    %301 = vmatpush1.msra.mxu0 %v82
    %302 = vmatprep.subr.mxu0 %v87
    %303 = vmatpush1.msra.mxu0 %v86
    %304 = vmatprep.subr.mxu0 %v91
    %305 = vmatpush1.msra.mxu0 %v90
    %306 = vmatprep.subr.mxu0 %v95
    %307 = vmatpush1.msra.mxu0 %v94
    %308 = vmatprep.subr.mxu0 %v99
    %309 = vmatpush1.msra.mxu0 %v98
    %310 = vmatprep.subr.mxu0 %v103
    %311 = vmatpush1.msra.mxu0 %v102
    %312 = vmatprep.subr.mxu0 %v107
    %313 = vmatpush1.msra.mxu0 %v106
    %314 = vmatprep.subr.mxu0 0.0
    %315 = vmatpush1.msra.mxu0 0.0
    %316 = vmatprep.subr.mxu0 0.0
    %317 = vmatpush1.msra.mxu0 0.0
    %318 = vmatprep.subr.mxu0 0.0
    %319 = vmatpush1.msra.mxu0 0.0
    %320 = vmatprep.subr.mxu0 0.0
    %321 = vmatpush1.msra.mxu0 0.0
    %322 = vmatprep.subr.mxu0 0.0
    %323 = vmatpush1.msra.mxu0 0.0
    %324 = vmatprep.subr.mxu0 0.0
    %325 = vmatpush1.msra.mxu0 0.0
    %326 = vmatprep.subr.mxu0 0.0
    %327 = vmatpush1.msra.mxu0 0.0
    %328 = vmatprep.subr.mxu0 0.0
    %329 = vmatpush1.msra.mxu0 0.0
    %330 = vmatprep.subr.mxu0 0.0
    %331 = vmatpush1.msra.mxu0 0.0
    %332 = vmatprep.subr.mxu0 0.0
    %333 = vmatpush1.msra.mxu0 0.0
    %334 = vmatprep.subr.mxu0 0.0
    %335 = vmatpush1.msra.mxu0 0.0
    %336 = vmatprep.subr.mxu0 0.0
    %337 = vmatpush1.msra.mxu0 0.0
    %338 = vmatprep.subr.mxu0 0.0
    %339 = vmatpush1.msra.mxu0 0.0
    %340 = vmatprep.subr.mxu0 0.0
    %341 = vmatpush1.msra.mxu0 0.0
    %342 = vmatprep.subr.mxu0 0.0
    %343 = vmatpush1.msra.mxu0 0.0
    %344 = vmatprep.subr.mxu0 0.0
    %345 = vmatpush1.msra.mxu0 0.0
    %346 = vmatprep.mubr.f32.mxu0 0.0
    %347 = vmatmul.mubr.f32.gmra.mrb[0].mxu0 %v276
    %v348 = vpop.f32.mrb[0].mxu0
    %v349 = vadd.f32 0.0, %v348
    %v350 = vpop.f32.mrb[0].mxu0
    %v351 = vadd.f32 0.0, %v350
    %352 = vdwg.mxu0
    %353 = vmatprep.subr.mxu0 %v49
    %354 = vmatpush1.msra.mxu0 %v48
    %355 = vmatprep.subr.mxu0 %v53
    %356 = vmatpush1.msra.mxu0 %v52
    %357 = vmatprep.subr.mxu0 %v57
    %358 = vmatpush1.msra.mxu0 %v56
    %359 = vmatprep.subr.mxu0 %v61
    %360 = vmatpush1.msra.mxu0 %v60
    %361 = vmatprep.subr.mxu0 %v65
    %362 = vmatpush1.msra.mxu0 %v64
    %363 = vmatprep.subr.mxu0 %v69
    %364 = vmatpush1.msra.mxu0 %v68
    %365 = vmatprep.subr.mxu0 %v73
    %366 = vmatpush1.msra.mxu0 %v72
    %367 = vmatprep.subr.mxu0 %v77
    %368 = vmatpush1.msra.mxu0 %v76
    %369 = vmatprep.subr.mxu0 %v81
    %370 = vmatpush1.msra.mxu0 %v80
    %371 = vmatprep.subr.mxu0 %v85
    %372 = vmatpush1.msra.mxu0 %v84
    %373 = vmatprep.subr.mxu0 %v89
    %374 = vmatpush1.msra.mxu0 %v88
    %375 = vmatprep.subr.mxu0 %v93
    %376 = vmatpush1.msra.mxu0 %v92
    %377 = vmatprep.subr.mxu0 %v97
    %378 = vmatpush1.msra.mxu0 %v96
    %379 = vmatprep.subr.mxu0 %v101
    %380 = vmatpush1.msra.mxu0 %v100
    %381 = vmatprep.subr.mxu0 %v105
    %382 = vmatpush1.msra.mxu0 %v104
    %383 = vmatprep.subr.mxu0 %v109
    %384 = vmatpush1.msra.mxu0 %v108
    %385 = vmatprep.subr.mxu0 0.0
    %386 = vmatpush1.msra.mxu0 0.0
    %387 = vmatprep.subr.mxu0 0.0
    %388 = vmatpush1.msra.mxu0 0.0
    %389 = vmatprep.subr.mxu0 0.0
    %390 = vmatpush1.msra.mxu0 0.0
    %391 = vmatprep.subr.mxu0 0.0
    %392 = vmatpush1.msra.mxu0 0.0
    %393 = vmatprep.subr.mxu0 0.0
    %394 = vmatpush1.msra.mxu0 0.0
    %395 = vmatprep.subr.mxu0 0.0
    %396 = vmatpush1.msra.mxu0 0.0
    %397 = vmatprep.subr.mxu0 0.0
    %398 = vmatpush1.msra.mxu0 0.0
    %399 = vmatprep.subr.mxu0 0.0
    %400 = vmatpush1.msra.mxu0 0.0
    %401 = vmatprep.subr.mxu0 0.0
    %402 = vmatpush1.msra.mxu0 0.0
    %403 = vmatprep.subr.mxu0 0.0
    %404 = vmatpush1.msra.mxu0 0.0
    %405 = vmatprep.subr.mxu0 0.0
    %406 = vmatpush1.msra.mxu0 0.0
    %407 = vmatprep.subr.mxu0 0.0
    %408 = vmatpush1.msra.mxu0 0.0
    %409 = vmatprep.subr.mxu0 0.0
    %410 = vmatpush1.msra.mxu0 0.0
    %411 = vmatprep.subr.mxu0 0.0
    %412 = vmatpush1.msra.mxu0 0.0
    %413 = vmatprep.subr.mxu0 0.0
    %414 = vmatpush1.msra.mxu0 0.0
    %415 = vmatprep.subr.mxu0 0.0
    %416 = vmatpush1.msra.mxu0 0.0
    %417 = vmatprep.mubr.f32.mxu0 0.0
    %418 = vmatmul.mubr.f32.gmra.mrb[0].mxu0 %v276
    %v419 = vpop.f32.mrb[0].mxu0
    %v420 = vadd.f32 0.0, %v419
    %v421 = vpop.f32.mrb[0].mxu0
    %v422 = vadd.f32 0.0, %v421
    %423 = vdwg.mxu0
    %v424 = vadd.f32 %v278, %v349
    %v425 = vadd.f32 %v279, %v351
    %v426 = vadd.f32 %v280, %v420
    %v427 = vadd.f32 %v281, %v422
    %v428 = vtanh.pop %v424
    %v429 = vtanh.pop %v425
    %v430 = vtanh.pop %v426
    %v431 = vtanh.pop %v427
    %v432 = vmul.f32 %v428, 0.5
    %v433 = vmul.f32 %v429, 0.5
    %v434 = vmul.f32 %v431, 0.5
    %v435 = vadd.f32 %v432, 0.5
    %v436 = vadd.f32 %v433, 0.5
    %v437 = vadd.f32 %v434, 0.5
    %v438 = vmul.f32 %v436, %v274
    %v439 = vmul.f32 %v435, %v430
    %v440 = vadd.f32 %v438, %v439
    %v441 = vtanh.pop %v440
    %v442 = vmul.f32 %v437, %v441
    %s443 = scalar_lea.vmem [#allocation4], 64
    %v444 = vld [vmem:[%s443] sm:$0xff]
    %v445 = vld [vmem:[%s443 + $0x8] sm:$0xff]
    %v446 = vld [vmem:[%s443 + $0x10] sm:$0xff]
    %v447 = vld [vmem:[%s443 + $0x18] sm:$0xff]
    %448 = vmatprep.subr.mxu0 %v47
    %449 = vmatpush1.msra.mxu0 %v46
    %450 = vmatprep.subr.mxu0 %v51
    %451 = vmatpush1.msra.mxu0 %v50
    %452 = vmatprep.subr.mxu0 %v55
    %453 = vmatpush1.msra.mxu0 %v54
    %454 = vmatprep.subr.mxu0 %v59
    %455 = vmatpush1.msra.mxu0 %v58
    %456 = vmatprep.subr.mxu0 %v63
    %457 = vmatpush1.msra.mxu0 %v62
    %458 = vmatprep.subr.mxu0 %v67
    %459 = vmatpush1.msra.mxu0 %v66
    %460 = vmatprep.subr.mxu0 %v71
    %461 = vmatpush1.msra.mxu0 %v70
    %462 = vmatprep.subr.mxu0 %v75
    %463 = vmatpush1.msra.mxu0 %v74
    %464 = vmatprep.subr.mxu0 %v79
    %465 = vmatpush1.msra.mxu0 %v78
    %466 = vmatprep.subr.mxu0 %v83
    %467 = vmatpush1.msra.mxu0 %v82
    %468 = vmatprep.subr.mxu0 %v87
    %469 = vmatpush1.msra.mxu0 %v86
    %470 = vmatprep.subr.mxu0 %v91
    %471 = vmatpush1.msra.mxu0 %v90
    %472 = vmatprep.subr.mxu0 %v95
    %473 = vmatpush1.msra.mxu0 %v94
    %474 = vmatprep.subr.mxu0 %v99
    %475 = vmatpush1.msra.mxu0 %v98
    %476 = vmatprep.subr.mxu0 %v103
    %477 = vmatpush1.msra.mxu0 %v102
    %478 = vmatprep.subr.mxu0 %v107
    %479 = vmatpush1.msra.mxu0 %v106
    %480 = vmatprep.subr.mxu0 0.0
    %481 = vmatpush1.msra.mxu0 0.0
    %482 = vmatprep.subr.mxu0 0.0
    %483 = vmatpush1.msra.mxu0 0.0
    %484 = vmatprep.subr.mxu0 0.0
    %485 = vmatpush1.msra.mxu0 0.0
    %486 = vmatprep.subr.mxu0 0.0
    %487 = vmatpush1.msra.mxu0 0.0
    %488 = vmatprep.subr.mxu0 0.0
    %489 = vmatpush1.msra.mxu0 0.0
    %490 = vmatprep.subr.mxu0 0.0
    %491 = vmatpush1.msra.mxu0 0.0
    %492 = vmatprep.subr.mxu0 0.0
    %493 = vmatpush1.msra.mxu0 0.0
    %494 = vmatprep.subr.mxu0 0.0
    %495 = vmatpush1.msra.mxu0 0.0
    %496 = vmatprep.subr.mxu0 0.0
    %497 = vmatpush1.msra.mxu0 0.0
    %498 = vmatprep.subr.mxu0 0.0
    %499 = vmatpush1.msra.mxu0 0.0
    %500 = vmatprep.subr.mxu0 0.0
    %501 = vmatpush1.msra.mxu0 0.0
    %502 = vmatprep.subr.mxu0 0.0
    %503 = vmatpush1.msra.mxu0 0.0
    %504 = vmatprep.subr.mxu0 0.0
    %505 = vmatpush1.msra.mxu0 0.0
    %506 = vmatprep.subr.mxu0 0.0
    %507 = vmatpush1.msra.mxu0 0.0
    %508 = vmatprep.subr.mxu0 0.0
    %509 = vmatpush1.msra.mxu0 0.0
    %510 = vmatprep.subr.mxu0 0.0
    %511 = vmatpush1.msra.mxu0 0.0
    %512 = vmatprep.mubr.f32.mxu0 0.0
    %513 = vmatmul.mubr.f32.gmra.mrb[0].mxu0 %v442
    %v514 = vpop.f32.mrb[0].mxu0
    %v515 = vadd.f32 0.0, %v514
    %v516 = vpop.f32.mrb[0].mxu0
    %v517 = vadd.f32 0.0, %v516
    %518 = vdwg.mxu0
    %519 = vmatprep.subr.mxu0 %v49
    %520 = vmatpush1.msra.mxu0 %v48
    %521 = vmatprep.subr.mxu0 %v53
    %522 = vmatpush1.msra.mxu0 %v52
    %523 = vmatprep.subr.mxu0 %v57
    %524 = vmatpush1.msra.mxu0 %v56
    %525 = vmatprep.subr.mxu0 %v61
    %526 = vmatpush1.msra.mxu0 %v60
    %527 = vmatprep.subr.mxu0 %v65
    %528 = vmatpush1.msra.mxu0 %v64
    %529 = vmatprep.subr.mxu0 %v69
    %530 = vmatpush1.msra.mxu0 %v68
    %531 = vmatprep.subr.mxu0 %v73
    %532 = vmatpush1.msra.mxu0 %v72
    %533 = vmatprep.subr.mxu0 %v77
    %534 = vmatpush1.msra.mxu0 %v76
    %535 = vmatprep.subr.mxu0 %v81
    %536 = vmatpush1.msra.mxu0 %v80
    %537 = vmatprep.subr.mxu0 %v85
    %538 = vmatpush1.msra.mxu0 %v84
    %539 = vmatprep.subr.mxu0 %v89
    %540 = vmatpush1.msra.mxu0 %v88
    %541 = vmatprep.subr.mxu0 %v93
    %542 = vmatpush1.msra.mxu0 %v92
    %543 = vmatprep.subr.mxu0 %v97
    %544 = vmatpush1.msra.mxu0 %v96
    %545 = vmatprep.subr.mxu0 %v101
    %546 = vmatpush1.msra.mxu0 %v100
    %547 = vmatprep.subr.mxu0 %v105
    %548 = vmatpush1.msra.mxu0 %v104
    %549 = vmatprep.subr.mxu0 %v109
    %550 = vmatpush1.msra.mxu0 %v108
    %551 = vmatprep.subr.mxu0 0.0
    %552 = vmatpush1.msra.mxu0 0.0
    %553 = vmatprep.subr.mxu0 0.0
    %554 = vmatpush1.msra.mxu0 0.0
    %555 = vmatprep.subr.mxu0 0.0
    %556 = vmatpush1.msra.mxu0 0.0
    %557 = vmatprep.subr.mxu0 0.0
    %558 = vmatpush1.msra.mxu0 0.0
    %559 = vmatprep.subr.mxu0 0.0
    %560 = vmatpush1.msra.mxu0 0.0
    %561 = vmatprep.subr.mxu0 0.0
    %562 = vmatpush1.msra.mxu0 0.0
    %563 = vmatprep.subr.mxu0 0.0
    %564 = vmatpush1.msra.mxu0 0.0
    %565 = vmatprep.subr.mxu0 0.0
    %566 = vmatpush1.msra.mxu0 0.0
    %567 = vmatprep.subr.mxu0 0.0
    %568 = vmatpush1.msra.mxu0 0.0
    %569 = vmatprep.subr.mxu0 0.0
    %570 = vmatpush1.msra.mxu0 0.0
    %571 = vmatprep.subr.mxu0 0.0
    %572 = vmatpush1.msra.mxu0 0.0
    %573 = vmatprep.subr.mxu0 0.0
    %574 = vmatpush1.msra.mxu0 0.0
    %575 = vmatprep.subr.mxu0 0.0
    %576 = vmatpush1.msra.mxu0 0.0
    %577 = vmatprep.subr.mxu0 0.0
    %578 = vmatpush1.msra.mxu0 0.0
    %579 = vmatprep.subr.mxu0 0.0
    %580 = vmatpush1.msra.mxu0 0.0
    %581 = vmatprep.subr.mxu0 0.0
    %582 = vmatpush1.msra.mxu0 0.0
    %583 = vmatprep.mubr.f32.mxu0 0.0
    %584 = vmatmul.mubr.f32.gmra.mrb[0].mxu0 %v442
    %v585 = vpop.f32.mrb[0].mxu0
    %v586 = vadd.f32 0.0, %v585
    %v587 = vpop.f32.mrb[0].mxu0
    %v588 = vadd.f32 0.0, %v587
    %589 = vdwg.mxu0
    %v590 = vadd.f32 %v444, %v515
    %v591 = vadd.f32 %v445, %v517
    %v592 = vadd.f32 %v446, %v586
    %v593 = vadd.f32 %v447, %v588
    %v594 = vtanh.pop %v590
    %v595 = vtanh.pop %v591
    %v596 = vtanh.pop %v592
    %v597 = vtanh.pop %v593
    %v598 = vmul.f32 %v594, 0.5
    %v599 = vmul.f32 %v595, 0.5
    %v600 = vmul.f32 %v597, 0.5
    %v601 = vadd.f32 %v598, 0.5
    %v602 = vadd.f32 %v599, 0.5
    %v603 = vadd.f32 %v600, 0.5
    %v604 = vmul.f32 %v602, %v440
    %v605 = vmul.f32 %v601, %v596
    %v606 = vadd.f32 %v604, %v605
    %v607 = vtanh.pop %v606
    %v608 = vmul.f32 %v603, %v607
    %s609 = scalar_lea.vmem [#allocation4], 96
    %v610 = vld [vmem:[%s609] sm:$0xff]
    %v611 = vld [vmem:[%s609 + $0x8] sm:$0xff]
    %v612 = vld [vmem:[%s609 + $0x10] sm:$0xff]
    %v613 = vld [vmem:[%s609 + $0x18] sm:$0xff]
    %614 = vmatprep.subr.mxu0 %v47
    %615 = vmatpush1.msra.mxu0 %v46
    %616 = vmatprep.subr.mxu0 %v51
    %617 = vmatpush1.msra.mxu0 %v50
    %618 = vmatprep.subr.mxu0 %v55
    %619 = vmatpush1.msra.mxu0 %v54
    %620 = vmatprep.subr.mxu0 %v59
    %621 = vmatpush1.msra.mxu0 %v58
    %622 = vmatprep.subr.mxu0 %v63
    %623 = vmatpush1.msra.mxu0 %v62
    %624 = vmatprep.subr.mxu0 %v67
    %625 = vmatpush1.msra.mxu0 %v66
    %626 = vmatprep.subr.mxu0 %v71
    %627 = vmatpush1.msra.mxu0 %v70
    %628 = vmatprep.subr.mxu0 %v75
    %629 = vmatpush1.msra.mxu0 %v74
    %630 = vmatprep.subr.mxu0 %v79
    %631 = vmatpush1.msra.mxu0 %v78
    %632 = vmatprep.subr.mxu0 %v83
    %633 = vmatpush1.msra.mxu0 %v82
    %634 = vmatprep.subr.mxu0 %v87
    %635 = vmatpush1.msra.mxu0 %v86
    %636 = vmatprep.subr.mxu0 %v91
    %637 = vmatpush1.msra.mxu0 %v90
    %638 = vmatprep.subr.mxu0 %v95
    %639 = vmatpush1.msra.mxu0 %v94
    %640 = vmatprep.subr.mxu0 %v99
    %641 = vmatpush1.msra.mxu0 %v98
    %642 = vmatprep.subr.mxu0 %v103
    %643 = vmatpush1.msra.mxu0 %v102
    %644 = vmatprep.subr.mxu0 %v107
    %645 = vmatpush1.msra.mxu0 %v106
    %646 = vmatprep.subr.mxu0 0.0
    %647 = vmatpush1.msra.mxu0 0.0
    %648 = vmatprep.subr.mxu0 0.0
    %649 = vmatpush1.msra.mxu0 0.0
    %650 = vmatprep.subr.mxu0 0.0
    %651 = vmatpush1.msra.mxu0 0.0
    %652 = vmatprep.subr.mxu0 0.0
    %653 = vmatpush1.msra.mxu0 0.0
    %654 = vmatprep.subr.mxu0 0.0
    %655 = vmatpush1.msra.mxu0 0.0
    %656 = vmatprep.subr.mxu0 0.0
    %657 = vmatpush1.msra.mxu0 0.0
    %658 = vmatprep.subr.mxu0 0.0
    %659 = vmatpush1.msra.mxu0 0.0
    %660 = vmatprep.subr.mxu0 0.0
    %661 = vmatpush1.msra.mxu0 0.0
    %662 = vmatprep.subr.mxu0 0.0
    %663 = vmatpush1.msra.mxu0 0.0
    %664 = vmatprep.subr.mxu0 0.0
    %665 = vmatpush1.msra.mxu0 0.0
    %666 = vmatprep.subr.mxu0 0.0
    %667 = vmatpush1.msra.mxu0 0.0
    %668 = vmatprep.subr.mxu0 0.0
    %669 = vmatpush1.msra.mxu0 0.0
    %670 = vmatprep.subr.mxu0 0.0
    %671 = vmatpush1.msra.mxu0 0.0
    %672 = vmatprep.subr.mxu0 0.0
    %673 = vmatpush1.msra.mxu0 0.0
    %674 = vmatprep.subr.mxu0 0.0
    %675 = vmatpush1.msra.mxu0 0.0
    %676 = vmatprep.subr.mxu0 0.0
    %677 = vmatpush1.msra.mxu0 0.0
    %678 = vmatprep.mubr.f32.mxu0 0.0
    %679 = vmatmul.mubr.f32.gmra.mrb[0].mxu0 %v608
    %v680 = vpop.f32.mrb[0].mxu0
    %v681 = vadd.f32 0.0, %v680
    %v682 = vpop.f32.mrb[0].mxu0
    %v683 = vadd.f32 0.0, %v682
    %684 = vdwg.mxu0
    %685 = vmatprep.subr.mxu0 %v49
    %686 = vmatpush1.msra.mxu0 %v48
    %687 = vmatprep.subr.mxu0 %v53
    %688 = vmatpush1.msra.mxu0 %v52
    %689 = vmatprep.subr.mxu0 %v57
    %690 = vmatpush1.msra.mxu0 %v56
    %691 = vmatprep.subr.mxu0 %v61
    %692 = vmatpush1.msra.mxu0 %v60
    %693 = vmatprep.subr.mxu0 %v65
    %694 = vmatpush1.msra.mxu0 %v64
    %695 = vmatprep.subr.mxu0 %v69
    %696 = vmatpush1.msra.mxu0 %v68
    %697 = vmatprep.subr.mxu0 %v73
    %698 = vmatpush1.msra.mxu0 %v72
    %699 = vmatprep.subr.mxu0 %v77
    %700 = vmatpush1.msra.mxu0 %v76
    %701 = vmatprep.subr.mxu0 %v81
    %702 = vmatpush1.msra.mxu0 %v80
    %703 = vmatprep.subr.mxu0 %v85
    %704 = vmatpush1.msra.mxu0 %v84
    %705 = vmatprep.subr.mxu0 %v89
    %706 = vmatpush1.msra.mxu0 %v88
    %707 = vmatprep.subr.mxu0 %v93
    %708 = vmatpush1.msra.mxu0 %v92
    %709 = vmatprep.subr.mxu0 %v97
    %710 = vmatpush1.msra.mxu0 %v96
    %711 = vmatprep.subr.mxu0 %v101
    %712 = vmatpush1.msra.mxu0 %v100
    %713 = vmatprep.subr.mxu0 %v105
    %714 = vmatpush1.msra.mxu0 %v104
    %715 = vmatprep.subr.mxu0 %v109
    %716 = vmatpush1.msra.mxu0 %v108
    %717 = vmatprep.subr.mxu0 0.0
    %718 = vmatpush1.msra.mxu0 0.0
    %719 = vmatprep.subr.mxu0 0.0
    %720 = vmatpush1.msra.mxu0 0.0
    %721 = vmatprep.subr.mxu0 0.0
    %722 = vmatpush1.msra.mxu0 0.0
    %723 = vmatprep.subr.mxu0 0.0
    %724 = vmatpush1.msra.mxu0 0.0
    %725 = vmatprep.subr.mxu0 0.0
    %726 = vmatpush1.msra.mxu0 0.0
    %727 = vmatprep.subr.mxu0 0.0
    %728 = vmatpush1.msra.mxu0 0.0
    %729 = vmatprep.subr.mxu0 0.0
    %730 = vmatpush1.msra.mxu0 0.0
    %731 = vmatprep.subr.mxu0 0.0
    %732 = vmatpush1.msra.mxu0 0.0
    %733 = vmatprep.subr.mxu0 0.0
    %734 = vmatpush1.msra.mxu0 0.0
    %735 = vmatprep.subr.mxu0 0.0
    %736 = vmatpush1.msra.mxu0 0.0
    %737 = vmatprep.subr.mxu0 0.0
    %738 = vmatpush1.msra.mxu0 0.0
    %739 = vmatprep.subr.mxu0 0.0
    %740 = vmatpush1.msra.mxu0 0.0
    %741 = vmatprep.subr.mxu0 0.0
    %742 = vmatpush1.msra.mxu0 0.0
    %743 = vmatprep.subr.mxu0 0.0
    %744 = vmatpush1.msra.mxu0 0.0
    %745 = vmatprep.subr.mxu0 0.0
    %746 = vmatpush1.msra.mxu0 0.0
    %747 = vmatprep.subr.mxu0 0.0
    %748 = vmatpush1.msra.mxu0 0.0
    %749 = vmatprep.mubr.f32.mxu0 0.0
    %750 = vmatmul.mubr.f32.gmra.mrb[0].mxu0 %v608
    %v751 = vpop.f32.mrb[0].mxu0
    %v752 = vadd.f32 0.0, %v751
    %v753 = vpop.f32.mrb[0].mxu0
    %v754 = vadd.f32 0.0, %v753
    %755 = vdwg.mxu0
    %v756 = vadd.f32 %v610, %v681
    %v757 = vadd.f32 %v611, %v683
    %v758 = vadd.f32 %v612, %v752
    %v759 = vadd.f32 %v613, %v754
    %v760 = vtanh.pop %v756
    %v761 = vtanh.pop %v757
    %v762 = vtanh.pop %v758
    %v763 = vtanh.pop %v759
    %v764 = vmul.f32 %v760, 0.5
    %v765 = vmul.f32 %v761, 0.5
    %v766 = vmul.f32 %v763, 0.5
    %v767 = vadd.f32 %v764, 0.5
    %v768 = vadd.f32 %v765, 0.5
    %v769 = vadd.f32 %v766, 0.5
    %v770 = vmul.f32 %v768, %v606
    %v771 = vmul.f32 %v767, %v762
    %v772 = vadd.f32 %v770, %v771
    %v773 = vtanh.pop %v772
    %v774 = vmul.f32 %v769, %v773
    %s775 = scalar_lea.vmem [#allocation4], 128
    %v776 = vld [vmem:[%s775] sm:$0xff]
    %v777 = vld [vmem:[%s775 + $0x8] sm:$0xff]
    %v778 = vld [vmem:[%s775 + $0x10] sm:$0xff]
    %v779 = vld [vmem:[%s775 + $0x18] sm:$0xff]
    %780 = vmatprep.subr.mxu0 %v47
    %781 = vmatpush1.msra.mxu0 %v46
    %782 = vmatprep.subr.mxu0 %v51
    %783 = vmatpush1.msra.mxu0 %v50
    %784 = vmatprep.subr.mxu0 %v55
    %785 = vmatpush1.msra.mxu0 %v54
    %786 = vmatprep.subr.mxu0 %v59
    %787 = vmatpush1.msra.mxu0 %v58
    %788 = vmatprep.subr.mxu0 %v63
    %789 = vmatpush1.msra.mxu0 %v62
    %790 = vmatprep.subr.mxu0 %v67
    %791 = vmatpush1.msra.mxu0 %v66
    %792 = vmatprep.subr.mxu0 %v71
    %793 = vmatpush1.msra.mxu0 %v70
    %794 = vmatprep.subr.mxu0 %v75
    %795 = vmatpush1.msra.mxu0 %v74
    %796 = vmatprep.subr.mxu0 %v79
    %797 = vmatpush1.msra.mxu0 %v78
    %798 = vmatprep.subr.mxu0 %v83
    %799 = vmatpush1.msra.mxu0 %v82
    %800 = vmatprep.subr.mxu0 %v87
    %801 = vmatpush1.msra.mxu0 %v86
    %802 = vmatprep.subr.mxu0 %v91
    %803 = vmatpush1.msra.mxu0 %v90
    %804 = vmatprep.subr.mxu0 %v95
    %805 = vmatpush1.msra.mxu0 %v94
    %806 = vmatprep.subr.mxu0 %v99
    %807 = vmatpush1.msra.mxu0 %v98
    %808 = vmatprep.subr.mxu0 %v103
    %809 = vmatpush1.msra.mxu0 %v102
    %810 = vmatprep.subr.mxu0 %v107
    %811 = vmatpush1.msra.mxu0 %v106
    %812 = vmatprep.subr.mxu0 0.0
    %813 = vmatpush1.msra.mxu0 0.0
    %814 = vmatprep.subr.mxu0 0.0
    %815 = vmatpush1.msra.mxu0 0.0
    %816 = vmatprep.subr.mxu0 0.0
    %817 = vmatpush1.msra.mxu0 0.0
    %818 = vmatprep.subr.mxu0 0.0
    %819 = vmatpush1.msra.mxu0 0.0
    %820 = vmatprep.subr.mxu0 0.0
    %821 = vmatpush1.msra.mxu0 0.0
    %822 = vmatprep.subr.mxu0 0.0
    %823 = vmatpush1.msra.mxu0 0.0
    %824 = vmatprep.subr.mxu0 0.0
    %825 = vmatpush1.msra.mxu0 0.0
    %826 = vmatprep.subr.mxu0 0.0
    %827 = vmatpush1.msra.mxu0 0.0
    %828 = vmatprep.subr.mxu0 0.0
    %829 = vmatpush1.msra.mxu0 0.0
    %830 = vmatprep.subr.mxu0 0.0
    %831 = vmatpush1.msra.mxu0 0.0
    %832 = vmatprep.subr.mxu0 0.0
    %833 = vmatpush1.msra.mxu0 0.0
    %834 = vmatprep.subr.mxu0 0.0
    %835 = vmatpush1.msra.mxu0 0.0
    %836 = vmatprep.subr.mxu0 0.0
    %837 = vmatpush1.msra.mxu0 0.0
    %838 = vmatprep.subr.mxu0 0.0
    %839 = vmatpush1.msra.mxu0 0.0
    %840 = vmatprep.subr.mxu0 0.0
    %841 = vmatpush1.msra.mxu0 0.0
    %842 = vmatprep.subr.mxu0 0.0
    %843 = vmatpush1.msra.mxu0 0.0
    %844 = vmatprep.mubr.f32.mxu0 0.0
    %845 = vmatmul.mubr.f32.gmra.mrb[0].mxu0 %v774
    %v846 = vpop.f32.mrb[0].mxu0
    %v847 = vadd.f32 0.0, %v846
    %v848 = vpop.f32.mrb[0].mxu0
    %v849 = vadd.f32 0.0, %v848
    %850 = vdwg.mxu0
    %851 = vmatprep.subr.mxu0 %v49
    %852 = vmatpush1.msra.mxu0 %v48
    %853 = vmatprep.subr.mxu0 %v53
    %854 = vmatpush1.msra.mxu0 %v52
    %855 = vmatprep.subr.mxu0 %v57
    %856 = vmatpush1.msra.mxu0 %v56
    %857 = vmatprep.subr.mxu0 %v61
    %858 = vmatpush1.msra.mxu0 %v60
    %859 = vmatprep.subr.mxu0 %v65
    %860 = vmatpush1.msra.mxu0 %v64
    %861 = vmatprep.subr.mxu0 %v69
    %862 = vmatpush1.msra.mxu0 %v68
    %863 = vmatprep.subr.mxu0 %v73
    %864 = vmatpush1.msra.mxu0 %v72
    %865 = vmatprep.subr.mxu0 %v77
    %866 = vmatpush1.msra.mxu0 %v76
    %867 = vmatprep.subr.mxu0 %v81
    %868 = vmatpush1.msra.mxu0 %v80
    %869 = vmatprep.subr.mxu0 %v85
    %870 = vmatpush1.msra.mxu0 %v84
    %871 = vmatprep.subr.mxu0 %v89
    %872 = vmatpush1.msra.mxu0 %v88
    %873 = vmatprep.subr.mxu0 %v93
    %874 = vmatpush1.msra.mxu0 %v92
    %875 = vmatprep.subr.mxu0 %v97
    %876 = vmatpush1.msra.mxu0 %v96
    %877 = vmatprep.subr.mxu0 %v101
    %878 = vmatpush1.msra.mxu0 %v100
    %879 = vmatprep.subr.mxu0 %v105
    %880 = vmatpush1.msra.mxu0 %v104
    %881 = vmatprep.subr.mxu0 %v109
    %882 = vmatpush1.msra.mxu0 %v108
    %883 = vmatprep.subr.mxu0 0.0
    %884 = vmatpush1.msra.mxu0 0.0
    %885 = vmatprep.subr.mxu0 0.0
    %886 = vmatpush1.msra.mxu0 0.0
    %887 = vmatprep.subr.mxu0 0.0
    %888 = vmatpush1.msra.mxu0 0.0
    %889 = vmatprep.subr.mxu0 0.0
    %890 = vmatpush1.msra.mxu0 0.0
    %891 = vmatprep.subr.mxu0 0.0
    %892 = vmatpush1.msra.mxu0 0.0
    %893 = vmatprep.subr.mxu0 0.0
    %894 = vmatpush1.msra.mxu0 0.0
    %895 = vmatprep.subr.mxu0 0.0
    %896 = vmatpush1.msra.mxu0 0.0
    %897 = vmatprep.subr.mxu0 0.0
    %898 = vmatpush1.msra.mxu0 0.0
    %899 = vmatprep.subr.mxu0 0.0
    %900 = vmatpush1.msra.mxu0 0.0
    %901 = vmatprep.subr.mxu0 0.0
    %902 = vmatpush1.msra.mxu0 0.0
    %903 = vmatprep.subr.mxu0 0.0
    %904 = vmatpush1.msra.mxu0 0.0
    %905 = vmatprep.subr.mxu0 0.0
    %906 = vmatpush1.msra.mxu0 0.0
    %907 = vmatprep.subr.mxu0 0.0
    %908 = vmatpush1.msra.mxu0 0.0
    %909 = vmatprep.subr.mxu0 0.0
    %910 = vmatpush1.msra.mxu0 0.0
    %911 = vmatprep.subr.mxu0 0.0
    %912 = vmatpush1.msra.mxu0 0.0
    %913 = vmatprep.subr.mxu0 0.0
    %914 = vmatpush1.msra.mxu0 0.0
    %915 = vmatprep.mubr.f32.mxu0 0.0
    %916 = vmatmul.mubr.f32.gmra.mrb[0].mxu0 %v774
    %v917 = vpop.f32.mrb[0].mxu0
    %v918 = vadd.f32 0.0, %v917
    %v919 = vpop.f32.mrb[0].mxu0
    %v920 = vadd.f32 0.0, %v919
    %921 = vdwg.mxu0
    %v922 = vadd.f32 %v776, %v847
    %v923 = vadd.f32 %v777, %v849
    %v924 = vadd.f32 %v778, %v918
    %v925 = vadd.f32 %v779, %v920
    %v926 = vtanh.pop %v922
    %v927 = vtanh.pop %v923
    %v928 = vtanh.pop %v924
    %v929 = vtanh.pop %v925
    %v930 = vmul.f32 %v926, 0.5
    %v931 = vmul.f32 %v927, 0.5
    %v932 = vmul.f32 %v929, 0.5
    %v933 = vadd.f32 %v930, 0.5
    %v934 = vadd.f32 %v931, 0.5
    %v935 = vadd.f32 %v932, 0.5
    %v936 = vmul.f32 %v934, %v772
    %v937 = vmul.f32 %v933, %v928
    %v938 = vadd.f32 %v936, %v937
    %v939 = vtanh.pop %v938
    %v940 = vmul.f32 %v935, %v939
    %s941 = scalar_lea.vmem [#allocation4], 160
    %v942 = vld [vmem:[%s941] sm:$0xff]
    %v943 = vld [vmem:[%s941 + $0x8] sm:$0xff]
    %v944 = vld [vmem:[%s941 + $0x10] sm:$0xff]
    %v945 = vld [vmem:[%s941 + $0x18] sm:$0xff]
    %946 = vmatprep.subr.mxu0 %v47
    %947 = vmatpush1.msra.mxu0 %v46
    %948 = vmatprep.subr.mxu0 %v51
    %949 = vmatpush1.msra.mxu0 %v50
    %950 = vmatprep.subr.mxu0 %v55
    %951 = vmatpush1.msra.mxu0 %v54
    %952 = vmatprep.subr.mxu0 %v59
    %953 = vmatpush1.msra.mxu0 %v58
    %954 = vmatprep.subr.mxu0 %v63
    %955 = vmatpush1.msra.mxu0 %v62
    %956 = vmatprep.subr.mxu0 %v67
    %957 = vmatpush1.msra.mxu0 %v66
    %958 = vmatprep.subr.mxu0 %v71
    %959 = vmatpush1.msra.mxu0 %v70
    %960 = vmatprep.subr.mxu0 %v75
    %961 = vmatpush1.msra.mxu0 %v74
    %962 = vmatprep.subr.mxu0 %v79
    %963 = vmatpush1.msra.mxu0 %v78
    %964 = vmatprep.subr.mxu0 %v83
    %965 = vmatpush1.msra.mxu0 %v82
    %966 = vmatprep.subr.mxu0 %v87
    %967 = vmatpush1.msra.mxu0 %v86
    %968 = vmatprep.subr.mxu0 %v91
    %969 = vmatpush1.msra.mxu0 %v90
    %970 = vmatprep.subr.mxu0 %v95
    %971 = vmatpush1.msra.mxu0 %v94
    %972 = vmatprep.subr.mxu0 %v99
    %973 = vmatpush1.msra.mxu0 %v98
    %974 = vmatprep.subr.mxu0 %v103
    %975 = vmatpush1.msra.mxu0 %v102
    %976 = vmatprep.subr.mxu0 %v107
    %977 = vmatpush1.msra.mxu0 %v106
    %978 = vmatprep.subr.mxu0 0.0
    %979 = vmatpush1.msra.mxu0 0.0
    %980 = vmatprep.subr.mxu0 0.0
    %981 = vmatpush1.msra.mxu0 0.0
    %982 = vmatprep.subr.mxu0 0.0
    %983 = vmatpush1.msra.mxu0 0.0
    %984 = vmatprep.subr.mxu0 0.0
    %985 = vmatpush1.msra.mxu0 0.0
    %986 = vmatprep.subr.mxu0 0.0
    %987 = vmatpush1.msra.mxu0 0.0
    %988 = vmatprep.subr.mxu0 0.0
    %989 = vmatpush1.msra.mxu0 0.0
    %990 = vmatprep.subr.mxu0 0.0
    %991 = vmatpush1.msra.mxu0 0.0
    %992 = vmatprep.subr.mxu0 0.0
    %993 = vmatpush1.msra.mxu0 0.0
    %994 = vmatprep.subr.mxu0 0.0
    %995 = vmatpush1.msra.mxu0 0.0
    %996 = vmatprep.subr.mxu0 0.0
    %997 = vmatpush1.msra.mxu0 0.0
    %998 = vmatprep.subr.mxu0 0.0
    %999 = vmatpush1.msra.mxu0 0.0
    %1000 = vmatprep.subr.mxu0 0.0
    %1001 = vmatpush1.msra.mxu0 0.0
    %1002 = vmatprep.subr.mxu0 0.0
    %1003 = vmatpush1.msra.mxu0 0.0
    %1004 = vmatprep.subr.mxu0 0.0
    %1005 = vmatpush1.msra.mxu0 0.0
    %1006 = vmatprep.subr.mxu0 0.0
    %1007 = vmatpush1.msra.mxu0 0.0
    %1008 = vmatprep.subr.mxu0 0.0
    %1009 = vmatpush1.msra.mxu0 0.0
    %1010 = vmatprep.mubr.f32.mxu0 0.0
    %1011 = vmatmul.mubr.f32.gmra.mrb[0].mxu0 %v940
    %v1012 = vpop.f32.mrb[0].mxu0
    %v1013 = vadd.f32 0.0, %v1012
    %v1014 = vpop.f32.mrb[0].mxu0
    %v1015 = vadd.f32 0.0, %v1014
    %1016 = vdwg.mxu0
    %1017 = vmatprep.subr.mxu0 %v49
    %1018 = vmatpush1.msra.mxu0 %v48
    %1019 = vmatprep.subr.mxu0 %v53
    %1020 = vmatpush1.msra.mxu0 %v52
    %1021 = vmatprep.subr.mxu0 %v57
    %1022 = vmatpush1.msra.mxu0 %v56
    %1023 = vmatprep.subr.mxu0 %v61
    %1024 = vmatpush1.msra.mxu0 %v60
    %1025 = vmatprep.subr.mxu0 %v65
    %1026 = vmatpush1.msra.mxu0 %v64
    %1027 = vmatprep.subr.mxu0 %v69
    %1028 = vmatpush1.msra.mxu0 %v68
    %1029 = vmatprep.subr.mxu0 %v73
    %1030 = vmatpush1.msra.mxu0 %v72
    %1031 = vmatprep.subr.mxu0 %v77
    %1032 = vmatpush1.msra.mxu0 %v76
    %1033 = vmatprep.subr.mxu0 %v81
    %1034 = vmatpush1.msra.mxu0 %v80
    %1035 = vmatprep.subr.mxu0 %v85
    %1036 = vmatpush1.msra.mxu0 %v84
    %1037 = vmatprep.subr.mxu0 %v89
    %1038 = vmatpush1.msra.mxu0 %v88
    %1039 = vmatprep.subr.mxu0 %v93
    %1040 = vmatpush1.msra.mxu0 %v92
    %1041 = vmatprep.subr.mxu0 %v97
    %1042 = vmatpush1.msra.mxu0 %v96
    %1043 = vmatprep.subr.mxu0 %v101
    %1044 = vmatpush1.msra.mxu0 %v100
    %1045 = vmatprep.subr.mxu0 %v105
    %1046 = vmatpush1.msra.mxu0 %v104
    %1047 = vmatprep.subr.mxu0 %v109
    %1048 = vmatpush1.msra.mxu0 %v108
    %1049 = vmatprep.subr.mxu0 0.0
    %1050 = vmatpush1.msra.mxu0 0.0
    %1051 = vmatprep.subr.mxu0 0.0
    %1052 = vmatpush1.msra.mxu0 0.0
    %1053 = vmatprep.subr.mxu0 0.0
    %1054 = vmatpush1.msra.mxu0 0.0
    %1055 = vmatprep.subr.mxu0 0.0
    %1056 = vmatpush1.msra.mxu0 0.0
    %1057 = vmatprep.subr.mxu0 0.0
    %1058 = vmatpush1.msra.mxu0 0.0
    %1059 = vmatprep.subr.mxu0 0.0
    %1060 = vmatpush1.msra.mxu0 0.0
    %1061 = vmatprep.subr.mxu0 0.0
    %1062 = vmatpush1.msra.mxu0 0.0
    %1063 = vmatprep.subr.mxu0 0.0
    %1064 = vmatpush1.msra.mxu0 0.0
    %1065 = vmatprep.subr.mxu0 0.0
    %1066 = vmatpush1.msra.mxu0 0.0
    %1067 = vmatprep.subr.mxu0 0.0
    %1068 = vmatpush1.msra.mxu0 0.0
    %1069 = vmatprep.subr.mxu0 0.0
    %1070 = vmatpush1.msra.mxu0 0.0
    %1071 = vmatprep.subr.mxu0 0.0
    %1072 = vmatpush1.msra.mxu0 0.0
    %1073 = vmatprep.subr.mxu0 0.0
    %1074 = vmatpush1.msra.mxu0 0.0
    %1075 = vmatprep.subr.mxu0 0.0
    %1076 = vmatpush1.msra.mxu0 0.0
    %1077 = vmatprep.subr.mxu0 0.0
    %1078 = vmatpush1.msra.mxu0 0.0
    %1079 = vmatprep.subr.mxu0 0.0
    %1080 = vmatpush1.msra.mxu0 0.0
    %1081 = vmatprep.mubr.f32.mxu0 0.0
    %1082 = vmatmul.mubr.f32.gmra.mrb[0].mxu0 %v940
    %v1083 = vpop.f32.mrb[0].mxu0
    %v1084 = vadd.f32 0.0, %v1083
    %v1085 = vpop.f32.mrb[0].mxu0
    %v1086 = vadd.f32 0.0, %v1085
    %1087 = vdwg.mxu0
    %v1088 = vadd.f32 %v942, %v1013
    %v1089 = vadd.f32 %v943, %v1015
    %v1090 = vadd.f32 %v944, %v1084
    %v1091 = vadd.f32 %v945, %v1086
    %v1092 = vtanh.pop %v1088
    %v1093 = vtanh.pop %v1089
    %v1094 = vtanh.pop %v1090
    %v1095 = vtanh.pop %v1091
    %v1096 = vmul.f32 %v1092, 0.5
    %v1097 = vmul.f32 %v1093, 0.5
    %v1098 = vmul.f32 %v1095, 0.5
    %v1099 = vadd.f32 %v1096, 0.5
    %v1100 = vadd.f32 %v1097, 0.5
    %v1101 = vadd.f32 %v1098, 0.5
    %v1102 = vmul.f32 %v1100, %v938
    %v1103 = vmul.f32 %v1099, %v1094
    %v1104 = vadd.f32 %v1102, %v1103
    %v1105 = vtanh.pop %v1104
    %v1106 = vmul.f32 %v1101, %v1105
    %s1107 = scalar_lea.vmem [#allocation4], 192
    %v1108 = vld [vmem:[%s1107] sm:$0xff]
    %v1109 = vld [vmem:[%s1107 + $0x8] sm:$0xff]
    %v1110 = vld [vmem:[%s1107 + $0x10] sm:$0xff]
    %v1111 = vld [vmem:[%s1107 + $0x18] sm:$0xff]
    %1112 = vmatprep.subr.mxu0 %v47
    %1113 = vmatpush1.msra.mxu0 %v46
    %1114 = vmatprep.subr.mxu0 %v51
    %1115 = vmatpush1.msra.mxu0 %v50
    %1116 = vmatprep.subr.mxu0 %v55
    %1117 = vmatpush1.msra.mxu0 %v54
    %1118 = vmatprep.subr.mxu0 %v59
    %1119 = vmatpush1.msra.mxu0 %v58
    %1120 = vmatprep.subr.mxu0 %v63
    %1121 = vmatpush1.msra.mxu0 %v62
    %1122 = vmatprep.subr.mxu0 %v67
    %1123 = vmatpush1.msra.mxu0 %v66
    %1124 = vmatprep.subr.mxu0 %v71
    %1125 = vmatpush1.msra.mxu0 %v70
    %1126 = vmatprep.subr.mxu0 %v75
    %1127 = vmatpush1.msra.mxu0 %v74
    %1128 = vmatprep.subr.mxu0 %v79
    %1129 = vmatpush1.msra.mxu0 %v78
    %1130 = vmatprep.subr.mxu0 %v83
    %1131 = vmatpush1.msra.mxu0 %v82
    %1132 = vmatprep.subr.mxu0 %v87
    %1133 = vmatpush1.msra.mxu0 %v86
    %1134 = vmatprep.subr.mxu0 %v91
    %1135 = vmatpush1.msra.mxu0 %v90
    %1136 = vmatprep.subr.mxu0 %v95
    %1137 = vmatpush1.msra.mxu0 %v94
    %1138 = vmatprep.subr.mxu0 %v99
    %1139 = vmatpush1.msra.mxu0 %v98
    %1140 = vmatprep.subr.mxu0 %v103
    %1141 = vmatpush1.msra.mxu0 %v102
    %1142 = vmatprep.subr.mxu0 %v107
    %1143 = vmatpush1.msra.mxu0 %v106
    %1144 = vmatprep.subr.mxu0 0.0
    %1145 = vmatpush1.msra.mxu0 0.0
    %1146 = vmatprep.subr.mxu0 0.0
    %1147 = vmatpush1.msra.mxu0 0.0
    %1148 = vmatprep.subr.mxu0 0.0
    %1149 = vmatpush1.msra.mxu0 0.0
    %1150 = vmatprep.subr.mxu0 0.0
    %1151 = vmatpush1.msra.mxu0 0.0
    %1152 = vmatprep.subr.mxu0 0.0
    %1153 = vmatpush1.msra.mxu0 0.0
    %1154 = vmatprep.subr.mxu0 0.0
    %1155 = vmatpush1.msra.mxu0 0.0
    %1156 = vmatprep.subr.mxu0 0.0
    %1157 = vmatpush1.msra.mxu0 0.0
    %1158 = vmatprep.subr.mxu0 0.0
    %1159 = vmatpush1.msra.mxu0 0.0
    %1160 = vmatprep.subr.mxu0 0.0
    %1161 = vmatpush1.msra.mxu0 0.0
    %1162 = vmatprep.subr.mxu0 0.0
    %1163 = vmatpush1.msra.mxu0 0.0
    %1164 = vmatprep.subr.mxu0 0.0
    %1165 = vmatpush1.msra.mxu0 0.0
    %1166 = vmatprep.subr.mxu0 0.0
    %1167 = vmatpush1.msra.mxu0 0.0
    %1168 = vmatprep.subr.mxu0 0.0
    %1169 = vmatpush1.msra.mxu0 0.0
    %1170 = vmatprep.subr.mxu0 0.0
    %1171 = vmatpush1.msra.mxu0 0.0
    %1172 = vmatprep.subr.mxu0 0.0
    %1173 = vmatpush1.msra.mxu0 0.0
    %1174 = vmatprep.subr.mxu0 0.0
    %1175 = vmatpush1.msra.mxu0 0.0
    %1176 = vmatprep.mubr.f32.mxu0 0.0
    %1177 = vmatmul.mubr.f32.gmra.mrb[0].mxu0 %v1106
    %v1178 = vpop.f32.mrb[0].mxu0
    %v1179 = vadd.f32 0.0, %v1178
    %v1180 = vpop.f32.mrb[0].mxu0
    %v1181 = vadd.f32 0.0, %v1180
    %1182 = vdwg.mxu0
    %1183 = vmatprep.subr.mxu0 %v49
    %1184 = vmatpush1.msra.mxu0 %v48
    %1185 = vmatprep.subr.mxu0 %v53
    %1186 = vmatpush1.msra.mxu0 %v52
    %1187 = vmatprep.subr.mxu0 %v57
    %1188 = vmatpush1.msra.mxu0 %v56
    %1189 = vmatprep.subr.mxu0 %v61
    %1190 = vmatpush1.msra.mxu0 %v60
    %1191 = vmatprep.subr.mxu0 %v65
    %1192 = vmatpush1.msra.mxu0 %v64
    %1193 = vmatprep.subr.mxu0 %v69
    %1194 = vmatpush1.msra.mxu0 %v68
    %1195 = vmatprep.subr.mxu0 %v73
    %1196 = vmatpush1.msra.mxu0 %v72
    %1197 = vmatprep.subr.mxu0 %v77
    %1198 = vmatpush1.msra.mxu0 %v76
    %1199 = vmatprep.subr.mxu0 %v81
    %1200 = vmatpush1.msra.mxu0 %v80
    %1201 = vmatprep.subr.mxu0 %v85
    %1202 = vmatpush1.msra.mxu0 %v84
    %1203 = vmatprep.subr.mxu0 %v89
    %1204 = vmatpush1.msra.mxu0 %v88
    %1205 = vmatprep.subr.mxu0 %v93
    %1206 = vmatpush1.msra.mxu0 %v92
    %1207 = vmatprep.subr.mxu0 %v97
    %1208 = vmatpush1.msra.mxu0 %v96
    %1209 = vmatprep.subr.mxu0 %v101
    %1210 = vmatpush1.msra.mxu0 %v100
    %1211 = vmatprep.subr.mxu0 %v105
    %1212 = vmatpush1.msra.mxu0 %v104
    %1213 = vmatprep.subr.mxu0 %v109
    %1214 = vmatpush1.msra.mxu0 %v108
    %1215 = vmatprep.subr.mxu0 0.0
    %1216 = vmatpush1.msra.mxu0 0.0
    %1217 = vmatprep.subr.mxu0 0.0
    %1218 = vmatpush1.msra.mxu0 0.0
    %1219 = vmatprep.subr.mxu0 0.0
    %1220 = vmatpush1.msra.mxu0 0.0
    %1221 = vmatprep.subr.mxu0 0.0
    %1222 = vmatpush1.msra.mxu0 0.0
    %1223 = vmatprep.subr.mxu0 0.0
    %1224 = vmatpush1.msra.mxu0 0.0
    %1225 = vmatprep.subr.mxu0 0.0
    %1226 = vmatpush1.msra.mxu0 0.0
    %1227 = vmatprep.subr.mxu0 0.0
    %1228 = vmatpush1.msra.mxu0 0.0
    %1229 = vmatprep.subr.mxu0 0.0
    %1230 = vmatpush1.msra.mxu0 0.0
    %1231 = vmatprep.subr.mxu0 0.0
    %1232 = vmatpush1.msra.mxu0 0.0
    %1233 = vmatprep.subr.mxu0 0.0
    %1234 = vmatpush1.msra.mxu0 0.0
    %1235 = vmatprep.subr.mxu0 0.0
    %1236 = vmatpush1.msra.mxu0 0.0
    %1237 = vmatprep.subr.mxu0 0.0
    %1238 = vmatpush1.msra.mxu0 0.0
    %1239 = vmatprep.subr.mxu0 0.0
    %1240 = vmatpush1.msra.mxu0 0.0
    %1241 = vmatprep.subr.mxu0 0.0
    %1242 = vmatpush1.msra.mxu0 0.0
    %1243 = vmatprep.subr.mxu0 0.0
    %1244 = vmatpush1.msra.mxu0 0.0
    %1245 = vmatprep.subr.mxu0 0.0
    %1246 = vmatpush1.msra.mxu0 0.0
    %1247 = vmatprep.mubr.f32.mxu0 0.0
    %1248 = vmatmul.mubr.f32.gmra.mrb[0].mxu0 %v1106
    %v1249 = vpop.f32.mrb[0].mxu0
    %v1250 = vadd.f32 0.0, %v1249
    %v1251 = vpop.f32.mrb[0].mxu0
    %v1252 = vadd.f32 0.0, %v1251
    %1253 = vdwg.mxu0
    %v1254 = vadd.f32 %v1108, %v1179
    %v1255 = vadd.f32 %v1109, %v1181
    %v1256 = vadd.f32 %v1110, %v1250
    %v1257 = vadd.f32 %v1111, %v1252
    %v1258 = vtanh.pop %v1254
    %v1259 = vtanh.pop %v1255
    %v1260 = vtanh.pop %v1256
    %v1261 = vtanh.pop %v1257
    %v1262 = vmul.f32 %v1258, 0.5
    %v1263 = vmul.f32 %v1259, 0.5
    %v1264 = vmul.f32 %v1261, 0.5
    %v1265 = vadd.f32 %v1262, 0.5
    %v1266 = vadd.f32 %v1263, 0.5
    %v1267 = vadd.f32 %v1264, 0.5
    %v1268 = vmul.f32 %v1266, %v1104
    %v1269 = vmul.f32 %v1265, %v1260
    %v1270 = vadd.f32 %v1268, %v1269
    %v1271 = vtanh.pop %v1270
    %v1272 = vmul.f32 %v1267, %v1271
    %s1273 = scalar_lea.vmem [#allocation4], 224
    %v1274 = vld [vmem:[%s1273] sm:$0xff]
    %v1275 = vld [vmem:[%s1273 + $0x8] sm:$0xff]
    %v1276 = vld [vmem:[%s1273 + $0x10] sm:$0xff]
    %v1277 = vld [vmem:[%s1273 + $0x18] sm:$0xff]
    %1278 = vmatprep.subr.mxu0 %v47
    %1279 = vmatpush1.msra.mxu0 %v46
    %1280 = vmatprep.subr.mxu0 %v51
    %1281 = vmatpush1.msra.mxu0 %v50
    %1282 = vmatprep.subr.mxu0 %v55
    %1283 = vmatpush1.msra.mxu0 %v54
    %1284 = vmatprep.subr.mxu0 %v59
    %1285 = vmatpush1.msra.mxu0 %v58
    %1286 = vmatprep.subr.mxu0 %v63
    %1287 = vmatpush1.msra.mxu0 %v62
    %1288 = vmatprep.subr.mxu0 %v67
    %1289 = vmatpush1.msra.mxu0 %v66
    %1290 = vmatprep.subr.mxu0 %v71
    %1291 = vmatpush1.msra.mxu0 %v70
    %1292 = vmatprep.subr.mxu0 %v75
    %1293 = vmatpush1.msra.mxu0 %v74
    %1294 = vmatprep.subr.mxu0 %v79
    %1295 = vmatpush1.msra.mxu0 %v78
    %1296 = vmatprep.subr.mxu0 %v83
    %1297 = vmatpush1.msra.mxu0 %v82
    %1298 = vmatprep.subr.mxu0 %v87
    %1299 = vmatpush1.msra.mxu0 %v86
    %1300 = vmatprep.subr.mxu0 %v91
    %1301 = vmatpush1.msra.mxu0 %v90
    %1302 = vmatprep.subr.mxu0 %v95
    %1303 = vmatpush1.msra.mxu0 %v94
    %1304 = vmatprep.subr.mxu0 %v99
    %1305 = vmatpush1.msra.mxu0 %v98
    %1306 = vmatprep.subr.mxu0 %v103
    %1307 = vmatpush1.msra.mxu0 %v102
    %1308 = vmatprep.subr.mxu0 %v107
    %1309 = vmatpush1.msra.mxu0 %v106
    %1310 = vmatprep.subr.mxu0 0.0
    %1311 = vmatpush1.msra.mxu0 0.0
    %1312 = vmatprep.subr.mxu0 0.0
    %1313 = vmatpush1.msra.mxu0 0.0
    %1314 = vmatprep.subr.mxu0 0.0
    %1315 = vmatpush1.msra.mxu0 0.0
    %1316 = vmatprep.subr.mxu0 0.0
    %1317 = vmatpush1.msra.mxu0 0.0
    %1318 = vmatprep.subr.mxu0 0.0
    %1319 = vmatpush1.msra.mxu0 0.0
    %1320 = vmatprep.subr.mxu0 0.0
    %1321 = vmatpush1.msra.mxu0 0.0
    %1322 = vmatprep.subr.mxu0 0.0
    %1323 = vmatpush1.msra.mxu0 0.0
    %1324 = vmatprep.subr.mxu0 0.0
    %1325 = vmatpush1.msra.mxu0 0.0
    %1326 = vmatprep.subr.mxu0 0.0
    %1327 = vmatpush1.msra.mxu0 0.0
    %1328 = vmatprep.subr.mxu0 0.0
    %1329 = vmatpush1.msra.mxu0 0.0
    %1330 = vmatprep.subr.mxu0 0.0
    %1331 = vmatpush1.msra.mxu0 0.0
    %1332 = vmatprep.subr.mxu0 0.0
    %1333 = vmatpush1.msra.mxu0 0.0
    %1334 = vmatprep.subr.mxu0 0.0
    %1335 = vmatpush1.msra.mxu0 0.0
    %1336 = vmatprep.subr.mxu0 0.0
    %1337 = vmatpush1.msra.mxu0 0.0
    %1338 = vmatprep.subr.mxu0 0.0
    %1339 = vmatpush1.msra.mxu0 0.0
    %1340 = vmatprep.subr.mxu0 0.0
    %1341 = vmatpush1.msra.mxu0 0.0
    %1342 = vmatprep.mubr.f32.mxu0 0.0
    %1343 = vmatmul.mubr.f32.gmra.mrb[0].mxu0 %v1272
    %v1344 = vpop.f32.mrb[0].mxu0
    %v1345 = vadd.f32 0.0, %v1344
    %v1346 = vpop.f32.mrb[0].mxu0
    %v1347 = vadd.f32 0.0, %v1346
    %1348 = vdwg.mxu0
    %1349 = vmatprep.subr.mxu0 %v49
    %1350 = vmatpush1.msra.mxu0 %v48
    %1351 = vmatprep.subr.mxu0 %v53
    %1352 = vmatpush1.msra.mxu0 %v52
    %1353 = vmatprep.subr.mxu0 %v57
    %1354 = vmatpush1.msra.mxu0 %v56
    %1355 = vmatprep.subr.mxu0 %v61
    %1356 = vmatpush1.msra.mxu0 %v60
    %1357 = vmatprep.subr.mxu0 %v65
    %1358 = vmatpush1.msra.mxu0 %v64
    %1359 = vmatprep.subr.mxu0 %v69
    %1360 = vmatpush1.msra.mxu0 %v68
    %1361 = vmatprep.subr.mxu0 %v73
    %1362 = vmatpush1.msra.mxu0 %v72
    %1363 = vmatprep.subr.mxu0 %v77
    %1364 = vmatpush1.msra.mxu0 %v76
    %1365 = vmatprep.subr.mxu0 %v81
    %1366 = vmatpush1.msra.mxu0 %v80
    %1367 = vmatprep.subr.mxu0 %v85
    %1368 = vmatpush1.msra.mxu0 %v84
    %1369 = vmatprep.subr.mxu0 %v89
    %1370 = vmatpush1.msra.mxu0 %v88
    %1371 = vmatprep.subr.mxu0 %v93
    %1372 = vmatpush1.msra.mxu0 %v92
    %1373 = vmatprep.subr.mxu0 %v97
    %1374 = vmatpush1.msra.mxu0 %v96
    %1375 = vmatprep.subr.mxu0 %v101
    %1376 = vmatpush1.msra.mxu0 %v100
    %1377 = vmatprep.subr.mxu0 %v105
    %1378 = vmatpush1.msra.mxu0 %v104
    %1379 = vmatprep.subr.mxu0 %v109
    %1380 = vmatpush1.msra.mxu0 %v108
    %1381 = vmatprep.subr.mxu0 0.0
    %1382 = vmatpush1.msra.mxu0 0.0
    %1383 = vmatprep.subr.mxu0 0.0
    %1384 = vmatpush1.msra.mxu0 0.0
    %1385 = vmatprep.subr.mxu0 0.0
    %1386 = vmatpush1.msra.mxu0 0.0
    %1387 = vmatprep.subr.mxu0 0.0
    %1388 = vmatpush1.msra.mxu0 0.0
    %1389 = vmatprep.subr.mxu0 0.0
    %1390 = vmatpush1.msra.mxu0 0.0
    %1391 = vmatprep.subr.mxu0 0.0
    %1392 = vmatpush1.msra.mxu0 0.0
    %1393 = vmatprep.subr.mxu0 0.0
    %1394 = vmatpush1.msra.mxu0 0.0
    %1395 = vmatprep.subr.mxu0 0.0
    %1396 = vmatpush1.msra.mxu0 0.0
    %1397 = vmatprep.subr.mxu0 0.0
    %1398 = vmatpush1.msra.mxu0 0.0
    %1399 = vmatprep.subr.mxu0 0.0
    %1400 = vmatpush1.msra.mxu0 0.0
    %1401 = vmatprep.subr.mxu0 0.0
    %1402 = vmatpush1.msra.mxu0 0.0
    %1403 = vmatprep.subr.mxu0 0.0
    %1404 = vmatpush1.msra.mxu0 0.0
    %1405 = vmatprep.subr.mxu0 0.0
    %1406 = vmatpush1.msra.mxu0 0.0
    %1407 = vmatprep.subr.mxu0 0.0
    %1408 = vmatpush1.msra.mxu0 0.0
    %1409 = vmatprep.subr.mxu0 0.0
    %1410 = vmatpush1.msra.mxu0 0.0
    %1411 = vmatprep.subr.mxu0 0.0
    %1412 = vmatpush1.msra.mxu0 0.0
    %1413 = vmatprep.mubr.f32.mxu0 0.0
    %1414 = vmatmul.mubr.f32.gmra.mrb[0].mxu0 %v1272
    %v1415 = vpop.f32.mrb[0].mxu0
    %v1416 = vadd.f32 0.0, %v1415
    %v1417 = vpop.f32.mrb[0].mxu0
    %v1418 = vadd.f32 0.0, %v1417
    %1419 = vdwg.mxu0
    %v1420 = vadd.f32 %v1274, %v1345
    %v1421 = vadd.f32 %v1275, %v1347
    %v1422 = vadd.f32 %v1276, %v1416
    %v1423 = vadd.f32 %v1277, %v1418
    %v1424 = vtanh.pop %v1420
    %v1425 = vtanh.pop %v1421
    %v1426 = vtanh.pop %v1422
    %v1427 = vtanh.pop %v1423
    %v1428 = vmul.f32 %v1424, 0.5
    %v1429 = vmul.f32 %v1425, 0.5
    %v1430 = vmul.f32 %v1427, 0.5
    %v1431 = vadd.f32 %v1428, 0.5
    %v1432 = vadd.f32 %v1429, 0.5
    %v1433 = vadd.f32 %v1430, 0.5
    %v1434 = vmul.f32 %v1432, %v1270
    %v1435 = vmul.f32 %v1431, %v1426
    %v1436 = vadd.f32 %v1434, %v1435
    %v1437 = vtanh.pop %v1436
    %v1438 = vmul.f32 %v1433, %v1437
    %1439 = vst [vmem:[#allocation2] sm:$0xff] %v1438
    %1440 = vst [vmem:[#allocation3] sm:$0xff] %v1436
    // Predicated region
    $region22: #{tpu_custom_call.1} parent=1 // pred_check
      %p1441 = pneg %p40
    $region23: #{tpu_custom_call.1} parent=1 // pred_check_branch
      %1443 = sbr.rel (%p1441) target = $region25
    $region24: #{tpu_custom_call.1} parent=1 // pred_region
      %v1444 = vld [vmem:[#allocation2] sm:$0xff]
      %1445 = vst [vmem:[#allocation9] sm:$0xff] %v1444
    $region25: #{tpu_custom_call.1} parent=1 // pred_fallthru
      _
    // Predicated region
    $region26: #{tpu_custom_call.1} parent=1 // pred_check
      _
    $region27: #{tpu_custom_call.1} parent=1 // pred_check_branch
      %1447 = sbr.rel (0) target = $region29
    $region28: #{tpu_custom_call.1} parent=1 // pred_region
      %s1449 = ssub.s32 128, 128
      %1450 = vsyncadd [#allocation6], %s1449
      %s1452 = sshll.u32 [#allocation9], 4
      %s1453 = int_to_ptr.vmem [resolvable:$true] %s1452
      %1455 = dma.vmem_to_hbm [thread:$0]  %s1453, 128, %s2, [#allocation6]
    $region29: #{tpu_custom_call.1} parent=1 // pred_fallthru
      _
    // Predicated region
    $region30: #{tpu_custom_call.1} parent=1 // pred_check
      _
    $region31: #{tpu_custom_call.1} parent=1 // pred_check_branch
      %1457 = sbr.rel (0) target = $region33
    $region32: #{tpu_custom_call.1} parent=1 // pred_region
      %1458 = dma.done [#allocation6], 128
    $region33: #{tpu_custom_call.1} parent=1 // pred_fallthru
      _
    %1459 = vsyncpa [#allocation5], 1
    %1460 = vsyncpa [#allocation8], 1
    %1461 = vsyncpa [#allocation6], 1

</llo_original>
